<compile_context>
chip_gen: v7x
topology: tpu7x:2x2x1
jax: 0.10.0
libtpu: 0.0.40
codegen_flags: <defaults>
</compile_context>

<pallas_src>
import jax
import jax.numpy as jnp
from jax.experimental import pallas as pl
from jax.experimental.pallas import tpu as pltpu

# ---- model hyper-parameters (small, consistent with the module) -------------
HID = 32          # hid_dim
N_HEADS = 4       # n_heads
HEAD_DIM = HID // N_HEADS
PF_DIM = 64       # pf_dim
EPS = 1e-5        # nn.LayerNorm default eps

# Row layout of the packed 32-wide vector slab (biases + LayerNorm params).
_VEC32_ORDER = ("sa_bq", "sa_bk", "sa_bv", "sa_bo",
                "ea_bq", "ea_bk", "ea_bv", "ea_bo",
                "ff_b2",
                "ln1_g", "ln1_b", "ln2_g", "ln2_b", "ln3_g", "ln3_b")
_ATTN_W_ORDER = ("sa_wq", "sa_wk", "sa_wv", "sa_wo",
                 "ea_wq", "ea_wk", "ea_wv", "ea_wo")


def decoder_layer_kernel(trg_ref, enc_ref, tmask_ref, smask_ref,
                         attn_w_ref, ffn_w1_ref, ffn_w2_ref,
                         vec32_ref, vec64_ref,
                         out_ref, attn_ref):
    # Static shapes of the current block.
    Lt = tmask_ref.shape[1]
    Bb = smask_ref.shape[0]
    Ls = smask_ref.shape[1]

    trg = trg_ref[...]        # (Bb*Lt, HID)
    enc = enc_ref[...]        # (Bb*Ls, HID)
    tmask = tmask_ref[...]    # (Bb*Lt, Lt) additive (0 / -1e10)
    smask = smask_ref[...]    # (Bb, Ls)    additive (0 / -1e10)

    def layer_norm(x, g_row, b_row):
        g = vec32_ref[g_row:g_row + 1, :]
        b = vec32_ref[b_row:b_row + 1, :]
        mu = jnp.mean(x, axis=-1, keepdims=True)
        var = jnp.mean((x - mu) ** 2, axis=-1, keepdims=True)
        return (x - mu) * jax.lax.rsqrt(var + EPS) * g + b

    def mha(q_in, kv_in, w_base, b_base, mask_for_batch, Lq, Lk, store_attn):
        """Multi-head attention on flattened rows.

        q_in:  (Bb*Lq, HID);  kv_in: (Bb*Lk, HID).
        Weights live in attn_w_ref rows [w_base*HID, (w_base+4)*HID)
        (order q, k, v, o); biases in vec32_ref rows [b_base, b_base+4).
        """
        wq = attn_w_ref[(w_base + 0) * HID:(w_base + 1) * HID, :]
        wk = attn_w_ref[(w_base + 1) * HID:(w_base + 2) * HID, :]
        wv = attn_w_ref[(w_base + 2) * HID:(w_base + 3) * HID, :]
        wo = attn_w_ref[(w_base + 3) * HID:(w_base + 4) * HID, :]
        bq = vec32_ref[b_base + 0:b_base + 1, :]
        bk = vec32_ref[b_base + 1:b_base + 2, :]
        bv = vec32_ref[b_base + 2:b_base + 3, :]
        bo = vec32_ref[b_base + 3:b_base + 4, :]

        # Big flattened-row GEMMs.
        Q = jnp.dot(q_in, wq, preferred_element_type=jnp.float32) + bq
        K = jnp.dot(kv_in, wk, preferred_element_type=jnp.float32) + bk
        V = jnp.dot(kv_in, wv, preferred_element_type=jnp.float32) + bv

        inv_scale = jnp.float32(1.0 / (HEAD_DIM ** 0.5))

        acc = None  # (Bb*Lq, HID) accumulated over heads (no lane concat).
        for h in range(N_HEADS):
            d0, d1 = h * HEAD_DIM, (h + 1) * HEAD_DIM
            ctx_rows = []
            for b in range(Bb):
                qh = Q[b * Lq:(b + 1) * Lq, d0:d1]
                kh = K[b * Lk:(b + 1) * Lk, d0:d1]
                vh = V[b * Lk:(b + 1) * Lk, d0:d1]
                # energy = qh @ kh.T (no explicit transpose)
                e = jax.lax.dot_general(
                    qh, kh, (((1,), (1,)), ((), ())),
                    preferred_element_type=jnp.float32) * inv_scale
                e = e + mask_for_batch(b)
                e = e - jnp.max(e, axis=-1, keepdims=True)
                p = jnp.exp(e)
                a = p * pl.reciprocal(jnp.sum(p, axis=-1, keepdims=True),
                                      approx=True)
                if store_attn:
                    attn_ref[b, h] = a          # store immediately
                ctx_rows.append(
                    jnp.dot(a, vh, preferred_element_type=jnp.float32))
            ctx = ctx_rows[0] if Bb == 1 else jnp.concatenate(ctx_rows, axis=0)
            contrib = jnp.dot(ctx, wo[d0:d1, :],
                              preferred_element_type=jnp.float32)
            acc = contrib if acc is None else acc + contrib
        return acc + bo

    # --- self attention + residual + LayerNorm -------------------------------
    sa = mha(trg, trg, 0, 0,
             lambda b: tmask[b * Lt:(b + 1) * Lt, :], Lt, Lt, False)
    trg1 = layer_norm(trg + sa, 9, 10)

    # --- encoder (cross) attention + residual + LayerNorm --------------------
    ea = mha(trg1, enc, 4, 4,
             lambda b: smask[b:b + 1, :], Lt, Ls, True)
    trg2 = layer_norm(trg1 + ea, 11, 12)

    # --- position-wise feed-forward + residual + LayerNorm -------------------
    w1 = ffn_w1_ref[...]
    w2 = ffn_w2_ref[...]
    b1 = vec64_ref[0:1, :]
    b2 = vec32_ref[8:9, :]
    h1 = jnp.maximum(
        jnp.dot(trg2, w1, preferred_element_type=jnp.float32) + b1, 0.0)
    ff = jnp.dot(h1, w2, preferred_element_type=jnp.float32) + b2
    trg3 = layer_norm(trg2 + ff, 13, 14)

    out_ref[...] = trg3


def _pack_params(params):
    attn_w = jnp.concatenate([params[k] for k in _ATTN_W_ORDER], axis=0)
    vec32_rows = [params[k].reshape(1, HID) for k in _VEC32_ORDER]
    vec32_rows.append(jnp.zeros((1, HID), jnp.float32))   # pad to 16 rows
    vec32 = jnp.concatenate(vec32_rows, axis=0)            # (16, 32)
    vec64 = params["ff_b1"].reshape(1, PF_DIM)              # (1, 64)
    return attn_w, params["ff_w1"], params["ff_w2"], vec32, vec64


def decoder_layer(trg, enc_src, trg_mask, src_mask, params, block_b=None):
    B, Lt, H = trg.shape
    _, Ls, _ = enc_src.shape
    assert H == HID

    # Choose the batch block: smallest divisor of B giving >=128 GEMM rows;
    # otherwise take the whole batch in a single invocation (tiny demo case).
    if block_b is None:
        block_b = B
        for d in range(1, B + 1):
            if B % d == 0 and d * Lt >= 128:
                block_b = d
                break
    nblk = B // block_b

    # Flattened-row activations and additive float masks (0 / -1e10).
    trg2d = trg.reshape(B * Lt, H)
    enc2d = enc_src.reshape(B * Ls, H)
    tmask_add = jnp.where(trg_mask.reshape(B, Lt, Lt) == 0,
                          jnp.float32(-1e10), jnp.float32(0.0)
                          ).reshape(B * Lt, Lt)
    smask_add = jnp.where(src_mask.reshape(B, Ls) == 0,
                          jnp.float32(-1e10), jnp.float32(0.0))

    attn_w, ffn_w1, ffn_w2, vec32, vec64 = _pack_params(params)

    in_specs = [
        pl.BlockSpec((block_b * Lt, H), lambda i: (i, 0)),      # trg
        pl.BlockSpec((block_b * Ls, H), lambda i: (i, 0)),      # enc_src
        pl.BlockSpec((block_b * Lt, Lt), lambda i: (i, 0)),     # trg_mask (add)
        pl.BlockSpec((block_b, Ls), lambda i: (i, 0)),          # src_mask (add)
        pl.BlockSpec(attn_w.shape, lambda i: (0, 0)),           # attn weights
        pl.BlockSpec(ffn_w1.shape, lambda i: (0, 0)),           # ffn w1
        pl.BlockSpec(ffn_w2.shape, lambda i: (0, 0)),           # ffn w2
        pl.BlockSpec(vec32.shape, lambda i: (0, 0)),            # 32-wide vecs
        pl.BlockSpec(vec64.shape, lambda i: (0, 0)),            # 64-wide vec
    ]
    out_specs = [
        pl.BlockSpec((block_b * Lt, H), lambda i: (i, 0)),
        pl.BlockSpec((block_b, N_HEADS, Lt, Ls), lambda i: (i, 0, 0, 0)),
    ]
    out_shape = [
        jax.ShapeDtypeStruct((B * Lt, H), jnp.float32),
        jax.ShapeDtypeStruct((B, N_HEADS, Lt, Ls), jnp.float32),
    ]

    fn = pl.pallas_call(
        decoder_layer_kernel,
        out_shape=out_shape,
        grid=(nblk,),
        in_specs=in_specs,
        out_specs=out_specs,
        compiler_params=pltpu.CompilerParams(
            dimension_semantics=("parallel",)),
    )
    out2d, attn = fn(trg2d, enc2d, tmask_add, smask_add,
                     attn_w, ffn_w1, ffn_w2, vec32, vec64)
    return out2d.reshape(B, Lt, H), attn


# ----------------------------- pure-JAX reference ----------------------------
def decoder_layer_ref(trg, enc_src, trg_mask, src_mask, p):
    def mha(q_in, kv_in, mask, prefix):
        B, Lq, H = q_in.shape
        Lk = kv_in.shape[1]
        Q = q_in @ p[f"{prefix}_wq"] + p[f"{prefix}_bq"]
        K = kv_in @ p[f"{prefix}_wk"] + p[f"{prefix}_bk"]
        V = kv_in @ p[f"{prefix}_wv"] + p[f"{prefix}_bv"]
        Q = Q.reshape(B, Lq, N_HEADS, HEAD_DIM).transpose(0, 2, 1, 3)
        K = K.reshape(B, Lk, N_HEADS, HEAD_DIM).transpose(0, 2, 1, 3)
        V = V.reshape(B, Lk, N_HEADS, HEAD_DIM).transpose(0, 2, 1, 3)
        e = (Q @ K.transpose(0, 1, 3, 2)) / jnp.sqrt(jnp.float32(HEAD_DIM))
        e = jnp.where(mask == 0, jnp.float32(-1e10), e)
        a = jax.nn.softmax(e, axis=-1)
        x = (a @ V).transpose(0, 2, 1, 3).reshape(B, Lq, H)
        return x @ p[f"{prefix}_wo"] + p[f"{prefix}_bo"], a

    def ln(x, g, b):
        mu = x.mean(-1, keepdims=True)
        var = ((x - mu) ** 2).mean(-1, keepdims=True)
        return (x - mu) * jax.lax.rsqrt(var + EPS) * g + b

    sa, _ = mha(trg, trg, trg_mask, "sa")
    t1 = ln(trg + sa, p["ln1_g"], p["ln1_b"])
    ea, attn = mha(t1, enc_src, src_mask, "ea")
    t2 = ln(t1 + ea, p["ln2_g"], p["ln2_b"])
    h = jax.nn.relu(t2 @ p["ff_w1"] + p["ff_b1"])
    ff = h @ p["ff_w2"] + p["ff_b2"]
    t3 = ln(t2 + ff, p["ln3_g"], p["ln3_b"])
    return t3, attn


def init_params(key):
    """Deterministic synthetic parameters (Linear weights stored as (in, out))."""
    params = {}
    keys = jax.random.split(key, 16)
    k_iter = iter(keys)

    def lin(k, n_in, n_out):
        w = 0.05 * jax.random.normal(k, (n_in, n_out), jnp.float32)
        b = jnp.zeros((1, n_out), jnp.float32)
        return w, b

    for prefix in ("sa", "ea"):
        for name in ("q", "k", "v", "o"):
            w, b = lin(next(k_iter), HID, HID)
            params[f"{prefix}_w{name}"] = w
            params[f"{prefix}_b{name}"] = b

    params["ff_w1"], params["ff_b1"] = lin(next(k_iter), HID, PF_DIM)
    params["ff_w2"], params["ff_b2"] = lin(next(k_iter), PF_DIM, HID)

    for ln in ("ln1", "ln2", "ln3"):
        params[f"{ln}_g"] = jnp.ones((1, HID), jnp.float32)
        params[f"{ln}_b"] = jnp.zeros((1, HID), jnp.float32)
    return params


if __name__ == "__main__":
    B, Lt, Ls = 2, 8, 8

    root = jax.random.PRNGKey(0)
    k_trg, k_enc, k_par = jax.random.split(root, 3)

    trg = jax.random.normal(k_trg, (B, Lt, HID), jnp.float32)
    enc_src = jax.random.normal(k_enc, (B, Ls, HID), jnp.float32)

    # causal mask for the target; full src visibility except last token of batch 1
    trg_mask = jnp.broadcast_to(
        jnp.tril(jnp.ones((Lt, Lt), jnp.int32))[None, None], (B, 1, Lt, Lt))
    src_mask = jnp.ones((B, 1, 1, Ls), jnp.int32)
    src_mask = src_mask.at[1, 0, 0, Ls - 1].set(0)

    params = init_params(k_par)

    out, attention = decoder_layer(trg, enc_src, trg_mask, src_mask, params)
    jax.block_until_ready((out, attention))

    assert out.shape == (B, Lt, HID)
    assert attention.shape == (B, N_HEADS, Lt, Ls)

    # Loose-tolerance sanity check vs. a pure-JAX reference (approx reciprocal
    # in the kernel introduces small numeric drift).
    ref_out, ref_attn = decoder_layer_ref(trg, enc_src, trg_mask, src_mask,
                                          params)
    err_o = float(jnp.max(jnp.abs(out - ref_out)))
    err_a = float(jnp.max(jnp.abs(attention - ref_attn)))
    assert err_o < 2e-2 and err_a < 2e-2, (err_o, err_a)

    print("KERNEL_OK")
</pallas_src>

<mosaic_0001>
module attributes {stable_mosaic.version = 11 : i64} {
  func.func @decoder_layer_kernel(%arg0: i32, %arg1: memref<16x32xf32, #tpu.memory_space<vmem>>, %arg2: memref<16x32xf32, #tpu.memory_space<vmem>>, %arg3: memref<16x8xf32, #tpu.memory_space<vmem>>, %arg4: memref<2x8xf32, #tpu.memory_space<vmem>>, %arg5: memref<256x32xf32, #tpu.memory_space<vmem>>, %arg6: memref<32x64xf32, #tpu.memory_space<vmem>>, %arg7: memref<64x32xf32, #tpu.memory_space<vmem>>, %arg8: memref<16x32xf32, #tpu.memory_space<vmem>>, %arg9: memref<1x64xf32, #tpu.memory_space<vmem>>, %arg10: memref<16x32xf32, #tpu.memory_space<vmem>>, %arg11: memref<2x4x8x8xf32, #tpu.memory_space<vmem>>) attributes {dimension_semantics = [#tpu.dimension_semantics<parallel>], iteration_bounds = array<i64: 1>, scalar_prefetch = 0 : i64, scratch_operands = 0 : i64, tpu.core_type = #tpu.core_type<tc>, window_params = [{transform_indices = @transform_0, window_bounds = array<i64: 16, 32>}, {transform_indices = @transform_1, window_bounds = array<i64: 16, 32>}, {transform_indices = @transform_2, window_bounds = array<i64: 16, 8>}, {transform_indices = @transform_3, window_bounds = array<i64: 2, 8>}, {pipeline_mode = #tpu.pipeline_mode<synchronous>, transform_indices = @transform_4, window_bounds = array<i64: 256, 32>}, {pipeline_mode = #tpu.pipeline_mode<synchronous>, transform_indices = @transform_5, window_bounds = array<i64: 32, 64>}, {pipeline_mode = #tpu.pipeline_mode<synchronous>, transform_indices = @transform_6, window_bounds = array<i64: 64, 32>}, {pipeline_mode = #tpu.pipeline_mode<synchronous>, transform_indices = @transform_7, window_bounds = array<i64: 16, 32>}, {pipeline_mode = #tpu.pipeline_mode<synchronous>, transform_indices = @transform_8, window_bounds = array<i64: 1, 64>}, {transform_indices = @transform_9, window_bounds = array<i64: 16, 32>}, {transform_indices = @transform_10, window_bounds = array<i64: 2, 4, 8, 8>}]} {
    %c0 = arith.constant 0 : index
    %c0_0 = arith.constant 0 : index
    %0 = vector.load %arg1[%c0, %c0_0] : memref<16x32xf32, #tpu.memory_space<vmem>>, vector<16x32xf32>
    %c0_1 = arith.constant 0 : index
    %c0_2 = arith.constant 0 : index
    %1 = vector.load %arg2[%c0_1, %c0_2] : memref<16x32xf32, #tpu.memory_space<vmem>>, vector<16x32xf32>
    %c0_3 = arith.constant 0 : index
    %c0_4 = arith.constant 0 : index
    %2 = vector.load %arg3[%c0_3, %c0_4] : memref<16x8xf32, #tpu.memory_space<vmem>>, vector<16x8xf32>
    %c0_5 = arith.constant 0 : index
    %c0_6 = arith.constant 0 : index
    %3 = vector.load %arg4[%c0_5, %c0_6] : memref<2x8xf32, #tpu.memory_space<vmem>>, vector<2x8xf32>
    %c0_7 = arith.constant 0 : index
    %c0_8 = arith.constant 0 : index
    %4 = vector.load %arg5[%c0_7, %c0_8] : memref<256x32xf32, #tpu.memory_space<vmem>>, vector<32x32xf32>
    %c32 = arith.constant 32 : index
    %c0_9 = arith.constant 0 : index
    %5 = vector.load %arg5[%c32, %c0_9] : memref<256x32xf32, #tpu.memory_space<vmem>>, vector<32x32xf32>
    %c64 = arith.constant 64 : index
    %c0_10 = arith.constant 0 : index
    %6 = vector.load %arg5[%c64, %c0_10] : memref<256x32xf32, #tpu.memory_space<vmem>>, vector<32x32xf32>
    %c96 = arith.constant 96 : index
    %c0_11 = arith.constant 0 : index
    %7 = vector.load %arg5[%c96, %c0_11] : memref<256x32xf32, #tpu.memory_space<vmem>>, vector<32x32xf32>
    %c0_12 = arith.constant 0 : index
    %c0_13 = arith.constant 0 : index
    %8 = vector.load %arg8[%c0_12, %c0_13] : memref<16x32xf32, #tpu.memory_space<vmem>>, vector<1x32xf32>
    %c1 = arith.constant 1 : index
    %c0_14 = arith.constant 0 : index
    %9 = vector.load %arg8[%c1, %c0_14] : memref<16x32xf32, #tpu.memory_space<vmem>>, vector<1x32xf32>
    %c2 = arith.constant 2 : index
    %c0_15 = arith.constant 0 : index
    %10 = vector.load %arg8[%c2, %c0_15] : memref<16x32xf32, #tpu.memory_space<vmem>>, vector<1x32xf32>
    %c3 = arith.constant 3 : index
    %c0_16 = arith.constant 0 : index
    %11 = vector.load %arg8[%c3, %c0_16] : memref<16x32xf32, #tpu.memory_space<vmem>>, vector<1x32xf32>
    %cst = arith.constant dense<0.000000e+00> : vector<16x32xf32>
    %12 = tpu.matmul %0, %4, %cst {dimension_numbers = #tpu.dot_dimension_numbers<[1], [0], [0], [1], [0, 0, 1, 1], [], []>} : vector<16x32xf32>, vector<32x32xf32>, vector<16x32xf32> -> vector<16x32xf32>
    %13 = vector.broadcast %8 : vector<1x32xf32> to vector<16x32xf32>
    %14 = arith.addf %12, %13 : vector<16x32xf32>
    %cst_17 = arith.constant dense<0.000000e+00> : vector<16x32xf32>
    %15 = tpu.matmul %0, %5, %cst_17 {dimension_numbers = #tpu.dot_dimension_numbers<[1], [0], [0], [1], [0, 0, 1, 1], [], []>} : vector<16x32xf32>, vector<32x32xf32>, vector<16x32xf32> -> vector<16x32xf32>
    %16 = vector.broadcast %9 : vector<1x32xf32> to vector<16x32xf32>
    %17 = arith.addf %15, %16 : vector<16x32xf32>
    %cst_18 = arith.constant dense<0.000000e+00> : vector<16x32xf32>
    %18 = tpu.matmul %0, %6, %cst_18 {dimension_numbers = #tpu.dot_dimension_numbers<[1], [0], [0], [1], [0, 0, 1, 1], [], []>} : vector<16x32xf32>, vector<32x32xf32>, vector<16x32xf32> -> vector<16x32xf32>
    %19 = vector.broadcast %10 : vector<1x32xf32> to vector<16x32xf32>
    %20 = arith.addf %18, %19 : vector<16x32xf32>
    %21 = vector.extract_strided_slice %14 {offsets = [0, 0], sizes = [8, 8], strides = [1, 1]} : vector<16x32xf32> to vector<8x8xf32>
    %22 = vector.extract_strided_slice %17 {offsets = [0, 0], sizes = [8, 8], strides = [1, 1]} : vector<16x32xf32> to vector<8x8xf32>
    %23 = vector.extract_strided_slice %20 {offsets = [0, 0], sizes = [8, 8], strides = [1, 1]} : vector<16x32xf32> to vector<8x8xf32>
    %cst_19 = arith.constant dense<0.000000e+00> : vector<8x8xf32>
    %24 = tpu.matmul %21, %22, %cst_19 {dimension_numbers = #tpu.dot_dimension_numbers<[1], [1], [0], [0], [0, 0, 1, 0], [], []>} : vector<8x8xf32>, vector<8x8xf32>, vector<8x8xf32> -> vector<8x8xf32>
    %cst_20 = arith.constant 0.353553385 : f32
    %25 = vector.broadcast %cst_20 : f32 to vector<8x8xf32>
    %26 = arith.mulf %24, %25 : vector<8x8xf32>
    %27 = vector.extract_strided_slice %2 {offsets = [0, 0], sizes = [8, 8], strides = [1, 1]} : vector<16x8xf32> to vector<8x8xf32>
    %28 = arith.addf %26, %27 : vector<8x8xf32>
    %cst_21 = arith.constant dense<0xFF800000> : vector<8xf32>
    %29 = vector.multi_reduction <maximumf>, %28, %cst_21 [1] : vector<8x8xf32> to vector<8xf32>
    %30 = vector.shape_cast %29 : vector<8xf32> to vector<8x1xf32>
    %31 = vector.broadcast %30 : vector<8x1xf32> to vector<8x8xf32>
    %32 = arith.subf %28, %31 : vector<8x8xf32>
    %33 = math.exp %32 : vector<8x8xf32>
    %cst_22 = arith.constant dense<0.000000e+00> : vector<8xf32>
    %34 = vector.multi_reduction <add>, %33, %cst_22 [1] : vector<8x8xf32> to vector<8xf32>
    %35 = vector.shape_cast %34 : vector<8xf32> to vector<8x1xf32>
    %36 = tpu.reciprocal %35 {approx = true} : vector<8x1xf32> -> vector<8x1xf32>
    %37 = vector.broadcast %36 : vector<8x1xf32> to vector<8x8xf32>
    %38 = arith.mulf %33, %37 : vector<8x8xf32>
    %cst_23 = arith.constant dense<0.000000e+00> : vector<8x8xf32>
    %39 = tpu.matmul %38, %23, %cst_23 {dimension_numbers = #tpu.dot_dimension_numbers<[1], [0], [0], [1], [0, 0, 1, 1], [], []>} : vector<8x8xf32>, vector<8x8xf32>, vector<8x8xf32> -> vector<8x8xf32>
    %40 = vector.extract_strided_slice %14 {offsets = [8, 0], sizes = [8, 8], strides = [1, 1]} : vector<16x32xf32> to vector<8x8xf32>
    %41 = vector.extract_strided_slice %17 {offsets = [8, 0], sizes = [8, 8], strides = [1, 1]} : vector<16x32xf32> to vector<8x8xf32>
    %42 = vector.extract_strided_slice %20 {offsets = [8, 0], sizes = [8, 8], strides = [1, 1]} : vector<16x32xf32> to vector<8x8xf32>
    %cst_24 = arith.constant dense<0.000000e+00> : vector<8x8xf32>
    %43 = tpu.matmul %40, %41, %cst_24 {dimension_numbers = #tpu.dot_dimension_numbers<[1], [1], [0], [0], [0, 0, 1, 0], [], []>} : vector<8x8xf32>, vector<8x8xf32>, vector<8x8xf32> -> vector<8x8xf32>
    %cst_25 = arith.constant 0.353553385 : f32
    %44 = vector.broadcast %cst_25 : f32 to vector<8x8xf32>
    %45 = arith.mulf %43, %44 : vector<8x8xf32>
    %46 = vector.extract_strided_slice %2 {offsets = [8, 0], sizes = [8, 8], strides = [1, 1]} : vector<16x8xf32> to vector<8x8xf32>
    %47 = arith.addf %45, %46 : vector<8x8xf32>
    %cst_26 = arith.constant dense<0xFF800000> : vector<8xf32>
    %48 = vector.multi_reduction <maximumf>, %47, %cst_26 [1] : vector<8x8xf32> to vector<8xf32>
    %49 = vector.shape_cast %48 : vector<8xf32> to vector<8x1xf32>
    %50 = vector.broadcast %49 : vector<8x1xf32> to vector<8x8xf32>
    %51 = arith.subf %47, %50 : vector<8x8xf32>
    %52 = math.exp %51 : vector<8x8xf32>
    %cst_27 = arith.constant dense<0.000000e+00> : vector<8xf32>
    %53 = vector.multi_reduction <add>, %52, %cst_27 [1] : vector<8x8xf32> to vector<8xf32>
    %54 = vector.shape_cast %53 : vector<8xf32> to vector<8x1xf32>
    %55 = tpu.reciprocal %54 {approx = true} : vector<8x1xf32> -> vector<8x1xf32>
    %56 = vector.broadcast %55 : vector<8x1xf32> to vector<8x8xf32>
    %57 = arith.mulf %52, %56 : vector<8x8xf32>
    %cst_28 = arith.constant dense<0.000000e+00> : vector<8x8xf32>
    %58 = tpu.matmul %57, %42, %cst_28 {dimension_numbers = #tpu.dot_dimension_numbers<[1], [0], [0], [1], [0, 0, 1, 1], [], []>} : vector<8x8xf32>, vector<8x8xf32>, vector<8x8xf32> -> vector<8x8xf32>
    %59 = tpu.concatenate %39, %58 in 0 : vector<8x8xf32>, vector<8x8xf32> -> vector<16x8xf32>
    %60 = vector.extract_strided_slice %7 {offsets = [0, 0], sizes = [8, 32], strides = [1, 1]} : vector<32x32xf32> to vector<8x32xf32>
    %cst_29 = arith.constant dense<0.000000e+00> : vector<16x32xf32>
    %61 = tpu.matmul %59, %60, %cst_29 {dimension_numbers = #tpu.dot_dimension_numbers<[1], [0], [0], [1], [0, 0, 1, 1], [], []>} : vector<16x8xf32>, vector<8x32xf32>, vector<16x32xf32> -> vector<16x32xf32>
    %62 = vector.extract_strided_slice %14 {offsets = [0, 8], sizes = [8, 8], strides = [1, 1]} : vector<16x32xf32> to vector<8x8xf32>
    %63 = vector.extract_strided_slice %17 {offsets = [0, 8], sizes = [8, 8], strides = [1, 1]} : vector<16x32xf32> to vector<8x8xf32>
    %64 = vector.extract_strided_slice %20 {offsets = [0, 8], sizes = [8, 8], strides = [1, 1]} : vector<16x32xf32> to vector<8x8xf32>
    %cst_30 = arith.constant dense<0.000000e+00> : vector<8x8xf32>
    %65 = tpu.matmul %62, %63, %cst_30 {dimension_numbers = #tpu.dot_dimension_numbers<[1], [1], [0], [0], [0, 0, 1, 0], [], []>} : vector<8x8xf32>, vector<8x8xf32>, vector<8x8xf32> -> vector<8x8xf32>
    %cst_31 = arith.constant 0.353553385 : f32
    %66 = vector.broadcast %cst_31 : f32 to vector<8x8xf32>
    %67 = arith.mulf %65, %66 : vector<8x8xf32>
    %68 = vector.extract_strided_slice %2 {offsets = [0, 0], sizes = [8, 8], strides = [1, 1]} : vector<16x8xf32> to vector<8x8xf32>
    %69 = arith.addf %67, %68 : vector<8x8xf32>
    %cst_32 = arith.constant dense<0xFF800000> : vector<8xf32>
    %70 = vector.multi_reduction <maximumf>, %69, %cst_32 [1] : vector<8x8xf32> to vector<8xf32>
    %71 = vector.shape_cast %70 : vector<8xf32> to vector<8x1xf32>
    %72 = vector.broadcast %71 : vector<8x1xf32> to vector<8x8xf32>
    %73 = arith.subf %69, %72 : vector<8x8xf32>
    %74 = math.exp %73 : vector<8x8xf32>
    %cst_33 = arith.constant dense<0.000000e+00> : vector<8xf32>
    %75 = vector.multi_reduction <add>, %74, %cst_33 [1] : vector<8x8xf32> to vector<8xf32>
    %76 = vector.shape_cast %75 : vector<8xf32> to vector<8x1xf32>
    %77 = tpu.reciprocal %76 {approx = true} : vector<8x1xf32> -> vector<8x1xf32>
    %78 = vector.broadcast %77 : vector<8x1xf32> to vector<8x8xf32>
    %79 = arith.mulf %74, %78 : vector<8x8xf32>
    %cst_34 = arith.constant dense<0.000000e+00> : vector<8x8xf32>
    %80 = tpu.matmul %79, %64, %cst_34 {dimension_numbers = #tpu.dot_dimension_numbers<[1], [0], [0], [1], [0, 0, 1, 1], [], []>} : vector<8x8xf32>, vector<8x8xf32>, vector<8x8xf32> -> vector<8x8xf32>
    %81 = vector.extract_strided_slice %14 {offsets = [8, 8], sizes = [8, 8], strides = [1, 1]} : vector<16x32xf32> to vector<8x8xf32>
    %82 = vector.extract_strided_slice %17 {offsets = [8, 8], sizes = [8, 8], strides = [1, 1]} : vector<16x32xf32> to vector<8x8xf32>
    %83 = vector.extract_strided_slice %20 {offsets = [8, 8], sizes = [8, 8], strides = [1, 1]} : vector<16x32xf32> to vector<8x8xf32>
    %cst_35 = arith.constant dense<0.000000e+00> : vector<8x8xf32>
    %84 = tpu.matmul %81, %82, %cst_35 {dimension_numbers = #tpu.dot_dimension_numbers<[1], [1], [0], [0], [0, 0, 1, 0], [], []>} : vector<8x8xf32>, vector<8x8xf32>, vector<8x8xf32> -> vector<8x8xf32>
    %cst_36 = arith.constant 0.353553385 : f32
    %85 = vector.broadcast %cst_36 : f32 to vector<8x8xf32>
    %86 = arith.mulf %84, %85 : vector<8x8xf32>
    %87 = vector.extract_strided_slice %2 {offsets = [8, 0], sizes = [8, 8], strides = [1, 1]} : vector<16x8xf32> to vector<8x8xf32>
    %88 = arith.addf %86, %87 : vector<8x8xf32>
    %cst_37 = arith.constant dense<0xFF800000> : vector<8xf32>
    %89 = vector.multi_reduction <maximumf>, %88, %cst_37 [1] : vector<8x8xf32> to vector<8xf32>
    %90 = vector.shape_cast %89 : vector<8xf32> to vector<8x1xf32>
    %91 = vector.broadcast %90 : vector<8x1xf32> to vector<8x8xf32>
    %92 = arith.subf %88, %91 : vector<8x8xf32>
    %93 = math.exp %92 : vector<8x8xf32>
    %cst_38 = arith.constant dense<0.000000e+00> : vector<8xf32>
    %94 = vector.multi_reduction <add>, %93, %cst_38 [1] : vector<8x8xf32> to vector<8xf32>
    %95 = vector.shape_cast %94 : vector<8xf32> to vector<8x1xf32>
    %96 = tpu.reciprocal %95 {approx = true} : vector<8x1xf32> -> vector<8x1xf32>
    %97 = vector.broadcast %96 : vector<8x1xf32> to vector<8x8xf32>
    %98 = arith.mulf %93, %97 : vector<8x8xf32>
    %cst_39 = arith.constant dense<0.000000e+00> : vector<8x8xf32>
    %99 = tpu.matmul %98, %83, %cst_39 {dimension_numbers = #tpu.dot_dimension_numbers<[1], [0], [0], [1], [0, 0, 1, 1], [], []>} : vector<8x8xf32>, vector<8x8xf32>, vector<8x8xf32> -> vector<8x8xf32>
    %100 = tpu.concatenate %80, %99 in 0 : vector<8x8xf32>, vector<8x8xf32> -> vector<16x8xf32>
    %101 = vector.extract_strided_slice %7 {offsets = [8, 0], sizes = [8, 32], strides = [1, 1]} : vector<32x32xf32> to vector<8x32xf32>
    %cst_40 = arith.constant dense<0.000000e+00> : vector<16x32xf32>
    %102 = tpu.matmul %100, %101, %cst_40 {dimension_numbers = #tpu.dot_dimension_numbers<[1], [0], [0], [1], [0, 0, 1, 1], [], []>} : vector<16x8xf32>, vector<8x32xf32>, vector<16x32xf32> -> vector<16x32xf32>
    %103 = arith.addf %61, %102 : vector<16x32xf32>
    %104 = vector.extract_strided_slice %14 {offsets = [0, 16], sizes = [8, 8], strides = [1, 1]} : vector<16x32xf32> to vector<8x8xf32>
    %105 = vector.extract_strided_slice %17 {offsets = [0, 16], sizes = [8, 8], strides = [1, 1]} : vector<16x32xf32> to vector<8x8xf32>
    %106 = vector.extract_strided_slice %20 {offsets = [0, 16], sizes = [8, 8], strides = [1, 1]} : vector<16x32xf32> to vector<8x8xf32>
    %cst_41 = arith.constant dense<0.000000e+00> : vector<8x8xf32>
    %107 = tpu.matmul %104, %105, %cst_41 {dimension_numbers = #tpu.dot_dimension_numbers<[1], [1], [0], [0], [0, 0, 1, 0], [], []>} : vector<8x8xf32>, vector<8x8xf32>, vector<8x8xf32> -> vector<8x8xf32>
    %cst_42 = arith.constant 0.353553385 : f32
    %108 = vector.broadcast %cst_42 : f32 to vector<8x8xf32>
    %109 = arith.mulf %107, %108 : vector<8x8xf32>
    %110 = vector.extract_strided_slice %2 {offsets = [0, 0], sizes = [8, 8], strides = [1, 1]} : vector<16x8xf32> to vector<8x8xf32>
    %111 = arith.addf %109, %110 : vector<8x8xf32>
    %cst_43 = arith.constant dense<0xFF800000> : vector<8xf32>
    %112 = vector.multi_reduction <maximumf>, %111, %cst_43 [1] : vector<8x8xf32> to vector<8xf32>
    %113 = vector.shape_cast %112 : vector<8xf32> to vector<8x1xf32>
    %114 = vector.broadcast %113 : vector<8x1xf32> to vector<8x8xf32>
    %115 = arith.subf %111, %114 : vector<8x8xf32>
    %116 = math.exp %115 : vector<8x8xf32>
    %cst_44 = arith.constant dense<0.000000e+00> : vector<8xf32>
    %117 = vector.multi_reduction <add>, %116, %cst_44 [1] : vector<8x8xf32> to vector<8xf32>
    %118 = vector.shape_cast %117 : vector<8xf32> to vector<8x1xf32>
    %119 = tpu.reciprocal %118 {approx = true} : vector<8x1xf32> -> vector<8x1xf32>
    %120 = vector.broadcast %119 : vector<8x1xf32> to vector<8x8xf32>
    %121 = arith.mulf %116, %120 : vector<8x8xf32>
    %cst_45 = arith.constant dense<0.000000e+00> : vector<8x8xf32>
    %122 = tpu.matmul %121, %106, %cst_45 {dimension_numbers = #tpu.dot_dimension_numbers<[1], [0], [0], [1], [0, 0, 1, 1], [], []>} : vector<8x8xf32>, vector<8x8xf32>, vector<8x8xf32> -> vector<8x8xf32>
    %123 = vector.extract_strided_slice %14 {offsets = [8, 16], sizes = [8, 8], strides = [1, 1]} : vector<16x32xf32> to vector<8x8xf32>
    %124 = vector.extract_strided_slice %17 {offsets = [8, 16], sizes = [8, 8], strides = [1, 1]} : vector<16x32xf32> to vector<8x8xf32>
    %125 = vector.extract_strided_slice %20 {offsets = [8, 16], sizes = [8, 8], strides = [1, 1]} : vector<16x32xf32> to vector<8x8xf32>
    %cst_46 = arith.constant dense<0.000000e+00> : vector<8x8xf32>
    %126 = tpu.matmul %123, %124, %cst_46 {dimension_numbers = #tpu.dot_dimension_numbers<[1], [1], [0], [0], [0, 0, 1, 0], [], []>} : vector<8x8xf32>, vector<8x8xf32>, vector<8x8xf32> -> vector<8x8xf32>
    %cst_47 = arith.constant 0.353553385 : f32
    %127 = vector.broadcast %cst_47 : f32 to vector<8x8xf32>
    %128 = arith.mulf %126, %127 : vector<8x8xf32>
    %129 = vector.extract_strided_slice %2 {offsets = [8, 0], sizes = [8, 8], strides = [1, 1]} : vector<16x8xf32> to vector<8x8xf32>
    %130 = arith.addf %128, %129 : vector<8x8xf32>
    %cst_48 = arith.constant dense<0xFF800000> : vector<8xf32>
    %131 = vector.multi_reduction <maximumf>, %130, %cst_48 [1] : vector<8x8xf32> to vector<8xf32>
    %132 = vector.shape_cast %131 : vector<8xf32> to vector<8x1xf32>
    %133 = vector.broadcast %132 : vector<8x1xf32> to vector<8x8xf32>
    %134 = arith.subf %130, %133 : vector<8x8xf32>
    %135 = math.exp %134 : vector<8x8xf32>
    %cst_49 = arith.constant dense<0.000000e+00> : vector<8xf32>
    %136 = vector.multi_reduction <add>, %135, %cst_49 [1] : vector<8x8xf32> to vector<8xf32>
    %137 = vector.shape_cast %136 : vector<8xf32> to vector<8x1xf32>
    %138 = tpu.reciprocal %137 {approx = true} : vector<8x1xf32> -> vector<8x1xf32>
    %139 = vector.broadcast %138 : vector<8x1xf32> to vector<8x8xf32>
    %140 = arith.mulf %135, %139 : vector<8x8xf32>
    %cst_50 = arith.constant dense<0.000000e+00> : vector<8x8xf32>
    %141 = tpu.matmul %140, %125, %cst_50 {dimension_numbers = #tpu.dot_dimension_numbers<[1], [0], [0], [1], [0, 0, 1, 1], [], []>} : vector<8x8xf32>, vector<8x8xf32>, vector<8x8xf32> -> vector<8x8xf32>
    %142 = tpu.concatenate %122, %141 in 0 : vector<8x8xf32>, vector<8x8xf32> -> vector<16x8xf32>
    %143 = vector.extract_strided_slice %7 {offsets = [16, 0], sizes = [8, 32], strides = [1, 1]} : vector<32x32xf32> to vector<8x32xf32>
    %cst_51 = arith.constant dense<0.000000e+00> : vector<16x32xf32>
    %144 = tpu.matmul %142, %143, %cst_51 {dimension_numbers = #tpu.dot_dimension_numbers<[1], [0], [0], [1], [0, 0, 1, 1], [], []>} : vector<16x8xf32>, vector<8x32xf32>, vector<16x32xf32> -> vector<16x32xf32>
    %145 = arith.addf %103, %144 : vector<16x32xf32>
    %146 = vector.extract_strided_slice %14 {offsets = [0, 24], sizes = [8, 8], strides = [1, 1]} : vector<16x32xf32> to vector<8x8xf32>
    %147 = vector.extract_strided_slice %17 {offsets = [0, 24], sizes = [8, 8], strides = [1, 1]} : vector<16x32xf32> to vector<8x8xf32>
    %148 = vector.extract_strided_slice %20 {offsets = [0, 24], sizes = [8, 8], strides = [1, 1]} : vector<16x32xf32> to vector<8x8xf32>
    %cst_52 = arith.constant dense<0.000000e+00> : vector<8x8xf32>
    %149 = tpu.matmul %146, %147, %cst_52 {dimension_numbers = #tpu.dot_dimension_numbers<[1], [1], [0], [0], [0, 0, 1, 0], [], []>} : vector<8x8xf32>, vector<8x8xf32>, vector<8x8xf32> -> vector<8x8xf32>
    %cst_53 = arith.constant 0.353553385 : f32
    %150 = vector.broadcast %cst_53 : f32 to vector<8x8xf32>
    %151 = arith.mulf %149, %150 : vector<8x8xf32>
    %152 = vector.extract_strided_slice %2 {offsets = [0, 0], sizes = [8, 8], strides = [1, 1]} : vector<16x8xf32> to vector<8x8xf32>
    %153 = arith.addf %151, %152 : vector<8x8xf32>
    %cst_54 = arith.constant dense<0xFF800000> : vector<8xf32>
    %154 = vector.multi_reduction <maximumf>, %153, %cst_54 [1] : vector<8x8xf32> to vector<8xf32>
    %155 = vector.shape_cast %154 : vector<8xf32> to vector<8x1xf32>
    %156 = vector.broadcast %155 : vector<8x1xf32> to vector<8x8xf32>
    %157 = arith.subf %153, %156 : vector<8x8xf32>
    %158 = math.exp %157 : vector<8x8xf32>
    %cst_55 = arith.constant dense<0.000000e+00> : vector<8xf32>
    %159 = vector.multi_reduction <add>, %158, %cst_55 [1] : vector<8x8xf32> to vector<8xf32>
    %160 = vector.shape_cast %159 : vector<8xf32> to vector<8x1xf32>
    %161 = tpu.reciprocal %160 {approx = true} : vector<8x1xf32> -> vector<8x1xf32>
    %162 = vector.broadcast %161 : vector<8x1xf32> to vector<8x8xf32>
    %163 = arith.mulf %158, %162 : vector<8x8xf32>
    %cst_56 = arith.constant dense<0.000000e+00> : vector<8x8xf32>
    %164 = tpu.matmul %163, %148, %cst_56 {dimension_numbers = #tpu.dot_dimension_numbers<[1], [0], [0], [1], [0, 0, 1, 1], [], []>} : vector<8x8xf32>, vector<8x8xf32>, vector<8x8xf32> -> vector<8x8xf32>
    %165 = vector.extract_strided_slice %14 {offsets = [8, 24], sizes = [8, 8], strides = [1, 1]} : vector<16x32xf32> to vector<8x8xf32>
    %166 = vector.extract_strided_slice %17 {offsets = [8, 24], sizes = [8, 8], strides = [1, 1]} : vector<16x32xf32> to vector<8x8xf32>
    %167 = vector.extract_strided_slice %20 {offsets = [8, 24], sizes = [8, 8], strides = [1, 1]} : vector<16x32xf32> to vector<8x8xf32>
    %cst_57 = arith.constant dense<0.000000e+00> : vector<8x8xf32>
    %168 = tpu.matmul %165, %166, %cst_57 {dimension_numbers = #tpu.dot_dimension_numbers<[1], [1], [0], [0], [0, 0, 1, 0], [], []>} : vector<8x8xf32>, vector<8x8xf32>, vector<8x8xf32> -> vector<8x8xf32>
    %cst_58 = arith.constant 0.353553385 : f32
    %169 = vector.broadcast %cst_58 : f32 to vector<8x8xf32>
    %170 = arith.mulf %168, %169 : vector<8x8xf32>
    %171 = vector.extract_strided_slice %2 {offsets = [8, 0], sizes = [8, 8], strides = [1, 1]} : vector<16x8xf32> to vector<8x8xf32>
    %172 = arith.addf %170, %171 : vector<8x8xf32>
    %cst_59 = arith.constant dense<0xFF800000> : vector<8xf32>
    %173 = vector.multi_reduction <maximumf>, %172, %cst_59 [1] : vector<8x8xf32> to vector<8xf32>
    %174 = vector.shape_cast %173 : vector<8xf32> to vector<8x1xf32>
    %175 = vector.broadcast %174 : vector<8x1xf32> to vector<8x8xf32>
    %176 = arith.subf %172, %175 : vector<8x8xf32>
    %177 = math.exp %176 : vector<8x8xf32>
    %cst_60 = arith.constant dense<0.000000e+00> : vector<8xf32>
    %178 = vector.multi_reduction <add>, %177, %cst_60 [1] : vector<8x8xf32> to vector<8xf32>
    %179 = vector.shape_cast %178 : vector<8xf32> to vector<8x1xf32>
    %180 = tpu.reciprocal %179 {approx = true} : vector<8x1xf32> -> vector<8x1xf32>
    %181 = vector.broadcast %180 : vector<8x1xf32> to vector<8x8xf32>
    %182 = arith.mulf %177, %181 : vector<8x8xf32>
    %cst_61 = arith.constant dense<0.000000e+00> : vector<8x8xf32>
    %183 = tpu.matmul %182, %167, %cst_61 {dimension_numbers = #tpu.dot_dimension_numbers<[1], [0], [0], [1], [0, 0, 1, 1], [], []>} : vector<8x8xf32>, vector<8x8xf32>, vector<8x8xf32> -> vector<8x8xf32>
    %184 = tpu.concatenate %164, %183 in 0 : vector<8x8xf32>, vector<8x8xf32> -> vector<16x8xf32>
    %185 = vector.extract_strided_slice %7 {offsets = [24, 0], sizes = [8, 32], strides = [1, 1]} : vector<32x32xf32> to vector<8x32xf32>
    %cst_62 = arith.constant dense<0.000000e+00> : vector<16x32xf32>
    %186 = tpu.matmul %184, %185, %cst_62 {dimension_numbers = #tpu.dot_dimension_numbers<[1], [0], [0], [1], [0, 0, 1, 1], [], []>} : vector<16x8xf32>, vector<8x32xf32>, vector<16x32xf32> -> vector<16x32xf32>
    %187 = arith.addf %145, %186 : vector<16x32xf32>
    %188 = vector.broadcast %11 : vector<1x32xf32> to vector<16x32xf32>
    %189 = arith.addf %187, %188 : vector<16x32xf32>
    %190 = arith.addf %0, %189 : vector<16x32xf32>
    %c9 = arith.constant 9 : index
    %c0_63 = arith.constant 0 : index
    %191 = vector.load %arg8[%c9, %c0_63] : memref<16x32xf32, #tpu.memory_space<vmem>>, vector<1x32xf32>
    %c10 = arith.constant 10 : index
    %c0_64 = arith.constant 0 : index
    %192 = vector.load %arg8[%c10, %c0_64] : memref<16x32xf32, #tpu.memory_space<vmem>>, vector<1x32xf32>
    %cst_65 = arith.constant dense<0.000000e+00> : vector<16xf32>
    %193 = vector.multi_reduction <add>, %190, %cst_65 [1] : vector<16x32xf32> to vector<16xf32>
    %194 = vector.shape_cast %193 : vector<16xf32> to vector<16x1xf32>
    %cst_66 = arith.constant 3.200000e+01 : f32
    %195 = vector.broadcast %cst_66 : f32 to vector<16x1xf32>
    %196 = arith.divf %194, %195 : vector<16x1xf32>
    %197 = vector.broadcast %196 : vector<16x1xf32> to vector<16x32xf32>
    %198 = arith.subf %190, %197 : vector<16x32xf32>
    %199 = arith.mulf %198, %198 : vector<16x32xf32>
    %cst_67 = arith.constant dense<0.000000e+00> : vector<16xf32>
    %200 = vector.multi_reduction <add>, %199, %cst_67 [1] : vector<16x32xf32> to vector<16xf32>
    %201 = vector.shape_cast %200 : vector<16xf32> to vector<16x1xf32>
    %cst_68 = arith.constant 3.200000e+01 : f32
    %202 = vector.broadcast %cst_68 : f32 to vector<16x1xf32>
    %203 = arith.divf %201, %202 : vector<16x1xf32>
    %204 = vector.broadcast %196 : vector<16x1xf32> to vector<16x32xf32>
    %205 = arith.subf %190, %204 : vector<16x32xf32>
    %cst_69 = arith.constant 9.99999974E-6 : f32
    %206 = vector.broadcast %cst_69 : f32 to vector<16x1xf32>
    %207 = arith.addf %203, %206 : vector<16x1xf32>
    %208 = math.rsqrt %207 : vector<16x1xf32>
    %209 = vector.broadcast %208 : vector<16x1xf32> to vector<16x32xf32>
    %210 = arith.mulf %205, %209 : vector<16x32xf32>
    %211 = vector.broadcast %191 : vector<1x32xf32> to vector<16x32xf32>
    %212 = arith.mulf %210, %211 : vector<16x32xf32>
    %213 = vector.broadcast %192 : vector<1x32xf32> to vector<16x32xf32>
    %214 = arith.addf %212, %213 : vector<16x32xf32>
    %c128 = arith.constant 128 : index
    %c0_70 = arith.constant 0 : index
    %215 = vector.load %arg5[%c128, %c0_70] : memref<256x32xf32, #tpu.memory_space<vmem>>, vector<32x32xf32>
    %c160 = arith.constant 160 : index
    %c0_71 = arith.constant 0 : index
    %216 = vector.load %arg5[%c160, %c0_71] : memref<256x32xf32, #tpu.memory_space<vmem>>, vector<32x32xf32>
    %c192 = arith.constant 192 : index
    %c0_72 = arith.constant 0 : index
    %217 = vector.load %arg5[%c192, %c0_72] : memref<256x32xf32, #tpu.memory_space<vmem>>, vector<32x32xf32>
    %c224 = arith.constant 224 : index
    %c0_73 = arith.constant 0 : index
    %218 = vector.load %arg5[%c224, %c0_73] : memref<256x32xf32, #tpu.memory_space<vmem>>, vector<32x32xf32>
    %c4 = arith.constant 4 : index
    %c0_74 = arith.constant 0 : index
    %219 = vector.load %arg8[%c4, %c0_74] : memref<16x32xf32, #tpu.memory_space<vmem>>, vector<1x32xf32>
    %c5 = arith.constant 5 : index
    %c0_75 = arith.constant 0 : index
    %220 = vector.load %arg8[%c5, %c0_75] : memref<16x32xf32, #tpu.memory_space<vmem>>, vector<1x32xf32>
    %c6 = arith.constant 6 : index
    %c0_76 = arith.constant 0 : index
    %221 = vector.load %arg8[%c6, %c0_76] : memref<16x32xf32, #tpu.memory_space<vmem>>, vector<1x32xf32>
    %c7 = arith.constant 7 : index
    %c0_77 = arith.constant 0 : index
    %222 = vector.load %arg8[%c7, %c0_77] : memref<16x32xf32, #tpu.memory_space<vmem>>, vector<1x32xf32>
    %cst_78 = arith.constant dense<0.000000e+00> : vector<16x32xf32>
    %223 = tpu.matmul %214, %215, %cst_78 {dimension_numbers = #tpu.dot_dimension_numbers<[1], [0], [0], [1], [0, 0, 1, 1], [], []>} : vector<16x32xf32>, vector<32x32xf32>, vector<16x32xf32> -> vector<16x32xf32>
    %224 = vector.broadcast %219 : vector<1x32xf32> to vector<16x32xf32>
    %225 = arith.addf %223, %224 : vector<16x32xf32>
    %cst_79 = arith.constant dense<0.000000e+00> : vector<16x32xf32>
    %226 = tpu.matmul %1, %216, %cst_79 {dimension_numbers = #tpu.dot_dimension_numbers<[1], [0], [0], [1], [0, 0, 1, 1], [], []>} : vector<16x32xf32>, vector<32x32xf32>, vector<16x32xf32> -> vector<16x32xf32>
    %227 = vector.broadcast %220 : vector<1x32xf32> to vector<16x32xf32>
    %228 = arith.addf %226, %227 : vector<16x32xf32>
    %cst_80 = arith.constant dense<0.000000e+00> : vector<16x32xf32>
    %229 = tpu.matmul %1, %217, %cst_80 {dimension_numbers = #tpu.dot_dimension_numbers<[1], [0], [0], [1], [0, 0, 1, 1], [], []>} : vector<16x32xf32>, vector<32x32xf32>, vector<16x32xf32> -> vector<16x32xf32>
    %230 = vector.broadcast %221 : vector<1x32xf32> to vector<16x32xf32>
    %231 = arith.addf %229, %230 : vector<16x32xf32>
    %232 = vector.extract_strided_slice %225 {offsets = [0, 0], sizes = [8, 8], strides = [1, 1]} : vector<16x32xf32> to vector<8x8xf32>
    %233 = vector.extract_strided_slice %228 {offsets = [0, 0], sizes = [8, 8], strides = [1, 1]} : vector<16x32xf32> to vector<8x8xf32>
    %234 = vector.extract_strided_slice %231 {offsets = [0, 0], sizes = [8, 8], strides = [1, 1]} : vector<16x32xf32> to vector<8x8xf32>
    %cst_81 = arith.constant dense<0.000000e+00> : vector<8x8xf32>
    %235 = tpu.matmul %232, %233, %cst_81 {dimension_numbers = #tpu.dot_dimension_numbers<[1], [1], [0], [0], [0, 0, 1, 0], [], []>} : vector<8x8xf32>, vector<8x8xf32>, vector<8x8xf32> -> vector<8x8xf32>
    %cst_82 = arith.constant 0.353553385 : f32
    %236 = vector.broadcast %cst_82 : f32 to vector<8x8xf32>
    %237 = arith.mulf %235, %236 : vector<8x8xf32>
    %238 = vector.extract_strided_slice %3 {offsets = [0, 0], sizes = [1, 8], strides = [1, 1]} : vector<2x8xf32> to vector<1x8xf32>
    %239 = vector.broadcast %238 : vector<1x8xf32> to vector<8x8xf32>
    %240 = arith.addf %237, %239 : vector<8x8xf32>
    %cst_83 = arith.constant dense<0xFF800000> : vector<8xf32>
    %241 = vector.multi_reduction <maximumf>, %240, %cst_83 [1] : vector<8x8xf32> to vector<8xf32>
    %242 = vector.shape_cast %241 : vector<8xf32> to vector<8x1xf32>
    %243 = vector.broadcast %242 : vector<8x1xf32> to vector<8x8xf32>
    %244 = arith.subf %240, %243 : vector<8x8xf32>
    %245 = math.exp %244 : vector<8x8xf32>
    %cst_84 = arith.constant dense<0.000000e+00> : vector<8xf32>
    %246 = vector.multi_reduction <add>, %245, %cst_84 [1] : vector<8x8xf32> to vector<8xf32>
    %247 = vector.shape_cast %246 : vector<8xf32> to vector<8x1xf32>
    %248 = tpu.reciprocal %247 {approx = true} : vector<8x1xf32> -> vector<8x1xf32>
    %249 = vector.broadcast %248 : vector<8x1xf32> to vector<8x8xf32>
    %250 = arith.mulf %245, %249 : vector<8x8xf32>
    %c0_85 = arith.constant 0 : index
    %c0_86 = arith.constant 0 : index
    %c0_87 = arith.constant 0 : index
    %c0_88 = arith.constant 0 : index
    %251 = vector.load %arg11[%c0_85, %c0_86, %c0_87, %c0_88] : memref<2x4x8x8xf32, #tpu.memory_space<vmem>>, vector<1x1x8x8xf32>
    %252 = vector.shape_cast %251 : vector<1x1x8x8xf32> to vector<8x8xf32>
    %253 = vector.shape_cast %250 : vector<8x8xf32> to vector<1x1x8x8xf32>
    tpu.vector_store %arg11[%c0_85, %c0_86, %c0_87, %c0_88], %253 {strides = array<i32>} : memref<2x4x8x8xf32, #tpu.memory_space<vmem>>, vector<1x1x8x8xf32>,
    %cst_89 = arith.constant dense<0.000000e+00> : vector<8x8xf32>
    %254 = tpu.matmul %250, %234, %cst_89 {dimension_numbers = #tpu.dot_dimension_numbers<[1], [0], [0], [1], [0, 0, 1, 1], [], []>} : vector<8x8xf32>, vector<8x8xf32>, vector<8x8xf32> -> vector<8x8xf32>
    %255 = vector.extract_strided_slice %225 {offsets = [8, 0], sizes = [8, 8], strides = [1, 1]} : vector<16x32xf32> to vector<8x8xf32>
    %256 = vector.extract_strided_slice %228 {offsets = [8, 0], sizes = [8, 8], strides = [1, 1]} : vector<16x32xf32> to vector<8x8xf32>
    %257 = vector.extract_strided_slice %231 {offsets = [8, 0], sizes = [8, 8], strides = [1, 1]} : vector<16x32xf32> to vector<8x8xf32>
    %cst_90 = arith.constant dense<0.000000e+00> : vector<8x8xf32>
    %258 = tpu.matmul %255, %256, %cst_90 {dimension_numbers = #tpu.dot_dimension_numbers<[1], [1], [0], [0], [0, 0, 1, 0], [], []>} : vector<8x8xf32>, vector<8x8xf32>, vector<8x8xf32> -> vector<8x8xf32>
    %cst_91 = arith.constant 0.353553385 : f32
    %259 = vector.broadcast %cst_91 : f32 to vector<8x8xf32>
    %260 = arith.mulf %258, %259 : vector<8x8xf32>
    %261 = vector.extract_strided_slice %3 {offsets = [1, 0], sizes = [1, 8], strides = [1, 1]} : vector<2x8xf32> to vector<1x8xf32>
    %262 = vector.broadcast %261 : vector<1x8xf32> to vector<8x8xf32>
    %263 = arith.addf %260, %262 : vector<8x8xf32>
    %cst_92 = arith.constant dense<0xFF800000> : vector<8xf32>
    %264 = vector.multi_reduction <maximumf>, %263, %cst_92 [1] : vector<8x8xf32> to vector<8xf32>
    %265 = vector.shape_cast %264 : vector<8xf32> to vector<8x1xf32>
    %266 = vector.broadcast %265 : vector<8x1xf32> to vector<8x8xf32>
    %267 = arith.subf %263, %266 : vector<8x8xf32>
    %268 = math.exp %267 : vector<8x8xf32>
    %cst_93 = arith.constant dense<0.000000e+00> : vector<8xf32>
    %269 = vector.multi_reduction <add>, %268, %cst_93 [1] : vector<8x8xf32> to vector<8xf32>
    %270 = vector.shape_cast %269 : vector<8xf32> to vector<8x1xf32>
    %271 = tpu.reciprocal %270 {approx = true} : vector<8x1xf32> -> vector<8x1xf32>
    %272 = vector.broadcast %271 : vector<8x1xf32> to vector<8x8xf32>
    %273 = arith.mulf %268, %272 : vector<8x8xf32>
    %c1_94 = arith.constant 1 : index
    %c0_95 = arith.constant 0 : index
    %c0_96 = arith.constant 0 : index
    %c0_97 = arith.constant 0 : index
    %274 = vector.load %arg11[%c1_94, %c0_95, %c0_96, %c0_97] : memref<2x4x8x8xf32, #tpu.memory_space<vmem>>, vector<1x1x8x8xf32>
    %275 = vector.shape_cast %274 : vector<1x1x8x8xf32> to vector<8x8xf32>
    %276 = vector.shape_cast %273 : vector<8x8xf32> to vector<1x1x8x8xf32>
    tpu.vector_store %arg11[%c1_94, %c0_95, %c0_96, %c0_97], %276 {strides = array<i32>} : memref<2x4x8x8xf32, #tpu.memory_space<vmem>>, vector<1x1x8x8xf32>,
    %cst_98 = arith.constant dense<0.000000e+00> : vector<8x8xf32>
    %277 = tpu.matmul %273, %257, %cst_98 {dimension_numbers = #tpu.dot_dimension_numbers<[1], [0], [0], [1], [0, 0, 1, 1], [], []>} : vector<8x8xf32>, vector<8x8xf32>, vector<8x8xf32> -> vector<8x8xf32>
    %278 = tpu.concatenate %254, %277 in 0 : vector<8x8xf32>, vector<8x8xf32> -> vector<16x8xf32>
    %279 = vector.extract_strided_slice %218 {offsets = [0, 0], sizes = [8, 32], strides = [1, 1]} : vector<32x32xf32> to vector<8x32xf32>
    %cst_99 = arith.constant dense<0.000000e+00> : vector<16x32xf32>
    %280 = tpu.matmul %278, %279, %cst_99 {dimension_numbers = #tpu.dot_dimension_numbers<[1], [0], [0], [1], [0, 0, 1, 1], [], []>} : vector<16x8xf32>, vector<8x32xf32>, vector<16x32xf32> -> vector<16x32xf32>
    %281 = vector.extract_strided_slice %225 {offsets = [0, 8], sizes = [8, 8], strides = [1, 1]} : vector<16x32xf32> to vector<8x8xf32>
    %282 = vector.extract_strided_slice %228 {offsets = [0, 8], sizes = [8, 8], strides = [1, 1]} : vector<16x32xf32> to vector<8x8xf32>
    %283 = vector.extract_strided_slice %231 {offsets = [0, 8], sizes = [8, 8], strides = [1, 1]} : vector<16x32xf32> to vector<8x8xf32>
    %cst_100 = arith.constant dense<0.000000e+00> : vector<8x8xf32>
    %284 = tpu.matmul %281, %282, %cst_100 {dimension_numbers = #tpu.dot_dimension_numbers<[1], [1], [0], [0], [0, 0, 1, 0], [], []>} : vector<8x8xf32>, vector<8x8xf32>, vector<8x8xf32> -> vector<8x8xf32>
    %cst_101 = arith.constant 0.353553385 : f32
    %285 = vector.broadcast %cst_101 : f32 to vector<8x8xf32>
    %286 = arith.mulf %284, %285 : vector<8x8xf32>
    %287 = vector.extract_strided_slice %3 {offsets = [0, 0], sizes = [1, 8], strides = [1, 1]} : vector<2x8xf32> to vector<1x8xf32>
    %288 = vector.broadcast %287 : vector<1x8xf32> to vector<8x8xf32>
    %289 = arith.addf %286, %288 : vector<8x8xf32>
    %cst_102 = arith.constant dense<0xFF800000> : vector<8xf32>
    %290 = vector.multi_reduction <maximumf>, %289, %cst_102 [1] : vector<8x8xf32> to vector<8xf32>
    %291 = vector.shape_cast %290 : vector<8xf32> to vector<8x1xf32>
    %292 = vector.broadcast %291 : vector<8x1xf32> to vector<8x8xf32>
    %293 = arith.subf %289, %292 : vector<8x8xf32>
    %294 = math.exp %293 : vector<8x8xf32>
    %cst_103 = arith.constant dense<0.000000e+00> : vector<8xf32>
    %295 = vector.multi_reduction <add>, %294, %cst_103 [1] : vector<8x8xf32> to vector<8xf32>
    %296 = vector.shape_cast %295 : vector<8xf32> to vector<8x1xf32>
    %297 = tpu.reciprocal %296 {approx = true} : vector<8x1xf32> -> vector<8x1xf32>
    %298 = vector.broadcast %297 : vector<8x1xf32> to vector<8x8xf32>
    %299 = arith.mulf %294, %298 : vector<8x8xf32>
    %c0_104 = arith.constant 0 : index
    %c1_105 = arith.constant 1 : index
    %c0_106 = arith.constant 0 : index
    %c0_107 = arith.constant 0 : index
    %300 = vector.load %arg11[%c0_104, %c1_105, %c0_106, %c0_107] : memref<2x4x8x8xf32, #tpu.memory_space<vmem>>, vector<1x1x8x8xf32>
    %301 = vector.shape_cast %300 : vector<1x1x8x8xf32> to vector<8x8xf32>
    %302 = vector.shape_cast %299 : vector<8x8xf32> to vector<1x1x8x8xf32>
    tpu.vector_store %arg11[%c0_104, %c1_105, %c0_106, %c0_107], %302 {strides = array<i32>} : memref<2x4x8x8xf32, #tpu.memory_space<vmem>>, vector<1x1x8x8xf32>,
    %cst_108 = arith.constant dense<0.000000e+00> : vector<8x8xf32>
    %303 = tpu.matmul %299, %283, %cst_108 {dimension_numbers = #tpu.dot_dimension_numbers<[1], [0], [0], [1], [0, 0, 1, 1], [], []>} : vector<8x8xf32>, vector<8x8xf32>, vector<8x8xf32> -> vector<8x8xf32>
    %304 = vector.extract_strided_slice %225 {offsets = [8, 8], sizes = [8, 8], strides = [1, 1]} : vector<16x32xf32> to vector<8x8xf32>
    %305 = vector.extract_strided_slice %228 {offsets = [8, 8], sizes = [8, 8], strides = [1, 1]} : vector<16x32xf32> to vector<8x8xf32>
    %306 = vector.extract_strided_slice %231 {offsets = [8, 8], sizes = [8, 8], strides = [1, 1]} : vector<16x32xf32> to vector<8x8xf32>
    %cst_109 = arith.constant dense<0.000000e+00> : vector<8x8xf32>
    %307 = tpu.matmul %304, %305, %cst_109 {dimension_numbers = #tpu.dot_dimension_numbers<[1], [1], [0], [0], [0, 0, 1, 0], [], []>} : vector<8x8xf32>, vector<8x8xf32>, vector<8x8xf32> -> vector<8x8xf32>
    %cst_110 = arith.constant 0.353553385 : f32
    %308 = vector.broadcast %cst_110 : f32 to vector<8x8xf32>
    %309 = arith.mulf %307, %308 : vector<8x8xf32>
    %310 = vector.extract_strided_slice %3 {offsets = [1, 0], sizes = [1, 8], strides = [1, 1]} : vector<2x8xf32> to vector<1x8xf32>
    %311 = vector.broadcast %310 : vector<1x8xf32> to vector<8x8xf32>
    %312 = arith.addf %309, %311 : vector<8x8xf32>
    %cst_111 = arith.constant dense<0xFF800000> : vector<8xf32>
    %313 = vector.multi_reduction <maximumf>, %312, %cst_111 [1] : vector<8x8xf32> to vector<8xf32>
    %314 = vector.shape_cast %313 : vector<8xf32> to vector<8x1xf32>
    %315 = vector.broadcast %314 : vector<8x1xf32> to vector<8x8xf32>
    %316 = arith.subf %312, %315 : vector<8x8xf32>
    %317 = math.exp %316 : vector<8x8xf32>
    %cst_112 = arith.constant dense<0.000000e+00> : vector<8xf32>
    %318 = vector.multi_reduction <add>, %317, %cst_112 [1] : vector<8x8xf32> to vector<8xf32>
    %319 = vector.shape_cast %318 : vector<8xf32> to vector<8x1xf32>
    %320 = tpu.reciprocal %319 {approx = true} : vector<8x1xf32> -> vector<8x1xf32>
    %321 = vector.broadcast %320 : vector<8x1xf32> to vector<8x8xf32>
    %322 = arith.mulf %317, %321 : vector<8x8xf32>
    %c1_113 = arith.constant 1 : index
    %c1_114 = arith.constant 1 : index
    %c0_115 = arith.constant 0 : index
    %c0_116 = arith.constant 0 : index
    %323 = vector.load %arg11[%c1_113, %c1_114, %c0_115, %c0_116] : memref<2x4x8x8xf32, #tpu.memory_space<vmem>>, vector<1x1x8x8xf32>
    %324 = vector.shape_cast %323 : vector<1x1x8x8xf32> to vector<8x8xf32>
    %325 = vector.shape_cast %322 : vector<8x8xf32> to vector<1x1x8x8xf32>
    tpu.vector_store %arg11[%c1_113, %c1_114, %c0_115, %c0_116], %325 {strides = array<i32>} : memref<2x4x8x8xf32, #tpu.memory_space<vmem>>, vector<1x1x8x8xf32>,
    %cst_117 = arith.constant dense<0.000000e+00> : vector<8x8xf32>
    %326 = tpu.matmul %322, %306, %cst_117 {dimension_numbers = #tpu.dot_dimension_numbers<[1], [0], [0], [1], [0, 0, 1, 1], [], []>} : vector<8x8xf32>, vector<8x8xf32>, vector<8x8xf32> -> vector<8x8xf32>
    %327 = tpu.concatenate %303, %326 in 0 : vector<8x8xf32>, vector<8x8xf32> -> vector<16x8xf32>
    %328 = vector.extract_strided_slice %218 {offsets = [8, 0], sizes = [8, 32], strides = [1, 1]} : vector<32x32xf32> to vector<8x32xf32>
    %cst_118 = arith.constant dense<0.000000e+00> : vector<16x32xf32>
    %329 = tpu.matmul %327, %328, %cst_118 {dimension_numbers = #tpu.dot_dimension_numbers<[1], [0], [0], [1], [0, 0, 1, 1], [], []>} : vector<16x8xf32>, vector<8x32xf32>, vector<16x32xf32> -> vector<16x32xf32>
    %330 = arith.addf %280, %329 : vector<16x32xf32>
    %331 = vector.extract_strided_slice %225 {offsets = [0, 16], sizes = [8, 8], strides = [1, 1]} : vector<16x32xf32> to vector<8x8xf32>
    %332 = vector.extract_strided_slice %228 {offsets = [0, 16], sizes = [8, 8], strides = [1, 1]} : vector<16x32xf32> to vector<8x8xf32>
    %333 = vector.extract_strided_slice %231 {offsets = [0, 16], sizes = [8, 8], strides = [1, 1]} : vector<16x32xf32> to vector<8x8xf32>
    %cst_119 = arith.constant dense<0.000000e+00> : vector<8x8xf32>
    %334 = tpu.matmul %331, %332, %cst_119 {dimension_numbers = #tpu.dot_dimension_numbers<[1], [1], [0], [0], [0, 0, 1, 0], [], []>} : vector<8x8xf32>, vector<8x8xf32>, vector<8x8xf32> -> vector<8x8xf32>
    %cst_120 = arith.constant 0.353553385 : f32
    %335 = vector.broadcast %cst_120 : f32 to vector<8x8xf32>
    %336 = arith.mulf %334, %335 : vector<8x8xf32>
    %337 = vector.extract_strided_slice %3 {offsets = [0, 0], sizes = [1, 8], strides = [1, 1]} : vector<2x8xf32> to vector<1x8xf32>
    %338 = vector.broadcast %337 : vector<1x8xf32> to vector<8x8xf32>
    %339 = arith.addf %336, %338 : vector<8x8xf32>
    %cst_121 = arith.constant dense<0xFF800000> : vector<8xf32>
    %340 = vector.multi_reduction <maximumf>, %339, %cst_121 [1] : vector<8x8xf32> to vector<8xf32>
    %341 = vector.shape_cast %340 : vector<8xf32> to vector<8x1xf32>
    %342 = vector.broadcast %341 : vector<8x1xf32> to vector<8x8xf32>
    %343 = arith.subf %339, %342 : vector<8x8xf32>
    %344 = math.exp %343 : vector<8x8xf32>
    %cst_122 = arith.constant dense<0.000000e+00> : vector<8xf32>
    %345 = vector.multi_reduction <add>, %344, %cst_122 [1] : vector<8x8xf32> to vector<8xf32>
    %346 = vector.shape_cast %345 : vector<8xf32> to vector<8x1xf32>
    %347 = tpu.reciprocal %346 {approx = true} : vector<8x1xf32> -> vector<8x1xf32>
    %348 = vector.broadcast %347 : vector<8x1xf32> to vector<8x8xf32>
    %349 = arith.mulf %344, %348 : vector<8x8xf32>
    %c0_123 = arith.constant 0 : index
    %c2_124 = arith.constant 2 : index
    %c0_125 = arith.constant 0 : index
    %c0_126 = arith.constant 0 : index
    %350 = vector.load %arg11[%c0_123, %c2_124, %c0_125, %c0_126] : memref<2x4x8x8xf32, #tpu.memory_space<vmem>>, vector<1x1x8x8xf32>
    %351 = vector.shape_cast %350 : vector<1x1x8x8xf32> to vector<8x8xf32>
    %352 = vector.shape_cast %349 : vector<8x8xf32> to vector<1x1x8x8xf32>
    tpu.vector_store %arg11[%c0_123, %c2_124, %c0_125, %c0_126], %352 {strides = array<i32>} : memref<2x4x8x8xf32, #tpu.memory_space<vmem>>, vector<1x1x8x8xf32>,
    %cst_127 = arith.constant dense<0.000000e+00> : vector<8x8xf32>
    %353 = tpu.matmul %349, %333, %cst_127 {dimension_numbers = #tpu.dot_dimension_numbers<[1], [0], [0], [1], [0, 0, 1, 1], [], []>} : vector<8x8xf32>, vector<8x8xf32>, vector<8x8xf32> -> vector<8x8xf32>
    %354 = vector.extract_strided_slice %225 {offsets = [8, 16], sizes = [8, 8], strides = [1, 1]} : vector<16x32xf32> to vector<8x8xf32>
    %355 = vector.extract_strided_slice %228 {offsets = [8, 16], sizes = [8, 8], strides = [1, 1]} : vector<16x32xf32> to vector<8x8xf32>
    %356 = vector.extract_strided_slice %231 {offsets = [8, 16], sizes = [8, 8], strides = [1, 1]} : vector<16x32xf32> to vector<8x8xf32>
    %cst_128 = arith.constant dense<0.000000e+00> : vector<8x8xf32>
    %357 = tpu.matmul %354, %355, %cst_128 {dimension_numbers = #tpu.dot_dimension_numbers<[1], [1], [0], [0], [0, 0, 1, 0], [], []>} : vector<8x8xf32>, vector<8x8xf32>, vector<8x8xf32> -> vector<8x8xf32>
    %cst_129 = arith.constant 0.353553385 : f32
    %358 = vector.broadcast %cst_129 : f32 to vector<8x8xf32>
    %359 = arith.mulf %357, %358 : vector<8x8xf32>
    %360 = vector.extract_strided_slice %3 {offsets = [1, 0], sizes = [1, 8], strides = [1, 1]} : vector<2x8xf32> to vector<1x8xf32>
    %361 = vector.broadcast %360 : vector<1x8xf32> to vector<8x8xf32>
    %362 = arith.addf %359, %361 : vector<8x8xf32>
    %cst_130 = arith.constant dense<0xFF800000> : vector<8xf32>
    %363 = vector.multi_reduction <maximumf>, %362, %cst_130 [1] : vector<8x8xf32> to vector<8xf32>
    %364 = vector.shape_cast %363 : vector<8xf32> to vector<8x1xf32>
    %365 = vector.broadcast %364 : vector<8x1xf32> to vector<8x8xf32>
    %366 = arith.subf %362, %365 : vector<8x8xf32>
    %367 = math.exp %366 : vector<8x8xf32>
    %cst_131 = arith.constant dense<0.000000e+00> : vector<8xf32>
    %368 = vector.multi_reduction <add>, %367, %cst_131 [1] : vector<8x8xf32> to vector<8xf32>
    %369 = vector.shape_cast %368 : vector<8xf32> to vector<8x1xf32>
    %370 = tpu.reciprocal %369 {approx = true} : vector<8x1xf32> -> vector<8x1xf32>
    %371 = vector.broadcast %370 : vector<8x1xf32> to vector<8x8xf32>
    %372 = arith.mulf %367, %371 : vector<8x8xf32>
    %c1_132 = arith.constant 1 : index
    %c2_133 = arith.constant 2 : index
    %c0_134 = arith.constant 0 : index
    %c0_135 = arith.constant 0 : index
    %373 = vector.load %arg11[%c1_132, %c2_133, %c0_134, %c0_135] : memref<2x4x8x8xf32, #tpu.memory_space<vmem>>, vector<1x1x8x8xf32>
    %374 = vector.shape_cast %373 : vector<1x1x8x8xf32> to vector<8x8xf32>
    %375 = vector.shape_cast %372 : vector<8x8xf32> to vector<1x1x8x8xf32>
    tpu.vector_store %arg11[%c1_132, %c2_133, %c0_134, %c0_135], %375 {strides = array<i32>} : memref<2x4x8x8xf32, #tpu.memory_space<vmem>>, vector<1x1x8x8xf32>,
    %cst_136 = arith.constant dense<0.000000e+00> : vector<8x8xf32>
    %376 = tpu.matmul %372, %356, %cst_136 {dimension_numbers = #tpu.dot_dimension_numbers<[1], [0], [0], [1], [0, 0, 1, 1], [], []>} : vector<8x8xf32>, vector<8x8xf32>, vector<8x8xf32> -> vector<8x8xf32>
    %377 = tpu.concatenate %353, %376 in 0 : vector<8x8xf32>, vector<8x8xf32> -> vector<16x8xf32>
    %378 = vector.extract_strided_slice %218 {offsets = [16, 0], sizes = [8, 32], strides = [1, 1]} : vector<32x32xf32> to vector<8x32xf32>
    %cst_137 = arith.constant dense<0.000000e+00> : vector<16x32xf32>
    %379 = tpu.matmul %377, %378, %cst_137 {dimension_numbers = #tpu.dot_dimension_numbers<[1], [0], [0], [1], [0, 0, 1, 1], [], []>} : vector<16x8xf32>, vector<8x32xf32>, vector<16x32xf32> -> vector<16x32xf32>
    %380 = arith.addf %330, %379 : vector<16x32xf32>
    %381 = vector.extract_strided_slice %225 {offsets = [0, 24], sizes = [8, 8], strides = [1, 1]} : vector<16x32xf32> to vector<8x8xf32>
    %382 = vector.extract_strided_slice %228 {offsets = [0, 24], sizes = [8, 8], strides = [1, 1]} : vector<16x32xf32> to vector<8x8xf32>
    %383 = vector.extract_strided_slice %231 {offsets = [0, 24], sizes = [8, 8], strides = [1, 1]} : vector<16x32xf32> to vector<8x8xf32>
    %cst_138 = arith.constant dense<0.000000e+00> : vector<8x8xf32>
    %384 = tpu.matmul %381, %382, %cst_138 {dimension_numbers = #tpu.dot_dimension_numbers<[1], [1], [0], [0], [0, 0, 1, 0], [], []>} : vector<8x8xf32>, vector<8x8xf32>, vector<8x8xf32> -> vector<8x8xf32>
    %cst_139 = arith.constant 0.353553385 : f32
    %385 = vector.broadcast %cst_139 : f32 to vector<8x8xf32>
    %386 = arith.mulf %384, %385 : vector<8x8xf32>
    %387 = vector.extract_strided_slice %3 {offsets = [0, 0], sizes = [1, 8], strides = [1, 1]} : vector<2x8xf32> to vector<1x8xf32>
    %388 = vector.broadcast %387 : vector<1x8xf32> to vector<8x8xf32>
    %389 = arith.addf %386, %388 : vector<8x8xf32>
    %cst_140 = arith.constant dense<0xFF800000> : vector<8xf32>
    %390 = vector.multi_reduction <maximumf>, %389, %cst_140 [1] : vector<8x8xf32> to vector<8xf32>
    %391 = vector.shape_cast %390 : vector<8xf32> to vector<8x1xf32>
    %392 = vector.broadcast %391 : vector<8x1xf32> to vector<8x8xf32>
    %393 = arith.subf %389, %392 : vector<8x8xf32>
    %394 = math.exp %393 : vector<8x8xf32>
    %cst_141 = arith.constant dense<0.000000e+00> : vector<8xf32>
    %395 = vector.multi_reduction <add>, %394, %cst_141 [1] : vector<8x8xf32> to vector<8xf32>
    %396 = vector.shape_cast %395 : vector<8xf32> to vector<8x1xf32>
    %397 = tpu.reciprocal %396 {approx = true} : vector<8x1xf32> -> vector<8x1xf32>
    %398 = vector.broadcast %397 : vector<8x1xf32> to vector<8x8xf32>
    %399 = arith.mulf %394, %398 : vector<8x8xf32>
    %c0_142 = arith.constant 0 : index
    %c3_143 = arith.constant 3 : index
    %c0_144 = arith.constant 0 : index
    %c0_145 = arith.constant 0 : index
    %400 = vector.load %arg11[%c0_142, %c3_143, %c0_144, %c0_145] : memref<2x4x8x8xf32, #tpu.memory_space<vmem>>, vector<1x1x8x8xf32>
    %401 = vector.shape_cast %400 : vector<1x1x8x8xf32> to vector<8x8xf32>
    %402 = vector.shape_cast %399 : vector<8x8xf32> to vector<1x1x8x8xf32>
    tpu.vector_store %arg11[%c0_142, %c3_143, %c0_144, %c0_145], %402 {strides = array<i32>} : memref<2x4x8x8xf32, #tpu.memory_space<vmem>>, vector<1x1x8x8xf32>,
    %cst_146 = arith.constant dense<0.000000e+00> : vector<8x8xf32>
    %403 = tpu.matmul %399, %383, %cst_146 {dimension_numbers = #tpu.dot_dimension_numbers<[1], [0], [0], [1], [0, 0, 1, 1], [], []>} : vector<8x8xf32>, vector<8x8xf32>, vector<8x8xf32> -> vector<8x8xf32>
    %404 = vector.extract_strided_slice %225 {offsets = [8, 24], sizes = [8, 8], strides = [1, 1]} : vector<16x32xf32> to vector<8x8xf32>
    %405 = vector.extract_strided_slice %228 {offsets = [8, 24], sizes = [8, 8], strides = [1, 1]} : vector<16x32xf32> to vector<8x8xf32>
    %406 = vector.extract_strided_slice %231 {offsets = [8, 24], sizes = [8, 8], strides = [1, 1]} : vector<16x32xf32> to vector<8x8xf32>
    %cst_147 = arith.constant dense<0.000000e+00> : vector<8x8xf32>
    %407 = tpu.matmul %404, %405, %cst_147 {dimension_numbers = #tpu.dot_dimension_numbers<[1], [1], [0], [0], [0, 0, 1, 0], [], []>} : vector<8x8xf32>, vector<8x8xf32>, vector<8x8xf32> -> vector<8x8xf32>
    %cst_148 = arith.constant 0.353553385 : f32
    %408 = vector.broadcast %cst_148 : f32 to vector<8x8xf32>
    %409 = arith.mulf %407, %408 : vector<8x8xf32>
    %410 = vector.extract_strided_slice %3 {offsets = [1, 0], sizes = [1, 8], strides = [1, 1]} : vector<2x8xf32> to vector<1x8xf32>
    %411 = vector.broadcast %410 : vector<1x8xf32> to vector<8x8xf32>
    %412 = arith.addf %409, %411 : vector<8x8xf32>
    %cst_149 = arith.constant dense<0xFF800000> : vector<8xf32>
    %413 = vector.multi_reduction <maximumf>, %412, %cst_149 [1] : vector<8x8xf32> to vector<8xf32>
    %414 = vector.shape_cast %413 : vector<8xf32> to vector<8x1xf32>
    %415 = vector.broadcast %414 : vector<8x1xf32> to vector<8x8xf32>
    %416 = arith.subf %412, %415 : vector<8x8xf32>
    %417 = math.exp %416 : vector<8x8xf32>
    %cst_150 = arith.constant dense<0.000000e+00> : vector<8xf32>
    %418 = vector.multi_reduction <add>, %417, %cst_150 [1] : vector<8x8xf32> to vector<8xf32>
    %419 = vector.shape_cast %418 : vector<8xf32> to vector<8x1xf32>
    %420 = tpu.reciprocal %419 {approx = true} : vector<8x1xf32> -> vector<8x1xf32>
    %421 = vector.broadcast %420 : vector<8x1xf32> to vector<8x8xf32>
    %422 = arith.mulf %417, %421 : vector<8x8xf32>
    %c1_151 = arith.constant 1 : index
    %c3_152 = arith.constant 3 : index
    %c0_153 = arith.constant 0 : index
    %c0_154 = arith.constant 0 : index
    %423 = vector.load %arg11[%c1_151, %c3_152, %c0_153, %c0_154] : memref<2x4x8x8xf32, #tpu.memory_space<vmem>>, vector<1x1x8x8xf32>
    %424 = vector.shape_cast %423 : vector<1x1x8x8xf32> to vector<8x8xf32>
    %425 = vector.shape_cast %422 : vector<8x8xf32> to vector<1x1x8x8xf32>
    tpu.vector_store %arg11[%c1_151, %c3_152, %c0_153, %c0_154], %425 {strides = array<i32>} : memref<2x4x8x8xf32, #tpu.memory_space<vmem>>, vector<1x1x8x8xf32>,
    %cst_155 = arith.constant dense<0.000000e+00> : vector<8x8xf32>
    %426 = tpu.matmul %422, %406, %cst_155 {dimension_numbers = #tpu.dot_dimension_numbers<[1], [0], [0], [1], [0, 0, 1, 1], [], []>} : vector<8x8xf32>, vector<8x8xf32>, vector<8x8xf32> -> vector<8x8xf32>
    %427 = tpu.concatenate %403, %426 in 0 : vector<8x8xf32>, vector<8x8xf32> -> vector<16x8xf32>
    %428 = vector.extract_strided_slice %218 {offsets = [24, 0], sizes = [8, 32], strides = [1, 1]} : vector<32x32xf32> to vector<8x32xf32>
    %cst_156 = arith.constant dense<0.000000e+00> : vector<16x32xf32>
    %429 = tpu.matmul %427, %428, %cst_156 {dimension_numbers = #tpu.dot_dimension_numbers<[1], [0], [0], [1], [0, 0, 1, 1], [], []>} : vector<16x8xf32>, vector<8x32xf32>, vector<16x32xf32> -> vector<16x32xf32>
    %430 = arith.addf %380, %429 : vector<16x32xf32>
    %431 = vector.broadcast %222 : vector<1x32xf32> to vector<16x32xf32>
    %432 = arith.addf %430, %431 : vector<16x32xf32>
    %433 = arith.addf %214, %432 : vector<16x32xf32>
    %c11 = arith.constant 11 : index
    %c0_157 = arith.constant 0 : index
    %434 = vector.load %arg8[%c11, %c0_157] : memref<16x32xf32, #tpu.memory_space<vmem>>, vector<1x32xf32>
    %c12 = arith.constant 12 : index
    %c0_158 = arith.constant 0 : index
    %435 = vector.load %arg8[%c12, %c0_158] : memref<16x32xf32, #tpu.memory_space<vmem>>, vector<1x32xf32>
    %cst_159 = arith.constant dense<0.000000e+00> : vector<16xf32>
    %436 = vector.multi_reduction <add>, %433, %cst_159 [1] : vector<16x32xf32> to vector<16xf32>
    %437 = vector.shape_cast %436 : vector<16xf32> to vector<16x1xf32>
    %cst_160 = arith.constant 3.200000e+01 : f32
    %438 = vector.broadcast %cst_160 : f32 to vector<16x1xf32>
    %439 = arith.divf %437, %438 : vector<16x1xf32>
    %440 = vector.broadcast %439 : vector<16x1xf32> to vector<16x32xf32>
    %441 = arith.subf %433, %440 : vector<16x32xf32>
    %442 = arith.mulf %441, %441 : vector<16x32xf32>
    %cst_161 = arith.constant dense<0.000000e+00> : vector<16xf32>
    %443 = vector.multi_reduction <add>, %442, %cst_161 [1] : vector<16x32xf32> to vector<16xf32>
    %444 = vector.shape_cast %443 : vector<16xf32> to vector<16x1xf32>
    %cst_162 = arith.constant 3.200000e+01 : f32
    %445 = vector.broadcast %cst_162 : f32 to vector<16x1xf32>
    %446 = arith.divf %444, %445 : vector<16x1xf32>
    %447 = vector.broadcast %439 : vector<16x1xf32> to vector<16x32xf32>
    %448 = arith.subf %433, %447 : vector<16x32xf32>
    %cst_163 = arith.constant 9.99999974E-6 : f32
    %449 = vector.broadcast %cst_163 : f32 to vector<16x1xf32>
    %450 = arith.addf %446, %449 : vector<16x1xf32>
    %451 = math.rsqrt %450 : vector<16x1xf32>
    %452 = vector.broadcast %451 : vector<16x1xf32> to vector<16x32xf32>
    %453 = arith.mulf %448, %452 : vector<16x32xf32>
    %454 = vector.broadcast %434 : vector<1x32xf32> to vector<16x32xf32>
    %455 = arith.mulf %453, %454 : vector<16x32xf32>
    %456 = vector.broadcast %435 : vector<1x32xf32> to vector<16x32xf32>
    %457 = arith.addf %455, %456 : vector<16x32xf32>
    %c0_164 = arith.constant 0 : index
    %c0_165 = arith.constant 0 : index
    %458 = vector.load %arg6[%c0_164, %c0_165] : memref<32x64xf32, #tpu.memory_space<vmem>>, vector<32x64xf32>
    %c0_166 = arith.constant 0 : index
    %c0_167 = arith.constant 0 : index
    %459 = vector.load %arg7[%c0_166, %c0_167] : memref<64x32xf32, #tpu.memory_space<vmem>>, vector<64x32xf32>
    %c0_168 = arith.constant 0 : index
    %c0_169 = arith.constant 0 : index
    %460 = vector.load %arg9[%c0_168, %c0_169] : memref<1x64xf32, #tpu.memory_space<vmem>>, vector<1x64xf32>
    %c8 = arith.constant 8 : index
    %c0_170 = arith.constant 0 : index
    %461 = vector.load %arg8[%c8, %c0_170] : memref<16x32xf32, #tpu.memory_space<vmem>>, vector<1x32xf32>
    %cst_171 = arith.constant dense<0.000000e+00> : vector<16x64xf32>
    %462 = tpu.matmul %457, %458, %cst_171 {dimension_numbers = #tpu.dot_dimension_numbers<[1], [0], [0], [1], [0, 0, 1, 1], [], []>} : vector<16x32xf32>, vector<32x64xf32>, vector<16x64xf32> -> vector<16x64xf32>
    %463 = vector.broadcast %460 : vector<1x64xf32> to vector<16x64xf32>
    %464 = arith.addf %462, %463 : vector<16x64xf32>
    %cst_172 = arith.constant 0.000000e+00 : f32
    %465 = vector.broadcast %cst_172 : f32 to vector<16x64xf32>
    %466 = arith.maximumf %464, %465 : vector<16x64xf32>
    %cst_173 = arith.constant dense<0.000000e+00> : vector<16x32xf32>
    %467 = tpu.matmul %466, %459, %cst_173 {dimension_numbers = #tpu.dot_dimension_numbers<[1], [0], [0], [1], [0, 0, 1, 1], [], []>} : vector<16x64xf32>, vector<64x32xf32>, vector<16x32xf32> -> vector<16x32xf32>
    %468 = vector.broadcast %461 : vector<1x32xf32> to vector<16x32xf32>
    %469 = arith.addf %467, %468 : vector<16x32xf32>
    %470 = arith.addf %457, %469 : vector<16x32xf32>
    %c13 = arith.constant 13 : index
    %c0_174 = arith.constant 0 : index
    %471 = vector.load %arg8[%c13, %c0_174] : memref<16x32xf32, #tpu.memory_space<vmem>>, vector<1x32xf32>
    %c14 = arith.constant 14 : index
    %c0_175 = arith.constant 0 : index
    %472 = vector.load %arg8[%c14, %c0_175] : memref<16x32xf32, #tpu.memory_space<vmem>>, vector<1x32xf32>
    %cst_176 = arith.constant dense<0.000000e+00> : vector<16xf32>
    %473 = vector.multi_reduction <add>, %470, %cst_176 [1] : vector<16x32xf32> to vector<16xf32>
    %474 = vector.shape_cast %473 : vector<16xf32> to vector<16x1xf32>
    %cst_177 = arith.constant 3.200000e+01 : f32
    %475 = vector.broadcast %cst_177 : f32 to vector<16x1xf32>
    %476 = arith.divf %474, %475 : vector<16x1xf32>
    %477 = vector.broadcast %476 : vector<16x1xf32> to vector<16x32xf32>
    %478 = arith.subf %470, %477 : vector<16x32xf32>
    %479 = arith.mulf %478, %478 : vector<16x32xf32>
    %cst_178 = arith.constant dense<0.000000e+00> : vector<16xf32>
    %480 = vector.multi_reduction <add>, %479, %cst_178 [1] : vector<16x32xf32> to vector<16xf32>
    %481 = vector.shape_cast %480 : vector<16xf32> to vector<16x1xf32>
    %cst_179 = arith.constant 3.200000e+01 : f32
    %482 = vector.broadcast %cst_179 : f32 to vector<16x1xf32>
    %483 = arith.divf %481, %482 : vector<16x1xf32>
    %484 = vector.broadcast %476 : vector<16x1xf32> to vector<16x32xf32>
    %485 = arith.subf %470, %484 : vector<16x32xf32>
    %cst_180 = arith.constant 9.99999974E-6 : f32
    %486 = vector.broadcast %cst_180 : f32 to vector<16x1xf32>
    %487 = arith.addf %483, %486 : vector<16x1xf32>
    %488 = math.rsqrt %487 : vector<16x1xf32>
    %489 = vector.broadcast %488 : vector<16x1xf32> to vector<16x32xf32>
    %490 = arith.mulf %485, %489 : vector<16x32xf32>
    %491 = vector.broadcast %471 : vector<1x32xf32> to vector<16x32xf32>
    %492 = arith.mulf %490, %491 : vector<16x32xf32>
    %493 = vector.broadcast %472 : vector<1x32xf32> to vector<16x32xf32>
    %494 = arith.addf %492, %493 : vector<16x32xf32>
    %c0_181 = arith.constant 0 : index
    %c0_182 = arith.constant 0 : index
    %495 = vector.load %arg10[%c0_181, %c0_182] : memref<16x32xf32, #tpu.memory_space<vmem>>, vector<16x32xf32>
    tpu.vector_store %arg10[%c0_181, %c0_182], %494 {strides = array<i32>} : memref<16x32xf32, #tpu.memory_space<vmem>>, vector<16x32xf32>,
    return
  }
  func.func @transform_0(%arg0: i32) -> (i32, i32) {
    %c0_i32 = arith.constant 0 : i32
    %c0_i32_0 = arith.constant 0 : i32
    return %arg0, %c0_i32 : i32, i32
  }
  func.func @transform_1(%arg0: i32) -> (i32, i32) {
    %c0_i32 = arith.constant 0 : i32
    %c0_i32_0 = arith.constant 0 : i32
    return %arg0, %c0_i32 : i32, i32
  }
  func.func @transform_2(%arg0: i32) -> (i32, i32) {
    %c0_i32 = arith.constant 0 : i32
    %c0_i32_0 = arith.constant 0 : i32
    return %arg0, %c0_i32 : i32, i32
  }
  func.func @transform_3(%arg0: i32) -> (i32, i32) {
    %c0_i32 = arith.constant 0 : i32
    %c0_i32_0 = arith.constant 0 : i32
    return %arg0, %c0_i32 : i32, i32
  }
  func.func @transform_4(%arg0: i32) -> (i32, i32) {
    %c0_i32 = arith.constant 0 : i32
    %c0_i32_0 = arith.constant 0 : i32
    %c0_i32_1 = arith.constant 0 : i32
    return %c0_i32, %c0_i32_0 : i32, i32
  }
  func.func @transform_5(%arg0: i32) -> (i32, i32) {
    %c0_i32 = arith.constant 0 : i32
    %c0_i32_0 = arith.constant 0 : i32
    %c0_i32_1 = arith.constant 0 : i32
    return %c0_i32, %c0_i32_0 : i32, i32
  }
  func.func @transform_6(%arg0: i32) -> (i32, i32) {
    %c0_i32 = arith.constant 0 : i32
    %c0_i32_0 = arith.constant 0 : i32
    %c0_i32_1 = arith.constant 0 : i32
    return %c0_i32, %c0_i32_0 : i32, i32
  }
  func.func @transform_7(%arg0: i32) -> (i32, i32) {
    %c0_i32 = arith.constant 0 : i32
    %c0_i32_0 = arith.constant 0 : i32
    %c0_i32_1 = arith.constant 0 : i32
    return %c0_i32, %c0_i32_0 : i32, i32
  }
  func.func @transform_8(%arg0: i32) -> (i32, i32) {
    %c0_i32 = arith.constant 0 : i32
    %c0_i32_0 = arith.constant 0 : i32
    %c0_i32_1 = arith.constant 0 : i32
    return %c0_i32, %c0_i32_0 : i32, i32
  }
  func.func @transform_9(%arg0: i32) -> (i32, i32) {
    %c0_i32 = arith.constant 0 : i32
    %c0_i32_0 = arith.constant 0 : i32
    return %arg0, %c0_i32 : i32, i32
  }
  func.func @transform_10(%arg0: i32) -> (i32, i32, i32, i32) {
    %c0_i32 = arith.constant 0 : i32
    %c0_i32_0 = arith.constant 0 : i32
    %c0_i32_1 = arith.constant 0 : i32
    %c0_i32_2 = arith.constant 0 : i32
    return %arg0, %c0_i32, %c0_i32_0, %c0_i32_1 : i32, i32, i32, i32
  }
}

</mosaic_0001>

<llo_original>
// kernel: tpu_custom_call.1
$region0: #{tpu_custom_call.1}
  #allocation0 [shape = 'u32[]', space=smem, size = 0x4, offset = 0x4, fixed_abs, tag = 'smem constant byte address 0x4 - core index']
  #allocation1 [shape = 'u32[144,128]{1,0:T(1,128)}', space=vmem, size = 0x12000, scoped, tag = 'internal scratch']
  %s0 = inlined_call_operand.vmem [shape: f32[16,32], index: 0, kind: input, shape index: {}]
  %s1 = inlined_call_operand.vmem [shape: f32[16,32], index: 1, kind: input, shape index: {}]
  %s2 = inlined_call_operand.vmem [shape: f32[16,8], index: 2, kind: input, shape index: {}]
  %s3 = inlined_call_operand.vmem [shape: f32[2,8], index: 3, kind: input, shape index: {}]
  %s4 = inlined_call_operand.vmem [shape: f32[256,32], index: 4, kind: input, shape index: {}]
  %s5 = inlined_call_operand.vmem [shape: f32[32,64], index: 5, kind: input, shape index: {}]
  %s6 = inlined_call_operand.vmem [shape: f32[64,32], index: 6, kind: input, shape index: {}]
  %s7 = inlined_call_operand.vmem [shape: f32[16,32], index: 7, kind: input, shape index: {}]
  %s8 = inlined_call_operand.vmem [shape: f32[1,64], index: 8, kind: input, shape index: {}]
  %s9 = inlined_call_operand.hbm [shape: f32[16,32], index: 9, kind: output, shape index: {0}]
  %s10 = inlined_call_operand.hbm [shape: f32[2,4,8,8], index: 10, kind: output, shape index: {1}]
  %11 = xla_tuple %s9, %s10
  %s12 = sld [smem:[#allocation0]]
  $region54: #{tpu_custom_call.1} parent=0
    _
  %s14 = ssub.s32 1, %s12
  %s15 = scalar_select 0, %s14, %s12
  $region1: #{tpu_custom_call.1} parent=0
    #allocation2 [shape = 'u8[8192]{0}', space=vmem, size = 0x2000, scoped, tag = 'output window, operand 0, single buffered']
    #allocation3 [shape = 's32[1]{0}', space=sflag, size = 0x4, scoped, tag = 'scoped memory for tpu_custom_call.1']
    #allocation4 [shape = 'u8[32768]{0}', space=vmem, size = 0x8000, scoped, tag = 'output window, operand 1, single buffered']
    #allocation5 [shape = 's32[1]{0}', space=sflag, size = 0x4, scoped, tag = 'scoped memory for tpu_custom_call.1']
    %16 = vsyncpa [#allocation3], 0
    %17 = vsyncpa [#allocation5], 0
    // Predicated region
    $region2: #{tpu_custom_call.1} parent=1 // pred_check
      _
    $region3: #{tpu_custom_call.1} parent=1 // pred_check_branch
      %19 = sbr.rel (0) target = $region5
    $region4: #{tpu_custom_call.1} parent=1 // pred_region
      _
    $region5: #{tpu_custom_call.1} parent=1 // pred_fallthru
      _
    // Predicated region
    $region6: #{tpu_custom_call.1} parent=1 // pred_check
      _
    $region7: #{tpu_custom_call.1} parent=1 // pred_check_branch
      %21 = sbr.rel (0) target = $region9
    $region8: #{tpu_custom_call.1} parent=1 // pred_region
      _
    $region9: #{tpu_custom_call.1} parent=1 // pred_fallthru
      _
    // Predicated region
    $region10: #{tpu_custom_call.1} parent=1 // pred_check
      _
    $region11: #{tpu_custom_call.1} parent=1 // pred_check_branch
      %23 = sbr.rel (0) target = $region13
    $region12: #{tpu_custom_call.1} parent=1 // pred_region
      _
    $region13: #{tpu_custom_call.1} parent=1 // pred_fallthru
      _
    // Predicated region
    $region14: #{tpu_custom_call.1} parent=1 // pred_check
      _
    $region15: #{tpu_custom_call.1} parent=1 // pred_check_branch
      %25 = sbr.rel (0) target = $region17
    $region16: #{tpu_custom_call.1} parent=1 // pred_region
      _
    $region17: #{tpu_custom_call.1} parent=1 // pred_fallthru
      _
    // Predicated region
    $region18: #{tpu_custom_call.1} parent=1 // pred_check
      _
    $region19: #{tpu_custom_call.1} parent=1 // pred_check_branch
      %27 = sbr.rel (0) target = $region21
    $region20: #{tpu_custom_call.1} parent=1 // pred_region
      _
    $region21: #{tpu_custom_call.1} parent=1 // pred_fallthru
      _
    // Predicated region
    $region22: #{tpu_custom_call.1} parent=1 // pred_check
      _
    $region23: #{tpu_custom_call.1} parent=1 // pred_check_branch
      %29 = sbr.rel (0) target = $region25
    $region24: #{tpu_custom_call.1} parent=1 // pred_region
      _
    $region25: #{tpu_custom_call.1} parent=1 // pred_fallthru
      _
    // Predicated region
    $region26: #{tpu_custom_call.1} parent=1 // pred_check
      _
    $region27: #{tpu_custom_call.1} parent=1 // pred_check_branch
      %31 = sbr.rel (0) target = $region29
    $region28: #{tpu_custom_call.1} parent=1 // pred_region
      _
    $region29: #{tpu_custom_call.1} parent=1 // pred_fallthru
      _
    // Predicated region
    $region30: #{tpu_custom_call.1} parent=1 // pred_check
      _
    $region31: #{tpu_custom_call.1} parent=1 // pred_check_branch
      %33 = sbr.rel (0) target = $region33
    $region32: #{tpu_custom_call.1} parent=1 // pred_region
      _
    $region33: #{tpu_custom_call.1} parent=1 // pred_fallthru
      _
    // Predicated region
    $region34: #{tpu_custom_call.1} parent=1 // pred_check
      _
    $region35: #{tpu_custom_call.1} parent=1 // pred_check_branch
      %35 = sbr.rel (0) target = $region37
    $region36: #{tpu_custom_call.1} parent=1 // pred_region
      _
    $region37: #{tpu_custom_call.1} parent=1 // pred_fallthru
      _
    %v36 = vld [vmem:[%s0] sm:$0xff]
    %v37 = vld [vmem:[%s0 + $0x8] sm:$0xff]
    %v38 = vld [vmem:[%s1] sm:$0xff]
    %v39 = vld [vmem:[%s1 + $0x8] sm:$0xff]
    %v40 = vld [vmem:[%s2] sm:$0xff]
    %v41 = vld [vmem:[%s2 + $0x8] sm:$0xff]
    %v42 = vld [vmem:[%s3] sm:$0x3]
    %v43 = vld [vmem:[%s4] sm:$0xff]
    %v44 = vld [vmem:[%s4 + $0x8] sm:$0xff]
    %v45 = vld [vmem:[%s4 + $0x10] sm:$0xff]
    %v46 = vld [vmem:[%s4 + $0x18] sm:$0xff]
    %v47 = vld [vmem:[%s4 + $0x20] sm:$0xff]
    %v48 = vld [vmem:[%s4 + $0x28] sm:$0xff]
    %v49 = vld [vmem:[%s4 + $0x30] sm:$0xff]
    %v50 = vld [vmem:[%s4 + $0x38] sm:$0xff]
    %v51 = vld [vmem:[%s4 + $0x40] sm:$0xff]
    %v52 = vld [vmem:[%s4 + $0x48] sm:$0xff]
    %v53 = vld [vmem:[%s4 + $0x50] sm:$0xff]
    %v54 = vld [vmem:[%s4 + $0x58] sm:$0xff]
    %v55 = vld [vmem:[%s4 + $0x60] sm:$0xff]
    %v56 = vld [vmem:[%s4 + $0x68] sm:$0xff]
    %v57 = vld [vmem:[%s4 + $0x70] sm:$0xff]
    %v58 = vld [vmem:[%s4 + $0x78] sm:$0xff]
    %v59 = vld [vmem:[%s7] sm:$0x1]
    %v60 = vld [vmem:[%s7 + $0x1] sm:$0x1]
    %v61 = vld [vmem:[%s7 + $0x2] sm:$0x1]
    %v62 = vld [vmem:[%s7 + $0x3] sm:$0x1]
    %v63 = vlaneseq
    %v64 = vshrl.u32 %v63, 7
    %v65 = vsub.s32 0, %v64
    %v66 = vrot.slane %v59, %v65
    %vm67 = vcmask 261120
    %v69 = vsel %vm67, %v36, 0
    %v72 = vsel %vm67, %v37, 0
    %74 = vmatprep.subr.mxu0 0.0
    %75 = vmatpush1.msra.mxu0 %v43
    %76 = vmatprep.subr.mxu0 0.0
    %77 = vmatpush1.msra.mxu0 %v44
    %78 = vmatprep.subr.mxu0 0.0
    %79 = vmatpush1.msra.mxu0 %v45
    %80 = vmatprep.subr.mxu0 0.0
    %81 = vmatpush1.msra.mxu0 %v46
    %82 = vmatprep.subr.mxu0 0.0
    %83 = vmatpush1.msra.mxu0 0.0
    %84 = vmatprep.subr.mxu0 0.0
    %85 = vmatpush1.msra.mxu0 0.0
    %86 = vmatprep.subr.mxu0 0.0
    %87 = vmatpush1.msra.mxu0 0.0
    %88 = vmatprep.subr.mxu0 0.0
    %89 = vmatpush1.msra.mxu0 0.0
    %90 = vmatprep.subr.mxu0 0.0
    %91 = vmatpush1.msra.mxu0 0.0
    %92 = vmatprep.subr.mxu0 0.0
    %93 = vmatpush1.msra.mxu0 0.0
    %94 = vmatprep.subr.mxu0 0.0
    %95 = vmatpush1.msra.mxu0 0.0
    %96 = vmatprep.subr.mxu0 0.0
    %97 = vmatpush1.msra.mxu0 0.0
    %98 = vmatprep.subr.mxu0 0.0
    %99 = vmatpush1.msra.mxu0 0.0
    %100 = vmatprep.subr.mxu0 0.0
    %101 = vmatpush1.msra.mxu0 0.0
    %102 = vmatprep.subr.mxu0 0.0
    %103 = vmatpush1.msra.mxu0 0.0
    %104 = vmatprep.subr.mxu0 0.0
    %105 = vmatpush1.msra.mxu0 0.0
    %106 = vmatprep.subr.mxu0 0.0
    %107 = vmatpush1.msra.mxu0 0.0
    %108 = vmatprep.subr.mxu0 0.0
    %109 = vmatpush1.msra.mxu0 0.0
    %110 = vmatprep.subr.mxu0 0.0
    %111 = vmatpush1.msra.mxu0 0.0
    %112 = vmatprep.subr.mxu0 0.0
    %113 = vmatpush1.msra.mxu0 0.0
    %114 = vmatprep.subr.mxu0 0.0
    %115 = vmatpush1.msra.mxu0 0.0
    %116 = vmatprep.subr.mxu0 0.0
    %117 = vmatpush1.msra.mxu0 0.0
    %118 = vmatprep.subr.mxu0 0.0
    %119 = vmatpush1.msra.mxu0 0.0
    %120 = vmatprep.subr.mxu0 0.0
    %121 = vmatpush1.msra.mxu0 0.0
    %122 = vmatprep.subr.mxu0 0.0
    %123 = vmatpush1.msra.mxu0 0.0
    %124 = vmatprep.subr.mxu0 0.0
    %125 = vmatpush1.msra.mxu0 0.0
    %126 = vmatprep.subr.mxu0 0.0
    %127 = vmatpush1.msra.mxu0 0.0
    %128 = vmatprep.subr.mxu0 0.0
    %129 = vmatpush1.msra.mxu0 0.0
    %130 = vmatprep.subr.mxu0 0.0
    %131 = vmatpush1.msra.mxu0 0.0
    %132 = vmatprep.subr.mxu0 0.0
    %133 = vmatpush1.msra.mxu0 0.0
    %134 = vmatprep.subr.mxu0 0.0
    %135 = vmatpush1.msra.mxu0 0.0
    %136 = vmatprep.subr.mxu0 0.0
    %137 = vmatpush1.msra.mxu0 0.0
    %138 = vmatprep.mubr.f32.mxu0 0.0
    %139 = vmatmul.mubr.f32.gmra.mrb[0].mxu0 %v69
    %v140 = vpop.f32.mrb[0].mxu0
    %v141 = vadd.f32 %v66, %v140
    %v142 = vpop.f32.mrb[0].mxu0
    %143 = vmatprep.mubr.f32.mxu0 0.0
    %144 = vmatmul.mubr.f32.gmra.mrb[0].mxu0 %v72
    %v145 = vpop.f32.mrb[0].mxu0
    %v146 = vadd.f32 %v66, %v145
    %v147 = vpop.f32.mrb[0].mxu0
    %148 = vdwg.mxu0
    %v149 = vlaneseq
    %v150 = vshrl.u32 %v149, 7
    %v151 = vsub.s32 0, %v150
    %v152 = vrot.slane %v60, %v151
    %153 = vmatprep.subr.mxu0 0.0
    %154 = vmatpush1.msra.mxu0 %v47
    %155 = vmatprep.subr.mxu0 0.0
    %156 = vmatpush1.msra.mxu0 %v48
    %157 = vmatprep.subr.mxu0 0.0
    %158 = vmatpush1.msra.mxu0 %v49
    %159 = vmatprep.subr.mxu0 0.0
    %160 = vmatpush1.msra.mxu0 %v50
    %161 = vmatprep.subr.mxu0 0.0
    %162 = vmatpush1.msra.mxu0 0.0
    %163 = vmatprep.subr.mxu0 0.0
    %164 = vmatpush1.msra.mxu0 0.0
    %165 = vmatprep.subr.mxu0 0.0
    %166 = vmatpush1.msra.mxu0 0.0
    %167 = vmatprep.subr.mxu0 0.0
    %168 = vmatpush1.msra.mxu0 0.0
    %169 = vmatprep.subr.mxu0 0.0
    %170 = vmatpush1.msra.mxu0 0.0
    %171 = vmatprep.subr.mxu0 0.0
    %172 = vmatpush1.msra.mxu0 0.0
    %173 = vmatprep.subr.mxu0 0.0
    %174 = vmatpush1.msra.mxu0 0.0
    %175 = vmatprep.subr.mxu0 0.0
    %176 = vmatpush1.msra.mxu0 0.0
    %177 = vmatprep.subr.mxu0 0.0
    %178 = vmatpush1.msra.mxu0 0.0
    %179 = vmatprep.subr.mxu0 0.0
    %180 = vmatpush1.msra.mxu0 0.0
    %181 = vmatprep.subr.mxu0 0.0
    %182 = vmatpush1.msra.mxu0 0.0
    %183 = vmatprep.subr.mxu0 0.0
    %184 = vmatpush1.msra.mxu0 0.0
    %185 = vmatprep.subr.mxu0 0.0
    %186 = vmatpush1.msra.mxu0 0.0
    %187 = vmatprep.subr.mxu0 0.0
    %188 = vmatpush1.msra.mxu0 0.0
    %189 = vmatprep.subr.mxu0 0.0
    %190 = vmatpush1.msra.mxu0 0.0
    %191 = vmatprep.subr.mxu0 0.0
    %192 = vmatpush1.msra.mxu0 0.0
    %193 = vmatprep.subr.mxu0 0.0
    %194 = vmatpush1.msra.mxu0 0.0
    %195 = vmatprep.subr.mxu0 0.0
    %196 = vmatpush1.msra.mxu0 0.0
    %197 = vmatprep.subr.mxu0 0.0
    %198 = vmatpush1.msra.mxu0 0.0
    %199 = vmatprep.subr.mxu0 0.0
    %200 = vmatpush1.msra.mxu0 0.0
    %201 = vmatprep.subr.mxu0 0.0
    %202 = vmatpush1.msra.mxu0 0.0
    %203 = vmatprep.subr.mxu0 0.0
    %204 = vmatpush1.msra.mxu0 0.0
    %205 = vmatprep.subr.mxu0 0.0
    %206 = vmatpush1.msra.mxu0 0.0
    %207 = vmatprep.subr.mxu0 0.0
    %208 = vmatpush1.msra.mxu0 0.0
    %209 = vmatprep.subr.mxu0 0.0
    %210 = vmatpush1.msra.mxu0 0.0
    %211 = vmatprep.subr.mxu0 0.0
    %212 = vmatpush1.msra.mxu0 0.0
    %213 = vmatprep.subr.mxu0 0.0
    %214 = vmatpush1.msra.mxu0 0.0
    %215 = vmatprep.subr.mxu0 0.0
    %216 = vmatpush1.msra.mxu0 0.0
    %217 = vmatprep.mubr.f32.mxu0 0.0
    %218 = vmatmul.mubr.f32.gmra.mrb[0].mxu0 %v69
    %v219 = vpop.f32.mrb[0].mxu0
    %v220 = vadd.f32 %v152, %v219
    %v221 = vpop.f32.mrb[0].mxu0
    %222 = vmatprep.mubr.f32.mxu0 0.0
    %223 = vmatmul.mubr.f32.gmra.mrb[0].mxu0 %v72
    %v224 = vpop.f32.mrb[0].mxu0
    %v225 = vadd.f32 %v152, %v224
    %v226 = vpop.f32.mrb[0].mxu0
    %227 = vdwg.mxu0
    %v228 = vlaneseq
    %v229 = vshrl.u32 %v228, 7
    %v230 = vsub.s32 0, %v229
    %v231 = vrot.slane %v61, %v230
    %232 = vmatprep.subr.mxu0 0.0
    %233 = vmatpush1.msra.mxu0 %v51
    %234 = vmatprep.subr.mxu0 0.0
    %235 = vmatpush1.msra.mxu0 %v52
    %236 = vmatprep.subr.mxu0 0.0
    %237 = vmatpush1.msra.mxu0 %v53
    %238 = vmatprep.subr.mxu0 0.0
    %239 = vmatpush1.msra.mxu0 %v54
    %240 = vmatprep.subr.mxu0 0.0
    %241 = vmatpush1.msra.mxu0 0.0
    %242 = vmatprep.subr.mxu0 0.0
    %243 = vmatpush1.msra.mxu0 0.0
    %244 = vmatprep.subr.mxu0 0.0
    %245 = vmatpush1.msra.mxu0 0.0
    %246 = vmatprep.subr.mxu0 0.0
    %247 = vmatpush1.msra.mxu0 0.0
    %248 = vmatprep.subr.mxu0 0.0
    %249 = vmatpush1.msra.mxu0 0.0
    %250 = vmatprep.subr.mxu0 0.0
    %251 = vmatpush1.msra.mxu0 0.0
    %252 = vmatprep.subr.mxu0 0.0
    %253 = vmatpush1.msra.mxu0 0.0
    %254 = vmatprep.subr.mxu0 0.0
    %255 = vmatpush1.msra.mxu0 0.0
    %256 = vmatprep.subr.mxu0 0.0
    %257 = vmatpush1.msra.mxu0 0.0
    %258 = vmatprep.subr.mxu0 0.0
    %259 = vmatpush1.msra.mxu0 0.0
    %260 = vmatprep.subr.mxu0 0.0
    %261 = vmatpush1.msra.mxu0 0.0
    %262 = vmatprep.subr.mxu0 0.0
    %263 = vmatpush1.msra.mxu0 0.0
    %264 = vmatprep.subr.mxu0 0.0
    %265 = vmatpush1.msra.mxu0 0.0
    %266 = vmatprep.subr.mxu0 0.0
    %267 = vmatpush1.msra.mxu0 0.0
    %268 = vmatprep.subr.mxu0 0.0
    %269 = vmatpush1.msra.mxu0 0.0
    %270 = vmatprep.subr.mxu0 0.0
    %271 = vmatpush1.msra.mxu0 0.0
    %272 = vmatprep.subr.mxu0 0.0
    %273 = vmatpush1.msra.mxu0 0.0
    %274 = vmatprep.subr.mxu0 0.0
    %275 = vmatpush1.msra.mxu0 0.0
    %276 = vmatprep.subr.mxu0 0.0
    %277 = vmatpush1.msra.mxu0 0.0
    %278 = vmatprep.subr.mxu0 0.0
    %279 = vmatpush1.msra.mxu0 0.0
    %280 = vmatprep.subr.mxu0 0.0
    %281 = vmatpush1.msra.mxu0 0.0
    %282 = vmatprep.subr.mxu0 0.0
    %283 = vmatpush1.msra.mxu0 0.0
    %284 = vmatprep.subr.mxu0 0.0
    %285 = vmatpush1.msra.mxu0 0.0
    %286 = vmatprep.subr.mxu0 0.0
    %287 = vmatpush1.msra.mxu0 0.0
    %288 = vmatprep.subr.mxu0 0.0
    %289 = vmatpush1.msra.mxu0 0.0
    %290 = vmatprep.subr.mxu0 0.0
    %291 = vmatpush1.msra.mxu0 0.0
    %292 = vmatprep.subr.mxu0 0.0
    %293 = vmatpush1.msra.mxu0 0.0
    %294 = vmatprep.subr.mxu0 0.0
    %295 = vmatpush1.msra.mxu0 0.0
    %296 = vmatprep.mubr.f32.mxu0 0.0
    %297 = vmatmul.mubr.f32.gmra.mrb[0].mxu0 %v69
    %v298 = vpop.f32.mrb[0].mxu0
    %v299 = vadd.f32 %v231, %v298
    %v300 = vpop.f32.mrb[0].mxu0
    %301 = vmatprep.mubr.f32.mxu0 0.0
    %302 = vmatmul.mubr.f32.gmra.mrb[0].mxu0 %v72
    %v303 = vpop.f32.mrb[0].mxu0
    %v304 = vadd.f32 %v231, %v303
    %v305 = vpop.f32.mrb[0].mxu0
    %306 = vdwg.mxu0
    %vm307 = vcmask 64512
    %v309 = vsel %vm307, %v141, 0
    %v312 = vsel %vm307, %v220, 0
    %314 = vmatprep.subr.mxu0 0.0
    %315 = vmatpush1.xpose.msra.mxu0 %v312
    %316 = vmatprep.subr.mxu0 0.0
    %317 = vmatpush1.xpose.msra.mxu0 0.0
    %318 = vmatprep.subr.mxu0 0.0
    %319 = vmatpush1.xpose.msra.mxu0 0.0
    %320 = vmatprep.subr.mxu0 0.0
    %321 = vmatpush1.xpose.msra.mxu0 0.0
    %322 = vmatprep.subr.mxu0 0.0
    %323 = vmatpush1.xpose.msra.mxu0 0.0
    %324 = vmatprep.subr.mxu0 0.0
    %325 = vmatpush1.xpose.msra.mxu0 0.0
    %326 = vmatprep.subr.mxu0 0.0
    %327 = vmatpush1.xpose.msra.mxu0 0.0
    %328 = vmatprep.subr.mxu0 0.0
    %329 = vmatpush1.xpose.msra.mxu0 0.0
    %330 = vmatprep.subr.mxu0 0.0
    %331 = vmatpush1.xpose.msra.mxu0 0.0
    %332 = vmatprep.subr.mxu0 0.0
    %333 = vmatpush1.xpose.msra.mxu0 0.0
    %334 = vmatprep.subr.mxu0 0.0
    %335 = vmatpush1.xpose.msra.mxu0 0.0
    %336 = vmatprep.subr.mxu0 0.0
    %337 = vmatpush1.xpose.msra.mxu0 0.0
    %338 = vmatprep.subr.mxu0 0.0
    %339 = vmatpush1.xpose.msra.mxu0 0.0
    %340 = vmatprep.subr.mxu0 0.0
    %341 = vmatpush1.xpose.msra.mxu0 0.0
    %342 = vmatprep.subr.mxu0 0.0
    %343 = vmatpush1.xpose.msra.mxu0 0.0
    %344 = vmatprep.subr.mxu0 0.0
    %345 = vmatpush1.xpose.msra.mxu0 0.0
    %346 = vmatprep.subr.mxu0 0.0
    %347 = vmatpush1.xpose.msra.mxu0 0.0
    %348 = vmatprep.subr.mxu0 0.0
    %349 = vmatpush1.xpose.msra.mxu0 0.0
    %350 = vmatprep.subr.mxu0 0.0
    %351 = vmatpush1.xpose.msra.mxu0 0.0
    %352 = vmatprep.subr.mxu0 0.0
    %353 = vmatpush1.xpose.msra.mxu0 0.0
    %354 = vmatprep.subr.mxu0 0.0
    %355 = vmatpush1.xpose.msra.mxu0 0.0
    %356 = vmatprep.subr.mxu0 0.0
    %357 = vmatpush1.xpose.msra.mxu0 0.0
    %358 = vmatprep.subr.mxu0 0.0
    %359 = vmatpush1.xpose.msra.mxu0 0.0
    %360 = vmatprep.subr.mxu0 0.0
    %361 = vmatpush1.xpose.msra.mxu0 0.0
    %362 = vmatprep.subr.mxu0 0.0
    %363 = vmatpush1.xpose.msra.mxu0 0.0
    %364 = vmatprep.subr.mxu0 0.0
    %365 = vmatpush1.xpose.msra.mxu0 0.0
    %366 = vmatprep.subr.mxu0 0.0
    %367 = vmatpush1.xpose.msra.mxu0 0.0
    %368 = vmatprep.subr.mxu0 0.0
    %369 = vmatpush1.xpose.msra.mxu0 0.0
    %370 = vmatprep.subr.mxu0 0.0
    %371 = vmatpush1.xpose.msra.mxu0 0.0
    %372 = vmatprep.subr.mxu0 0.0
    %373 = vmatpush1.xpose.msra.mxu0 0.0
    %374 = vmatprep.subr.mxu0 0.0
    %375 = vmatpush1.xpose.msra.mxu0 0.0
    %376 = vmatprep.subr.mxu0 0.0
    %377 = vmatpush1.xpose.msra.mxu0 0.0
    %378 = vmatprep.mubr.f32.mxu0 0.0
    %379 = vmatmul.mubr.f32.gmra.mrb[0].mxu0 %v309
    %v380 = vpop.f32.mrb[0].mxu0
    %v381 = vadd.f32 0.0, %v380
    %v382 = vpop.f32.mrb[0].mxu0
    %383 = vdwg.mxu0
    %v384 = vmul.f32 %v381, 0.35355338
    %v385 = vadd.f32 %v384, %v40
    %v386 = vsel %vm307, %v385, -inf
    %387 = vmax.xlane.f32.xlu0 %v386
    %v388 = vpop.xlane.xlu0 %387
    %v389 = vsub.f32 %v385, %v388
    %v390 = vmul.f32 %v389, 1.442695
    %v391 = vpow.pop %v390
    %v392 = vsel %vm307, %v391, 0.0
    %393 = vadd.xlane.f32.xlu0 %v392
    %v394 = vpop.xlane.xlu0 %393
    %v395 = vrcp.pop %v394
    %v396 = vmul.f32 %v391, %v395
    %v398 = vsel %vm307, %v396, 0
    %400 = vmatprep.subr.mxu0 0.0
    %401 = vmatpush1.msra.mxu0 %v299
    %402 = vmatprep.subr.mxu0 0.0
    %403 = vmatpush1.msra.mxu0 0.0
    %404 = vmatprep.subr.mxu0 0.0
    %405 = vmatpush1.msra.mxu0 0.0
    %406 = vmatprep.subr.mxu0 0.0
    %407 = vmatpush1.msra.mxu0 0.0
    %408 = vmatprep.subr.mxu0 0.0
    %409 = vmatpush1.msra.mxu0 0.0
    %410 = vmatprep.subr.mxu0 0.0
    %411 = vmatpush1.msra.mxu0 0.0
    %412 = vmatprep.subr.mxu0 0.0
    %413 = vmatpush1.msra.mxu0 0.0
    %414 = vmatprep.subr.mxu0 0.0
    %415 = vmatpush1.msra.mxu0 0.0
    %416 = vmatprep.subr.mxu0 0.0
    %417 = vmatpush1.msra.mxu0 0.0
    %418 = vmatprep.subr.mxu0 0.0
    %419 = vmatpush1.msra.mxu0 0.0
    %420 = vmatprep.subr.mxu0 0.0
    %421 = vmatpush1.msra.mxu0 0.0
    %422 = vmatprep.subr.mxu0 0.0
    %423 = vmatpush1.msra.mxu0 0.0
    %424 = vmatprep.subr.mxu0 0.0
    %425 = vmatpush1.msra.mxu0 0.0
    %426 = vmatprep.subr.mxu0 0.0
    %427 = vmatpush1.msra.mxu0 0.0
    %428 = vmatprep.subr.mxu0 0.0
    %429 = vmatpush1.msra.mxu0 0.0
    %430 = vmatprep.subr.mxu0 0.0
    %431 = vmatpush1.msra.mxu0 0.0
    %432 = vmatprep.subr.mxu0 0.0
    %433 = vmatpush1.msra.mxu0 0.0
    %434 = vmatprep.subr.mxu0 0.0
    %435 = vmatpush1.msra.mxu0 0.0
    %436 = vmatprep.subr.mxu0 0.0
    %437 = vmatpush1.msra.mxu0 0.0
    %438 = vmatprep.subr.mxu0 0.0
    %439 = vmatpush1.msra.mxu0 0.0
    %440 = vmatprep.subr.mxu0 0.0
    %441 = vmatpush1.msra.mxu0 0.0
    %442 = vmatprep.subr.mxu0 0.0
    %443 = vmatpush1.msra.mxu0 0.0
    %444 = vmatprep.subr.mxu0 0.0
    %445 = vmatpush1.msra.mxu0 0.0
    %446 = vmatprep.subr.mxu0 0.0
    %447 = vmatpush1.msra.mxu0 0.0
    %448 = vmatprep.subr.mxu0 0.0
    %449 = vmatpush1.msra.mxu0 0.0
    %450 = vmatprep.subr.mxu0 0.0
    %451 = vmatpush1.msra.mxu0 0.0
    %452 = vmatprep.subr.mxu0 0.0
    %453 = vmatpush1.msra.mxu0 0.0
    %454 = vmatprep.subr.mxu0 0.0
    %455 = vmatpush1.msra.mxu0 0.0
    %456 = vmatprep.subr.mxu0 0.0
    %457 = vmatpush1.msra.mxu0 0.0
    %458 = vmatprep.subr.mxu0 0.0
    %459 = vmatpush1.msra.mxu0 0.0
    %460 = vmatprep.subr.mxu0 0.0
    %461 = vmatpush1.msra.mxu0 0.0
    %462 = vmatprep.subr.mxu0 0.0
    %463 = vmatpush1.msra.mxu0 0.0
    %464 = vmatprep.mubr.f32.mxu0 0.0
    %465 = vmatmul.mubr.f32.gmra.mrb[0].mxu0 %v398
    %v466 = vpop.f32.mrb[0].mxu0
    %v467 = vadd.f32 0.0, %v466
    %v468 = vpop.f32.mrb[0].mxu0
    %469 = vdwg.mxu0
    %v471 = vsel %vm307, %v146, 0
    %v474 = vsel %vm307, %v225, 0
    %476 = vmatprep.subr.mxu0 0.0
    %477 = vmatpush1.xpose.msra.mxu0 %v474
    %478 = vmatprep.subr.mxu0 0.0
    %479 = vmatpush1.xpose.msra.mxu0 0.0
    %480 = vmatprep.subr.mxu0 0.0
    %481 = vmatpush1.xpose.msra.mxu0 0.0
    %482 = vmatprep.subr.mxu0 0.0
    %483 = vmatpush1.xpose.msra.mxu0 0.0
    %484 = vmatprep.subr.mxu0 0.0
    %485 = vmatpush1.xpose.msra.mxu0 0.0
    %486 = vmatprep.subr.mxu0 0.0
    %487 = vmatpush1.xpose.msra.mxu0 0.0
    %488 = vmatprep.subr.mxu0 0.0
    %489 = vmatpush1.xpose.msra.mxu0 0.0
    %490 = vmatprep.subr.mxu0 0.0
    %491 = vmatpush1.xpose.msra.mxu0 0.0
    %492 = vmatprep.subr.mxu0 0.0
    %493 = vmatpush1.xpose.msra.mxu0 0.0
    %494 = vmatprep.subr.mxu0 0.0
    %495 = vmatpush1.xpose.msra.mxu0 0.0
    %496 = vmatprep.subr.mxu0 0.0
    %497 = vmatpush1.xpose.msra.mxu0 0.0
    %498 = vmatprep.subr.mxu0 0.0
    %499 = vmatpush1.xpose.msra.mxu0 0.0
    %500 = vmatprep.subr.mxu0 0.0
    %501 = vmatpush1.xpose.msra.mxu0 0.0
    %502 = vmatprep.subr.mxu0 0.0
    %503 = vmatpush1.xpose.msra.mxu0 0.0
    %504 = vmatprep.subr.mxu0 0.0
    %505 = vmatpush1.xpose.msra.mxu0 0.0
    %506 = vmatprep.subr.mxu0 0.0
    %507 = vmatpush1.xpose.msra.mxu0 0.0
    %508 = vmatprep.subr.mxu0 0.0
    %509 = vmatpush1.xpose.msra.mxu0 0.0
    %510 = vmatprep.subr.mxu0 0.0
    %511 = vmatpush1.xpose.msra.mxu0 0.0
    %512 = vmatprep.subr.mxu0 0.0
    %513 = vmatpush1.xpose.msra.mxu0 0.0
    %514 = vmatprep.subr.mxu0 0.0
    %515 = vmatpush1.xpose.msra.mxu0 0.0
    %516 = vmatprep.subr.mxu0 0.0
    %517 = vmatpush1.xpose.msra.mxu0 0.0
    %518 = vmatprep.subr.mxu0 0.0
    %519 = vmatpush1.xpose.msra.mxu0 0.0
    %520 = vmatprep.subr.mxu0 0.0
    %521 = vmatpush1.xpose.msra.mxu0 0.0
    %522 = vmatprep.subr.mxu0 0.0
    %523 = vmatpush1.xpose.msra.mxu0 0.0
    %524 = vmatprep.subr.mxu0 0.0
    %525 = vmatpush1.xpose.msra.mxu0 0.0
    %526 = vmatprep.subr.mxu0 0.0
    %527 = vmatpush1.xpose.msra.mxu0 0.0
    %528 = vmatprep.subr.mxu0 0.0
    %529 = vmatpush1.xpose.msra.mxu0 0.0
    %530 = vmatprep.subr.mxu0 0.0
    %531 = vmatpush1.xpose.msra.mxu0 0.0
    %532 = vmatprep.subr.mxu0 0.0
    %533 = vmatpush1.xpose.msra.mxu0 0.0
    %534 = vmatprep.subr.mxu0 0.0
    %535 = vmatpush1.xpose.msra.mxu0 0.0
    %536 = vmatprep.subr.mxu0 0.0
    %537 = vmatpush1.xpose.msra.mxu0 0.0
    %538 = vmatprep.subr.mxu0 0.0
    %539 = vmatpush1.xpose.msra.mxu0 0.0
    %540 = vmatprep.mubr.f32.mxu0 0.0
    %541 = vmatmul.mubr.f32.gmra.mrb[0].mxu0 %v471
    %v542 = vpop.f32.mrb[0].mxu0
    %v543 = vadd.f32 0.0, %v542
    %v544 = vpop.f32.mrb[0].mxu0
    %545 = vdwg.mxu0
    %v546 = vmul.f32 %v543, 0.35355338
    %v547 = vadd.f32 %v546, %v41
    %v548 = vsel %vm307, %v547, -inf
    %549 = vmax.xlane.f32.xlu0 %v548
    %v550 = vpop.xlane.xlu0 %549
    %v551 = vsub.f32 %v547, %v550
    %v552 = vmul.f32 %v551, 1.442695
    %v553 = vpow.pop %v552
    %v554 = vsel %vm307, %v553, 0.0
    %555 = vadd.xlane.f32.xlu0 %v554
    %v556 = vpop.xlane.xlu0 %555
    %v557 = vrcp.pop %v556
    %v558 = vmul.f32 %v553, %v557
    %v560 = vsel %vm307, %v558, 0
    %562 = vmatprep.subr.mxu0 0.0
    %563 = vmatpush1.msra.mxu0 %v304
    %564 = vmatprep.subr.mxu0 0.0
    %565 = vmatpush1.msra.mxu0 0.0
    %566 = vmatprep.subr.mxu0 0.0
    %567 = vmatpush1.msra.mxu0 0.0
    %568 = vmatprep.subr.mxu0 0.0
    %569 = vmatpush1.msra.mxu0 0.0
    %570 = vmatprep.subr.mxu0 0.0
    %571 = vmatpush1.msra.mxu0 0.0
    %572 = vmatprep.subr.mxu0 0.0
    %573 = vmatpush1.msra.mxu0 0.0
    %574 = vmatprep.subr.mxu0 0.0
    %575 = vmatpush1.msra.mxu0 0.0
    %576 = vmatprep.subr.mxu0 0.0
    %577 = vmatpush1.msra.mxu0 0.0
    %578 = vmatprep.subr.mxu0 0.0
    %579 = vmatpush1.msra.mxu0 0.0
    %580 = vmatprep.subr.mxu0 0.0
    %581 = vmatpush1.msra.mxu0 0.0
    %582 = vmatprep.subr.mxu0 0.0
    %583 = vmatpush1.msra.mxu0 0.0
    %584 = vmatprep.subr.mxu0 0.0
    %585 = vmatpush1.msra.mxu0 0.0
    %586 = vmatprep.subr.mxu0 0.0
    %587 = vmatpush1.msra.mxu0 0.0
    %588 = vmatprep.subr.mxu0 0.0
    %589 = vmatpush1.msra.mxu0 0.0
    %590 = vmatprep.subr.mxu0 0.0
    %591 = vmatpush1.msra.mxu0 0.0
    %592 = vmatprep.subr.mxu0 0.0
    %593 = vmatpush1.msra.mxu0 0.0
    %594 = vmatprep.subr.mxu0 0.0
    %595 = vmatpush1.msra.mxu0 0.0
    %596 = vmatprep.subr.mxu0 0.0
    %597 = vmatpush1.msra.mxu0 0.0
    %598 = vmatprep.subr.mxu0 0.0
    %599 = vmatpush1.msra.mxu0 0.0
    %600 = vmatprep.subr.mxu0 0.0
    %601 = vmatpush1.msra.mxu0 0.0
    %602 = vmatprep.subr.mxu0 0.0
    %603 = vmatpush1.msra.mxu0 0.0
    %604 = vmatprep.subr.mxu0 0.0
    %605 = vmatpush1.msra.mxu0 0.0
    %606 = vmatprep.subr.mxu0 0.0
    %607 = vmatpush1.msra.mxu0 0.0
    %608 = vmatprep.subr.mxu0 0.0
    %609 = vmatpush1.msra.mxu0 0.0
    %610 = vmatprep.subr.mxu0 0.0
    %611 = vmatpush1.msra.mxu0 0.0
    %612 = vmatprep.subr.mxu0 0.0
    %613 = vmatpush1.msra.mxu0 0.0
    %614 = vmatprep.subr.mxu0 0.0
    %615 = vmatpush1.msra.mxu0 0.0
    %616 = vmatprep.subr.mxu0 0.0
    %617 = vmatpush1.msra.mxu0 0.0
    %618 = vmatprep.subr.mxu0 0.0
    %619 = vmatpush1.msra.mxu0 0.0
    %620 = vmatprep.subr.mxu0 0.0
    %621 = vmatpush1.msra.mxu0 0.0
    %622 = vmatprep.subr.mxu0 0.0
    %623 = vmatpush1.msra.mxu0 0.0
    %624 = vmatprep.subr.mxu0 0.0
    %625 = vmatpush1.msra.mxu0 0.0
    %626 = vmatprep.mubr.f32.mxu0 0.0
    %627 = vmatmul.mubr.f32.gmra.mrb[0].mxu0 %v560
    %v628 = vpop.f32.mrb[0].mxu0
    %v629 = vadd.f32 0.0, %v628
    %v630 = vpop.f32.mrb[0].mxu0
    %631 = vdwg.mxu0
    %632 = vrot.lane.b32.xlu0 %v141, 120
    %v633 = vpop.permute.xlu0 %632
    %634 = vrot.lane.b32.xlu0 %v220, 120
    %v635 = vpop.permute.xlu0 %634
    %v636 = vsel %vm307, %v633, 0
    %v638 = vsel %vm307, %v635, 0
    %640 = vmatprep.subr.mxu0 0.0
    %641 = vmatpush1.xpose.msra.mxu0 %v638
    %642 = vmatprep.subr.mxu0 0.0
    %643 = vmatpush1.xpose.msra.mxu0 0.0
    %644 = vmatprep.subr.mxu0 0.0
    %645 = vmatpush1.xpose.msra.mxu0 0.0
    %646 = vmatprep.subr.mxu0 0.0
    %647 = vmatpush1.xpose.msra.mxu0 0.0
    %648 = vmatprep.subr.mxu0 0.0
    %649 = vmatpush1.xpose.msra.mxu0 0.0
    %650 = vmatprep.subr.mxu0 0.0
    %651 = vmatpush1.xpose.msra.mxu0 0.0
    %652 = vmatprep.subr.mxu0 0.0
    %653 = vmatpush1.xpose.msra.mxu0 0.0
    %654 = vmatprep.subr.mxu0 0.0
    %655 = vmatpush1.xpose.msra.mxu0 0.0
    %656 = vmatprep.subr.mxu0 0.0
    %657 = vmatpush1.xpose.msra.mxu0 0.0
    %658 = vmatprep.subr.mxu0 0.0
    %659 = vmatpush1.xpose.msra.mxu0 0.0
    %660 = vmatprep.subr.mxu0 0.0
    %661 = vmatpush1.xpose.msra.mxu0 0.0
    %662 = vmatprep.subr.mxu0 0.0
    %663 = vmatpush1.xpose.msra.mxu0 0.0
    %664 = vmatprep.subr.mxu0 0.0
    %665 = vmatpush1.xpose.msra.mxu0 0.0
    %666 = vmatprep.subr.mxu0 0.0
    %667 = vmatpush1.xpose.msra.mxu0 0.0
    %668 = vmatprep.subr.mxu0 0.0
    %669 = vmatpush1.xpose.msra.mxu0 0.0
    %670 = vmatprep.subr.mxu0 0.0
    %671 = vmatpush1.xpose.msra.mxu0 0.0
    %672 = vmatprep.subr.mxu0 0.0
    %673 = vmatpush1.xpose.msra.mxu0 0.0
    %674 = vmatprep.subr.mxu0 0.0
    %675 = vmatpush1.xpose.msra.mxu0 0.0
    %676 = vmatprep.subr.mxu0 0.0
    %677 = vmatpush1.xpose.msra.mxu0 0.0
    %678 = vmatprep.subr.mxu0 0.0
    %679 = vmatpush1.xpose.msra.mxu0 0.0
    %680 = vmatprep.subr.mxu0 0.0
    %681 = vmatpush1.xpose.msra.mxu0 0.0
    %682 = vmatprep.subr.mxu0 0.0
    %683 = vmatpush1.xpose.msra.mxu0 0.0
    %684 = vmatprep.subr.mxu0 0.0
    %685 = vmatpush1.xpose.msra.mxu0 0.0
    %686 = vmatprep.subr.mxu0 0.0
    %687 = vmatpush1.xpose.msra.mxu0 0.0
    %688 = vmatprep.subr.mxu0 0.0
    %689 = vmatpush1.xpose.msra.mxu0 0.0
    %690 = vmatprep.subr.mxu0 0.0
    %691 = vmatpush1.xpose.msra.mxu0 0.0
    %692 = vmatprep.subr.mxu0 0.0
    %693 = vmatpush1.xpose.msra.mxu0 0.0
    %694 = vmatprep.subr.mxu0 0.0
    %695 = vmatpush1.xpose.msra.mxu0 0.0
    %696 = vmatprep.subr.mxu0 0.0
    %697 = vmatpush1.xpose.msra.mxu0 0.0
    %698 = vmatprep.subr.mxu0 0.0
    %699 = vmatpush1.xpose.msra.mxu0 0.0
    %700 = vmatprep.subr.mxu0 0.0
    %701 = vmatpush1.xpose.msra.mxu0 0.0
    %702 = vmatprep.subr.mxu0 0.0
    %703 = vmatpush1.xpose.msra.mxu0 0.0
    %704 = vmatprep.mubr.f32.mxu0 0.0
    %705 = vmatmul.mubr.f32.gmra.mrb[0].mxu0 %v636
    %v706 = vpop.f32.mrb[0].mxu0
    %v707 = vadd.f32 0.0, %v706
    %v708 = vpop.f32.mrb[0].mxu0
    %709 = vdwg.mxu0
    %v710 = vmul.f32 %v707, 0.35355338
    %v711 = vadd.f32 %v710, %v40
    %v712 = vsel %vm307, %v711, -inf
    %713 = vmax.xlane.f32.xlu0 %v712
    %v714 = vpop.xlane.xlu0 %713
    %v715 = vsub.f32 %v711, %v714
    %v716 = vmul.f32 %v715, 1.442695
    %v717 = vpow.pop %v716
    %v718 = vsel %vm307, %v717, 0.0
    %719 = vadd.xlane.f32.xlu0 %v718
    %v720 = vpop.xlane.xlu0 %719
    %v721 = vrcp.pop %v720
    %v722 = vmul.f32 %v717, %v721
    %724 = vrot.lane.b32.xlu0 %v299, 120
    %v725 = vpop.permute.xlu0 %724
    %v728 = vsel %vm307, %v722, 0
    %730 = vmatprep.subr.mxu0 0.0
    %731 = vmatpush1.msra.mxu0 %v725
    %732 = vmatprep.subr.mxu0 0.0
    %733 = vmatpush1.msra.mxu0 0.0
    %734 = vmatprep.subr.mxu0 0.0
    %735 = vmatpush1.msra.mxu0 0.0
    %736 = vmatprep.subr.mxu0 0.0
    %737 = vmatpush1.msra.mxu0 0.0
    %738 = vmatprep.subr.mxu0 0.0
    %739 = vmatpush1.msra.mxu0 0.0
    %740 = vmatprep.subr.mxu0 0.0
    %741 = vmatpush1.msra.mxu0 0.0
    %742 = vmatprep.subr.mxu0 0.0
    %743 = vmatpush1.msra.mxu0 0.0
    %744 = vmatprep.subr.mxu0 0.0
    %745 = vmatpush1.msra.mxu0 0.0
    %746 = vmatprep.subr.mxu0 0.0
    %747 = vmatpush1.msra.mxu0 0.0
    %748 = vmatprep.subr.mxu0 0.0
    %749 = vmatpush1.msra.mxu0 0.0
    %750 = vmatprep.subr.mxu0 0.0
    %751 = vmatpush1.msra.mxu0 0.0
    %752 = vmatprep.subr.mxu0 0.0
    %753 = vmatpush1.msra.mxu0 0.0
    %754 = vmatprep.subr.mxu0 0.0
    %755 = vmatpush1.msra.mxu0 0.0
    %756 = vmatprep.subr.mxu0 0.0
    %757 = vmatpush1.msra.mxu0 0.0
    %758 = vmatprep.subr.mxu0 0.0
    %759 = vmatpush1.msra.mxu0 0.0
    %760 = vmatprep.subr.mxu0 0.0
    %761 = vmatpush1.msra.mxu0 0.0
    %762 = vmatprep.subr.mxu0 0.0
    %763 = vmatpush1.msra.mxu0 0.0
    %764 = vmatprep.subr.mxu0 0.0
    %765 = vmatpush1.msra.mxu0 0.0
    %766 = vmatprep.subr.mxu0 0.0
    %767 = vmatpush1.msra.mxu0 0.0
    %768 = vmatprep.subr.mxu0 0.0
    %769 = vmatpush1.msra.mxu0 0.0
    %770 = vmatprep.subr.mxu0 0.0
    %771 = vmatpush1.msra.mxu0 0.0
    %772 = vmatprep.subr.mxu0 0.0
    %773 = vmatpush1.msra.mxu0 0.0
    %774 = vmatprep.subr.mxu0 0.0
    %775 = vmatpush1.msra.mxu0 0.0
    %776 = vmatprep.subr.mxu0 0.0
    %777 = vmatpush1.msra.mxu0 0.0
    %778 = vmatprep.subr.mxu0 0.0
    %779 = vmatpush1.msra.mxu0 0.0
    %780 = vmatprep.subr.mxu0 0.0
    %781 = vmatpush1.msra.mxu0 0.0
    %782 = vmatprep.subr.mxu0 0.0
    %783 = vmatpush1.msra.mxu0 0.0
    %784 = vmatprep.subr.mxu0 0.0
    %785 = vmatpush1.msra.mxu0 0.0
    %786 = vmatprep.subr.mxu0 0.0
    %787 = vmatpush1.msra.mxu0 0.0
    %788 = vmatprep.subr.mxu0 0.0
    %789 = vmatpush1.msra.mxu0 0.0
    %790 = vmatprep.subr.mxu0 0.0
    %791 = vmatpush1.msra.mxu0 0.0
    %792 = vmatprep.subr.mxu0 0.0
    %793 = vmatpush1.msra.mxu0 0.0
    %794 = vmatprep.mubr.f32.mxu0 0.0
    %795 = vmatmul.mubr.f32.gmra.mrb[0].mxu0 %v728
    %v796 = vpop.f32.mrb[0].mxu0
    %v797 = vadd.f32 0.0, %v796
    %v798 = vpop.f32.mrb[0].mxu0
    %799 = vdwg.mxu0
    %800 = vrot.lane.b32.xlu0 %v146, 120
    %v801 = vpop.permute.xlu0 %800
    %802 = vrot.lane.b32.xlu0 %v225, 120
    %v803 = vpop.permute.xlu0 %802
    %v804 = vsel %vm307, %v801, 0
    %v806 = vsel %vm307, %v803, 0
    %808 = vmatprep.subr.mxu0 0.0
    %809 = vmatpush1.xpose.msra.mxu0 %v806
    %810 = vmatprep.subr.mxu0 0.0
    %811 = vmatpush1.xpose.msra.mxu0 0.0
    %812 = vmatprep.subr.mxu0 0.0
    %813 = vmatpush1.xpose.msra.mxu0 0.0
    %814 = vmatprep.subr.mxu0 0.0
    %815 = vmatpush1.xpose.msra.mxu0 0.0
    %816 = vmatprep.subr.mxu0 0.0
    %817 = vmatpush1.xpose.msra.mxu0 0.0
    %818 = vmatprep.subr.mxu0 0.0
    %819 = vmatpush1.xpose.msra.mxu0 0.0
    %820 = vmatprep.subr.mxu0 0.0
    %821 = vmatpush1.xpose.msra.mxu0 0.0
    %822 = vmatprep.subr.mxu0 0.0
    %823 = vmatpush1.xpose.msra.mxu0 0.0
    %824 = vmatprep.subr.mxu0 0.0
    %825 = vmatpush1.xpose.msra.mxu0 0.0
    %826 = vmatprep.subr.mxu0 0.0
    %827 = vmatpush1.xpose.msra.mxu0 0.0
    %828 = vmatprep.subr.mxu0 0.0
    %829 = vmatpush1.xpose.msra.mxu0 0.0
    %830 = vmatprep.subr.mxu0 0.0
    %831 = vmatpush1.xpose.msra.mxu0 0.0
    %832 = vmatprep.subr.mxu0 0.0
    %833 = vmatpush1.xpose.msra.mxu0 0.0
    %834 = vmatprep.subr.mxu0 0.0
    %835 = vmatpush1.xpose.msra.mxu0 0.0
    %836 = vmatprep.subr.mxu0 0.0
    %837 = vmatpush1.xpose.msra.mxu0 0.0
    %838 = vmatprep.subr.mxu0 0.0
    %839 = vmatpush1.xpose.msra.mxu0 0.0
    %840 = vmatprep.subr.mxu0 0.0
    %841 = vmatpush1.xpose.msra.mxu0 0.0
    %842 = vmatprep.subr.mxu0 0.0
    %843 = vmatpush1.xpose.msra.mxu0 0.0
    %844 = vmatprep.subr.mxu0 0.0
    %845 = vmatpush1.xpose.msra.mxu0 0.0
    %846 = vmatprep.subr.mxu0 0.0
    %847 = vmatpush1.xpose.msra.mxu0 0.0
    %848 = vmatprep.subr.mxu0 0.0
    %849 = vmatpush1.xpose.msra.mxu0 0.0
    %850 = vmatprep.subr.mxu0 0.0
    %851 = vmatpush1.xpose.msra.mxu0 0.0
    %852 = vmatprep.subr.mxu0 0.0
    %853 = vmatpush1.xpose.msra.mxu0 0.0
    %854 = vmatprep.subr.mxu0 0.0
    %855 = vmatpush1.xpose.msra.mxu0 0.0
    %856 = vmatprep.subr.mxu0 0.0
    %857 = vmatpush1.xpose.msra.mxu0 0.0
    %858 = vmatprep.subr.mxu0 0.0
    %859 = vmatpush1.xpose.msra.mxu0 0.0
    %860 = vmatprep.subr.mxu0 0.0
    %861 = vmatpush1.xpose.msra.mxu0 0.0
    %862 = vmatprep.subr.mxu0 0.0
    %863 = vmatpush1.xpose.msra.mxu0 0.0
    %864 = vmatprep.subr.mxu0 0.0
    %865 = vmatpush1.xpose.msra.mxu0 0.0
    %866 = vmatprep.subr.mxu0 0.0
    %867 = vmatpush1.xpose.msra.mxu0 0.0
    %868 = vmatprep.subr.mxu0 0.0
    %869 = vmatpush1.xpose.msra.mxu0 0.0
    %870 = vmatprep.subr.mxu0 0.0
    %871 = vmatpush1.xpose.msra.mxu0 0.0
    %872 = vmatprep.mubr.f32.mxu0 0.0
    %873 = vmatmul.mubr.f32.gmra.mrb[0].mxu0 %v804
    %v874 = vpop.f32.mrb[0].mxu0
    %v875 = vadd.f32 0.0, %v874
    %v876 = vpop.f32.mrb[0].mxu0
    %877 = vdwg.mxu0
    %v878 = vmul.f32 %v875, 0.35355338
    %v879 = vadd.f32 %v878, %v41
    %v880 = vsel %vm307, %v879, -inf
    %881 = vmax.xlane.f32.xlu0 %v880
    %v882 = vpop.xlane.xlu0 %881
    %v883 = vsub.f32 %v879, %v882
    %v884 = vmul.f32 %v883, 1.442695
    %v885 = vpow.pop %v884
    %v886 = vsel %vm307, %v885, 0.0
    %887 = vadd.xlane.f32.xlu0 %v886
    %v888 = vpop.xlane.xlu0 %887
    %v889 = vrcp.pop %v888
    %v890 = vmul.f32 %v885, %v889
    %892 = vrot.lane.b32.xlu0 %v304, 120
    %v893 = vpop.permute.xlu0 %892
    %v896 = vsel %vm307, %v890, 0
    %898 = vmatprep.subr.mxu0 0.0
    %899 = vmatpush1.msra.mxu0 %v893
    %900 = vmatprep.subr.mxu0 0.0
    %901 = vmatpush1.msra.mxu0 0.0
    %902 = vmatprep.subr.mxu0 0.0
    %903 = vmatpush1.msra.mxu0 0.0
    %904 = vmatprep.subr.mxu0 0.0
    %905 = vmatpush1.msra.mxu0 0.0
    %906 = vmatprep.subr.mxu0 0.0
    %907 = vmatpush1.msra.mxu0 0.0
    %908 = vmatprep.subr.mxu0 0.0
    %909 = vmatpush1.msra.mxu0 0.0
    %910 = vmatprep.subr.mxu0 0.0
    %911 = vmatpush1.msra.mxu0 0.0
    %912 = vmatprep.subr.mxu0 0.0
    %913 = vmatpush1.msra.mxu0 0.0
    %914 = vmatprep.subr.mxu0 0.0
    %915 = vmatpush1.msra.mxu0 0.0
    %916 = vmatprep.subr.mxu0 0.0
    %917 = vmatpush1.msra.mxu0 0.0
    %918 = vmatprep.subr.mxu0 0.0
    %919 = vmatpush1.msra.mxu0 0.0
    %920 = vmatprep.subr.mxu0 0.0
    %921 = vmatpush1.msra.mxu0 0.0
    %922 = vmatprep.subr.mxu0 0.0
    %923 = vmatpush1.msra.mxu0 0.0
    %924 = vmatprep.subr.mxu0 0.0
    %925 = vmatpush1.msra.mxu0 0.0
    %926 = vmatprep.subr.mxu0 0.0
    %927 = vmatpush1.msra.mxu0 0.0
    %928 = vmatprep.subr.mxu0 0.0
    %929 = vmatpush1.msra.mxu0 0.0
    %930 = vmatprep.subr.mxu0 0.0
    %931 = vmatpush1.msra.mxu0 0.0
    %932 = vmatprep.subr.mxu0 0.0
    %933 = vmatpush1.msra.mxu0 0.0
    %934 = vmatprep.subr.mxu0 0.0
    %935 = vmatpush1.msra.mxu0 0.0
    %936 = vmatprep.subr.mxu0 0.0
    %937 = vmatpush1.msra.mxu0 0.0
    %938 = vmatprep.subr.mxu0 0.0
    %939 = vmatpush1.msra.mxu0 0.0
    %940 = vmatprep.subr.mxu0 0.0
    %941 = vmatpush1.msra.mxu0 0.0
    %942 = vmatprep.subr.mxu0 0.0
    %943 = vmatpush1.msra.mxu0 0.0
    %944 = vmatprep.subr.mxu0 0.0
    %945 = vmatpush1.msra.mxu0 0.0
    %946 = vmatprep.subr.mxu0 0.0
    %947 = vmatpush1.msra.mxu0 0.0
    %948 = vmatprep.subr.mxu0 0.0
    %949 = vmatpush1.msra.mxu0 0.0
    %950 = vmatprep.subr.mxu0 0.0
    %951 = vmatpush1.msra.mxu0 0.0
    %952 = vmatprep.subr.mxu0 0.0
    %953 = vmatpush1.msra.mxu0 0.0
    %954 = vmatprep.subr.mxu0 0.0
    %955 = vmatpush1.msra.mxu0 0.0
    %956 = vmatprep.subr.mxu0 0.0
    %957 = vmatpush1.msra.mxu0 0.0
    %958 = vmatprep.subr.mxu0 0.0
    %959 = vmatpush1.msra.mxu0 0.0
    %960 = vmatprep.subr.mxu0 0.0
    %961 = vmatpush1.msra.mxu0 0.0
    %962 = vmatprep.mubr.f32.mxu0 0.0
    %963 = vmatmul.mubr.f32.gmra.mrb[0].mxu0 %v896
    %v964 = vpop.f32.mrb[0].mxu0
    %v965 = vadd.f32 0.0, %v964
    %v966 = vpop.f32.mrb[0].mxu0
    %967 = vdwg.mxu0
    %v969 = vsel %vm307, %v797, 0
    %v972 = vsel %vm307, %v965, 0
    %974 = vmatprep.subr.mxu0 0.0
    %975 = vmatpush1.msra.mxu0 %v56
    %976 = vmatprep.subr.mxu0 0.0
    %977 = vmatpush1.msra.mxu0 0.0
    %978 = vmatprep.subr.mxu0 0.0
    %979 = vmatpush1.msra.mxu0 0.0
    %980 = vmatprep.subr.mxu0 0.0
    %981 = vmatpush1.msra.mxu0 0.0
    %982 = vmatprep.subr.mxu0 0.0
    %983 = vmatpush1.msra.mxu0 0.0
    %984 = vmatprep.subr.mxu0 0.0
    %985 = vmatpush1.msra.mxu0 0.0
    %986 = vmatprep.subr.mxu0 0.0
    %987 = vmatpush1.msra.mxu0 0.0
    %988 = vmatprep.subr.mxu0 0.0
    %989 = vmatpush1.msra.mxu0 0.0
    %990 = vmatprep.subr.mxu0 0.0
    %991 = vmatpush1.msra.mxu0 0.0
    %992 = vmatprep.subr.mxu0 0.0
    %993 = vmatpush1.msra.mxu0 0.0
    %994 = vmatprep.subr.mxu0 0.0
    %995 = vmatpush1.msra.mxu0 0.0
    %996 = vmatprep.subr.mxu0 0.0
    %997 = vmatpush1.msra.mxu0 0.0
    %998 = vmatprep.subr.mxu0 0.0
    %999 = vmatpush1.msra.mxu0 0.0
    %1000 = vmatprep.subr.mxu0 0.0
    %1001 = vmatpush1.msra.mxu0 0.0
    %1002 = vmatprep.subr.mxu0 0.0
    %1003 = vmatpush1.msra.mxu0 0.0
    %1004 = vmatprep.subr.mxu0 0.0
    %1005 = vmatpush1.msra.mxu0 0.0
    %1006 = vmatprep.subr.mxu0 0.0
    %1007 = vmatpush1.msra.mxu0 0.0
    %1008 = vmatprep.subr.mxu0 0.0
    %1009 = vmatpush1.msra.mxu0 0.0
    %1010 = vmatprep.subr.mxu0 0.0
    %1011 = vmatpush1.msra.mxu0 0.0
    %1012 = vmatprep.subr.mxu0 0.0
    %1013 = vmatpush1.msra.mxu0 0.0
    %1014 = vmatprep.subr.mxu0 0.0
    %1015 = vmatpush1.msra.mxu0 0.0
    %1016 = vmatprep.subr.mxu0 0.0
    %1017 = vmatpush1.msra.mxu0 0.0
    %1018 = vmatprep.subr.mxu0 0.0
    %1019 = vmatpush1.msra.mxu0 0.0
    %1020 = vmatprep.subr.mxu0 0.0
    %1021 = vmatpush1.msra.mxu0 0.0
    %1022 = vmatprep.subr.mxu0 0.0
    %1023 = vmatpush1.msra.mxu0 0.0
    %1024 = vmatprep.subr.mxu0 0.0
    %1025 = vmatpush1.msra.mxu0 0.0
    %1026 = vmatprep.subr.mxu0 0.0
    %1027 = vmatpush1.msra.mxu0 0.0
    %1028 = vmatprep.subr.mxu0 0.0
    %1029 = vmatpush1.msra.mxu0 0.0
    %1030 = vmatprep.subr.mxu0 0.0
    %1031 = vmatpush1.msra.mxu0 0.0
    %1032 = vmatprep.subr.mxu0 0.0
    %1033 = vmatpush1.msra.mxu0 0.0
    %1034 = vmatprep.subr.mxu0 0.0
    %1035 = vmatpush1.msra.mxu0 0.0
    %1036 = vmatprep.subr.mxu0 0.0
    %1037 = vmatpush1.msra.mxu0 0.0
    %1038 = vmatprep.mubr.f32.mxu0 0.0
    %1039 = vmatmul.mubr.f32.gmra.mrb[0].mxu0 %v969
    %v1040 = vpop.f32.mrb[0].mxu0
    %v1041 = vadd.f32 0.0, %v1040
    %v1042 = vpop.f32.mrb[0].mxu0
    %1043 = vmatprep.mubr.f32.mxu0 0.0
    %1044 = vmatmul.mubr.f32.gmra.mrb[0].mxu0 %v972
    %v1045 = vpop.f32.mrb[0].mxu0
    %v1046 = vadd.f32 0.0, %v1045
    %v1047 = vpop.f32.mrb[0].mxu0
    %1048 = vdwg.mxu0
    %v1050 = vsel %vm307, %v467, 0
    %v1053 = vsel %vm307, %v629, 0
    %1055 = vmatprep.subr.mxu0 0.0
    %1056 = vmatpush1.msra.mxu0 %v55
    %1057 = vmatprep.subr.mxu0 0.0
    %1058 = vmatpush1.msra.mxu0 0.0
    %1059 = vmatprep.subr.mxu0 0.0
    %1060 = vmatpush1.msra.mxu0 0.0
    %1061 = vmatprep.subr.mxu0 0.0
    %1062 = vmatpush1.msra.mxu0 0.0
    %1063 = vmatprep.subr.mxu0 0.0
    %1064 = vmatpush1.msra.mxu0 0.0
    %1065 = vmatprep.subr.mxu0 0.0
    %1066 = vmatpush1.msra.mxu0 0.0
    %1067 = vmatprep.subr.mxu0 0.0
    %1068 = vmatpush1.msra.mxu0 0.0
    %1069 = vmatprep.subr.mxu0 0.0
    %1070 = vmatpush1.msra.mxu0 0.0
    %1071 = vmatprep.subr.mxu0 0.0
    %1072 = vmatpush1.msra.mxu0 0.0
    %1073 = vmatprep.subr.mxu0 0.0
    %1074 = vmatpush1.msra.mxu0 0.0
    %1075 = vmatprep.subr.mxu0 0.0
    %1076 = vmatpush1.msra.mxu0 0.0
    %1077 = vmatprep.subr.mxu0 0.0
    %1078 = vmatpush1.msra.mxu0 0.0
    %1079 = vmatprep.subr.mxu0 0.0
    %1080 = vmatpush1.msra.mxu0 0.0
    %1081 = vmatprep.subr.mxu0 0.0
    %1082 = vmatpush1.msra.mxu0 0.0
    %1083 = vmatprep.subr.mxu0 0.0
    %1084 = vmatpush1.msra.mxu0 0.0
    %1085 = vmatprep.subr.mxu0 0.0
    %1086 = vmatpush1.msra.mxu0 0.0
    %1087 = vmatprep.subr.mxu0 0.0
    %1088 = vmatpush1.msra.mxu0 0.0
    %1089 = vmatprep.subr.mxu0 0.0
    %1090 = vmatpush1.msra.mxu0 0.0
    %1091 = vmatprep.subr.mxu0 0.0
    %1092 = vmatpush1.msra.mxu0 0.0
    %1093 = vmatprep.subr.mxu0 0.0
    %1094 = vmatpush1.msra.mxu0 0.0
    %1095 = vmatprep.subr.mxu0 0.0
    %1096 = vmatpush1.msra.mxu0 0.0
    %1097 = vmatprep.subr.mxu0 0.0
    %1098 = vmatpush1.msra.mxu0 0.0
    %1099 = vmatprep.subr.mxu0 0.0
    %1100 = vmatpush1.msra.mxu0 0.0
    %1101 = vmatprep.subr.mxu0 0.0
    %1102 = vmatpush1.msra.mxu0 0.0
    %1103 = vmatprep.subr.mxu0 0.0
    %1104 = vmatpush1.msra.mxu0 0.0
    %1105 = vmatprep.subr.mxu0 0.0
    %1106 = vmatpush1.msra.mxu0 0.0
    %1107 = vmatprep.subr.mxu0 0.0
    %1108 = vmatpush1.msra.mxu0 0.0
    %1109 = vmatprep.subr.mxu0 0.0
    %1110 = vmatpush1.msra.mxu0 0.0
    %1111 = vmatprep.subr.mxu0 0.0
    %1112 = vmatpush1.msra.mxu0 0.0
    %1113 = vmatprep.subr.mxu0 0.0
    %1114 = vmatpush1.msra.mxu0 0.0
    %1115 = vmatprep.subr.mxu0 0.0
    %1116 = vmatpush1.msra.mxu0 0.0
    %1117 = vmatprep.subr.mxu0 0.0
    %1118 = vmatpush1.msra.mxu0 0.0
    %1119 = vmatprep.mubr.f32.mxu0 0.0
    %1120 = vmatmul.mubr.f32.gmra.mrb[0].mxu0 %v1050
    %v1121 = vpop.f32.mrb[0].mxu0
    %v1122 = vadd.f32 %v1041, %v1121
    %v1123 = vpop.f32.mrb[0].mxu0
    %1124 = vmatprep.mubr.f32.mxu0 0.0
    %1125 = vmatmul.mubr.f32.gmra.mrb[0].mxu0 %v1053
    %v1126 = vpop.f32.mrb[0].mxu0
    %v1127 = vadd.f32 %v1046, %v1126
    %v1128 = vpop.f32.mrb[0].mxu0
    %1129 = vdwg.mxu0
    %1130 = vrot.lane.b32.xlu0 %v141, 112
    %v1131 = vpop.permute.xlu0 %1130
    %1132 = vrot.lane.b32.xlu0 %v220, 112
    %v1133 = vpop.permute.xlu0 %1132
    %v1134 = vsel %vm307, %v1131, 0
    %v1136 = vsel %vm307, %v1133, 0
    %1138 = vmatprep.subr.mxu0 0.0
    %1139 = vmatpush1.xpose.msra.mxu0 %v1136
    %1140 = vmatprep.subr.mxu0 0.0
    %1141 = vmatpush1.xpose.msra.mxu0 0.0
    %1142 = vmatprep.subr.mxu0 0.0
    %1143 = vmatpush1.xpose.msra.mxu0 0.0
    %1144 = vmatprep.subr.mxu0 0.0
    %1145 = vmatpush1.xpose.msra.mxu0 0.0
    %1146 = vmatprep.subr.mxu0 0.0
    %1147 = vmatpush1.xpose.msra.mxu0 0.0
    %1148 = vmatprep.subr.mxu0 0.0
    %1149 = vmatpush1.xpose.msra.mxu0 0.0
    %1150 = vmatprep.subr.mxu0 0.0
    %1151 = vmatpush1.xpose.msra.mxu0 0.0
    %1152 = vmatprep.subr.mxu0 0.0
    %1153 = vmatpush1.xpose.msra.mxu0 0.0
    %1154 = vmatprep.subr.mxu0 0.0
    %1155 = vmatpush1.xpose.msra.mxu0 0.0
    %1156 = vmatprep.subr.mxu0 0.0
    %1157 = vmatpush1.xpose.msra.mxu0 0.0
    %1158 = vmatprep.subr.mxu0 0.0
    %1159 = vmatpush1.xpose.msra.mxu0 0.0
    %1160 = vmatprep.subr.mxu0 0.0
    %1161 = vmatpush1.xpose.msra.mxu0 0.0
    %1162 = vmatprep.subr.mxu0 0.0
    %1163 = vmatpush1.xpose.msra.mxu0 0.0
    %1164 = vmatprep.subr.mxu0 0.0
    %1165 = vmatpush1.xpose.msra.mxu0 0.0
    %1166 = vmatprep.subr.mxu0 0.0
    %1167 = vmatpush1.xpose.msra.mxu0 0.0
    %1168 = vmatprep.subr.mxu0 0.0
    %1169 = vmatpush1.xpose.msra.mxu0 0.0
    %1170 = vmatprep.subr.mxu0 0.0
    %1171 = vmatpush1.xpose.msra.mxu0 0.0
    %1172 = vmatprep.subr.mxu0 0.0
    %1173 = vmatpush1.xpose.msra.mxu0 0.0
    %1174 = vmatprep.subr.mxu0 0.0
    %1175 = vmatpush1.xpose.msra.mxu0 0.0
    %1176 = vmatprep.subr.mxu0 0.0
    %1177 = vmatpush1.xpose.msra.mxu0 0.0
    %1178 = vmatprep.subr.mxu0 0.0
    %1179 = vmatpush1.xpose.msra.mxu0 0.0
    %1180 = vmatprep.subr.mxu0 0.0
    %1181 = vmatpush1.xpose.msra.mxu0 0.0
    %1182 = vmatprep.subr.mxu0 0.0
    %1183 = vmatpush1.xpose.msra.mxu0 0.0
    %1184 = vmatprep.subr.mxu0 0.0
    %1185 = vmatpush1.xpose.msra.mxu0 0.0
    %1186 = vmatprep.subr.mxu0 0.0
    %1187 = vmatpush1.xpose.msra.mxu0 0.0
    %1188 = vmatprep.subr.mxu0 0.0
    %1189 = vmatpush1.xpose.msra.mxu0 0.0
    %1190 = vmatprep.subr.mxu0 0.0
    %1191 = vmatpush1.xpose.msra.mxu0 0.0
    %1192 = vmatprep.subr.mxu0 0.0
    %1193 = vmatpush1.xpose.msra.mxu0 0.0
    %1194 = vmatprep.subr.mxu0 0.0
    %1195 = vmatpush1.xpose.msra.mxu0 0.0
    %1196 = vmatprep.subr.mxu0 0.0
    %1197 = vmatpush1.xpose.msra.mxu0 0.0
    %1198 = vmatprep.subr.mxu0 0.0
    %1199 = vmatpush1.xpose.msra.mxu0 0.0
    %1200 = vmatprep.subr.mxu0 0.0
    %1201 = vmatpush1.xpose.msra.mxu0 0.0
    %1202 = vmatprep.mubr.f32.mxu0 0.0
    %1203 = vmatmul.mubr.f32.gmra.mrb[0].mxu0 %v1134
    %v1204 = vpop.f32.mrb[0].mxu0
    %v1205 = vadd.f32 0.0, %v1204
    %v1206 = vpop.f32.mrb[0].mxu0
    %1207 = vdwg.mxu0
    %v1208 = vmul.f32 %v1205, 0.35355338
    %v1209 = vadd.f32 %v1208, %v40
    %v1210 = vsel %vm307, %v1209, -inf
    %1211 = vmax.xlane.f32.xlu0 %v1210
    %v1212 = vpop.xlane.xlu0 %1211
    %v1213 = vsub.f32 %v1209, %v1212
    %v1214 = vmul.f32 %v1213, 1.442695
    %v1215 = vpow.pop %v1214
    %v1216 = vsel %vm307, %v1215, 0.0
    %1217 = vadd.xlane.f32.xlu0 %v1216
    %v1218 = vpop.xlane.xlu0 %1217
    %v1219 = vrcp.pop %v1218
    %v1220 = vmul.f32 %v1215, %v1219
    %1221 = vrot.lane.b32.xlu0 %v299, 112
    %v1222 = vpop.permute.xlu0 %1221
    %v1225 = vsel %vm307, %v1220, 0
    %1227 = vmatprep.subr.mxu0 0.0
    %1228 = vmatpush1.msra.mxu0 %v1222
    %1229 = vmatprep.subr.mxu0 0.0
    %1230 = vmatpush1.msra.mxu0 0.0
    %1231 = vmatprep.subr.mxu0 0.0
    %1232 = vmatpush1.msra.mxu0 0.0
    %1233 = vmatprep.subr.mxu0 0.0
    %1234 = vmatpush1.msra.mxu0 0.0
    %1235 = vmatprep.subr.mxu0 0.0
    %1236 = vmatpush1.msra.mxu0 0.0
    %1237 = vmatprep.subr.mxu0 0.0
    %1238 = vmatpush1.msra.mxu0 0.0
    %1239 = vmatprep.subr.mxu0 0.0
    %1240 = vmatpush1.msra.mxu0 0.0
    %1241 = vmatprep.subr.mxu0 0.0
    %1242 = vmatpush1.msra.mxu0 0.0
    %1243 = vmatprep.subr.mxu0 0.0
    %1244 = vmatpush1.msra.mxu0 0.0
    %1245 = vmatprep.subr.mxu0 0.0
    %1246 = vmatpush1.msra.mxu0 0.0
    %1247 = vmatprep.subr.mxu0 0.0
    %1248 = vmatpush1.msra.mxu0 0.0
    %1249 = vmatprep.subr.mxu0 0.0
    %1250 = vmatpush1.msra.mxu0 0.0
    %1251 = vmatprep.subr.mxu0 0.0
    %1252 = vmatpush1.msra.mxu0 0.0
    %1253 = vmatprep.subr.mxu0 0.0
    %1254 = vmatpush1.msra.mxu0 0.0
    %1255 = vmatprep.subr.mxu0 0.0
    %1256 = vmatpush1.msra.mxu0 0.0
    %1257 = vmatprep.subr.mxu0 0.0
    %1258 = vmatpush1.msra.mxu0 0.0
    %1259 = vmatprep.subr.mxu0 0.0
    %1260 = vmatpush1.msra.mxu0 0.0
    %1261 = vmatprep.subr.mxu0 0.0
    %1262 = vmatpush1.msra.mxu0 0.0
    %1263 = vmatprep.subr.mxu0 0.0
    %1264 = vmatpush1.msra.mxu0 0.0
    %1265 = vmatprep.subr.mxu0 0.0
    %1266 = vmatpush1.msra.mxu0 0.0
    %1267 = vmatprep.subr.mxu0 0.0
    %1268 = vmatpush1.msra.mxu0 0.0
    %1269 = vmatprep.subr.mxu0 0.0
    %1270 = vmatpush1.msra.mxu0 0.0
    %1271 = vmatprep.subr.mxu0 0.0
    %1272 = vmatpush1.msra.mxu0 0.0
    %1273 = vmatprep.subr.mxu0 0.0
    %1274 = vmatpush1.msra.mxu0 0.0
    %1275 = vmatprep.subr.mxu0 0.0
    %1276 = vmatpush1.msra.mxu0 0.0
    %1277 = vmatprep.subr.mxu0 0.0
    %1278 = vmatpush1.msra.mxu0 0.0
    %1279 = vmatprep.subr.mxu0 0.0
    %1280 = vmatpush1.msra.mxu0 0.0
    %1281 = vmatprep.subr.mxu0 0.0
    %1282 = vmatpush1.msra.mxu0 0.0
    %1283 = vmatprep.subr.mxu0 0.0
    %1284 = vmatpush1.msra.mxu0 0.0
    %1285 = vmatprep.subr.mxu0 0.0
    %1286 = vmatpush1.msra.mxu0 0.0
    %1287 = vmatprep.subr.mxu0 0.0
    %1288 = vmatpush1.msra.mxu0 0.0
    %1289 = vmatprep.subr.mxu0 0.0
    %1290 = vmatpush1.msra.mxu0 0.0
    %1291 = vmatprep.mubr.f32.mxu0 0.0
    %1292 = vmatmul.mubr.f32.gmra.mrb[0].mxu0 %v1225
    %v1293 = vpop.f32.mrb[0].mxu0
    %v1294 = vadd.f32 0.0, %v1293
    %v1295 = vpop.f32.mrb[0].mxu0
    %1296 = vdwg.mxu0
    %1297 = vrot.lane.b32.xlu0 %v146, 112
    %v1298 = vpop.permute.xlu0 %1297
    %1299 = vrot.lane.b32.xlu0 %v225, 112
    %v1300 = vpop.permute.xlu0 %1299
    %v1301 = vsel %vm307, %v1298, 0
    %v1303 = vsel %vm307, %v1300, 0
    %1305 = vmatprep.subr.mxu0 0.0
    %1306 = vmatpush1.xpose.msra.mxu0 %v1303
    %1307 = vmatprep.subr.mxu0 0.0
    %1308 = vmatpush1.xpose.msra.mxu0 0.0
    %1309 = vmatprep.subr.mxu0 0.0
    %1310 = vmatpush1.xpose.msra.mxu0 0.0
    %1311 = vmatprep.subr.mxu0 0.0
    %1312 = vmatpush1.xpose.msra.mxu0 0.0
    %1313 = vmatprep.subr.mxu0 0.0
    %1314 = vmatpush1.xpose.msra.mxu0 0.0
    %1315 = vmatprep.subr.mxu0 0.0
    %1316 = vmatpush1.xpose.msra.mxu0 0.0
    %1317 = vmatprep.subr.mxu0 0.0
    %1318 = vmatpush1.xpose.msra.mxu0 0.0
    %1319 = vmatprep.subr.mxu0 0.0
    %1320 = vmatpush1.xpose.msra.mxu0 0.0
    %1321 = vmatprep.subr.mxu0 0.0
    %1322 = vmatpush1.xpose.msra.mxu0 0.0
    %1323 = vmatprep.subr.mxu0 0.0
    %1324 = vmatpush1.xpose.msra.mxu0 0.0
    %1325 = vmatprep.subr.mxu0 0.0
    %1326 = vmatpush1.xpose.msra.mxu0 0.0
    %1327 = vmatprep.subr.mxu0 0.0
    %1328 = vmatpush1.xpose.msra.mxu0 0.0
    %1329 = vmatprep.subr.mxu0 0.0
    %1330 = vmatpush1.xpose.msra.mxu0 0.0
    %1331 = vmatprep.subr.mxu0 0.0
    %1332 = vmatpush1.xpose.msra.mxu0 0.0
    %1333 = vmatprep.subr.mxu0 0.0
    %1334 = vmatpush1.xpose.msra.mxu0 0.0
    %1335 = vmatprep.subr.mxu0 0.0
    %1336 = vmatpush1.xpose.msra.mxu0 0.0
    %1337 = vmatprep.subr.mxu0 0.0
    %1338 = vmatpush1.xpose.msra.mxu0 0.0
    %1339 = vmatprep.subr.mxu0 0.0
    %1340 = vmatpush1.xpose.msra.mxu0 0.0
    %1341 = vmatprep.subr.mxu0 0.0
    %1342 = vmatpush1.xpose.msra.mxu0 0.0
    %1343 = vmatprep.subr.mxu0 0.0
    %1344 = vmatpush1.xpose.msra.mxu0 0.0
    %1345 = vmatprep.subr.mxu0 0.0
    %1346 = vmatpush1.xpose.msra.mxu0 0.0
    %1347 = vmatprep.subr.mxu0 0.0
    %1348 = vmatpush1.xpose.msra.mxu0 0.0
    %1349 = vmatprep.subr.mxu0 0.0
    %1350 = vmatpush1.xpose.msra.mxu0 0.0
    %1351 = vmatprep.subr.mxu0 0.0
    %1352 = vmatpush1.xpose.msra.mxu0 0.0
    %1353 = vmatprep.subr.mxu0 0.0
    %1354 = vmatpush1.xpose.msra.mxu0 0.0
    %1355 = vmatprep.subr.mxu0 0.0
    %1356 = vmatpush1.xpose.msra.mxu0 0.0
    %1357 = vmatprep.subr.mxu0 0.0
    %1358 = vmatpush1.xpose.msra.mxu0 0.0
    %1359 = vmatprep.subr.mxu0 0.0
    %1360 = vmatpush1.xpose.msra.mxu0 0.0
    %1361 = vmatprep.subr.mxu0 0.0
    %1362 = vmatpush1.xpose.msra.mxu0 0.0
    %1363 = vmatprep.subr.mxu0 0.0
    %1364 = vmatpush1.xpose.msra.mxu0 0.0
    %1365 = vmatprep.subr.mxu0 0.0
    %1366 = vmatpush1.xpose.msra.mxu0 0.0
    %1367 = vmatprep.subr.mxu0 0.0
    %1368 = vmatpush1.xpose.msra.mxu0 0.0
    %1369 = vmatprep.mubr.f32.mxu0 0.0
    %1370 = vmatmul.mubr.f32.gmra.mrb[0].mxu0 %v1301
    %v1371 = vpop.f32.mrb[0].mxu0
    %v1372 = vadd.f32 0.0, %v1371
    %v1373 = vpop.f32.mrb[0].mxu0
    %1374 = vdwg.mxu0
    %v1375 = vmul.f32 %v1372, 0.35355338
    %v1376 = vadd.f32 %v1375, %v41
    %v1377 = vsel %vm307, %v1376, -inf
    %1378 = vmax.xlane.f32.xlu0 %v1377
    %v1379 = vpop.xlane.xlu0 %1378
    %v1380 = vsub.f32 %v1376, %v1379
    %v1381 = vmul.f32 %v1380, 1.442695
    %v1382 = vpow.pop %v1381
    %v1383 = vsel %vm307, %v1382, 0.0
    %1384 = vadd.xlane.f32.xlu0 %v1383
    %v1385 = vpop.xlane.xlu0 %1384
    %v1386 = vrcp.pop %v1385
    %v1387 = vmul.f32 %v1382, %v1386
    %1388 = vrot.lane.b32.xlu0 %v304, 112
    %v1389 = vpop.permute.xlu0 %1388
    %v1392 = vsel %vm307, %v1387, 0
    %1394 = vmatprep.subr.mxu0 0.0
    %1395 = vmatpush1.msra.mxu0 %v1389
    %1396 = vmatprep.subr.mxu0 0.0
    %1397 = vmatpush1.msra.mxu0 0.0
    %1398 = vmatprep.subr.mxu0 0.0
    %1399 = vmatpush1.msra.mxu0 0.0
    %1400 = vmatprep.subr.mxu0 0.0
    %1401 = vmatpush1.msra.mxu0 0.0
    %1402 = vmatprep.subr.mxu0 0.0
    %1403 = vmatpush1.msra.mxu0 0.0
    %1404 = vmatprep.subr.mxu0 0.0
    %1405 = vmatpush1.msra.mxu0 0.0
    %1406 = vmatprep.subr.mxu0 0.0
    %1407 = vmatpush1.msra.mxu0 0.0
    %1408 = vmatprep.subr.mxu0 0.0
    %1409 = vmatpush1.msra.mxu0 0.0
    %1410 = vmatprep.subr.mxu0 0.0
    %1411 = vmatpush1.msra.mxu0 0.0
    %1412 = vmatprep.subr.mxu0 0.0
    %1413 = vmatpush1.msra.mxu0 0.0
    %1414 = vmatprep.subr.mxu0 0.0
    %1415 = vmatpush1.msra.mxu0 0.0
    %1416 = vmatprep.subr.mxu0 0.0
    %1417 = vmatpush1.msra.mxu0 0.0
    %1418 = vmatprep.subr.mxu0 0.0
    %1419 = vmatpush1.msra.mxu0 0.0
    %1420 = vmatprep.subr.mxu0 0.0
    %1421 = vmatpush1.msra.mxu0 0.0
    %1422 = vmatprep.subr.mxu0 0.0
    %1423 = vmatpush1.msra.mxu0 0.0
    %1424 = vmatprep.subr.mxu0 0.0
    %1425 = vmatpush1.msra.mxu0 0.0
    %1426 = vmatprep.subr.mxu0 0.0
    %1427 = vmatpush1.msra.mxu0 0.0
    %1428 = vmatprep.subr.mxu0 0.0
    %1429 = vmatpush1.msra.mxu0 0.0
    %1430 = vmatprep.subr.mxu0 0.0
    %1431 = vmatpush1.msra.mxu0 0.0
    %1432 = vmatprep.subr.mxu0 0.0
    %1433 = vmatpush1.msra.mxu0 0.0
    %1434 = vmatprep.subr.mxu0 0.0
    %1435 = vmatpush1.msra.mxu0 0.0
    %1436 = vmatprep.subr.mxu0 0.0
    %1437 = vmatpush1.msra.mxu0 0.0
    %1438 = vmatprep.subr.mxu0 0.0
    %1439 = vmatpush1.msra.mxu0 0.0
    %1440 = vmatprep.subr.mxu0 0.0
    %1441 = vmatpush1.msra.mxu0 0.0
    %1442 = vmatprep.subr.mxu0 0.0
    %1443 = vmatpush1.msra.mxu0 0.0
    %1444 = vmatprep.subr.mxu0 0.0
    %1445 = vmatpush1.msra.mxu0 0.0
    %1446 = vmatprep.subr.mxu0 0.0
    %1447 = vmatpush1.msra.mxu0 0.0
    %1448 = vmatprep.subr.mxu0 0.0
    %1449 = vmatpush1.msra.mxu0 0.0
    %1450 = vmatprep.subr.mxu0 0.0
    %1451 = vmatpush1.msra.mxu0 0.0
    %1452 = vmatprep.subr.mxu0 0.0
    %1453 = vmatpush1.msra.mxu0 0.0
    %1454 = vmatprep.subr.mxu0 0.0
    %1455 = vmatpush1.msra.mxu0 0.0
    %1456 = vmatprep.subr.mxu0 0.0
    %1457 = vmatpush1.msra.mxu0 0.0
    %1458 = vmatprep.mubr.f32.mxu0 0.0
    %1459 = vmatmul.mubr.f32.gmra.mrb[0].mxu0 %v1392
    %v1460 = vpop.f32.mrb[0].mxu0
    %v1461 = vadd.f32 0.0, %v1460
    %v1462 = vpop.f32.mrb[0].mxu0
    %1463 = vdwg.mxu0
    %v1465 = vsel %vm307, %v1294, 0
    %v1468 = vsel %vm307, %v1461, 0
    %1470 = vmatprep.subr.mxu0 0.0
    %1471 = vmatpush1.msra.mxu0 %v57
    %1472 = vmatprep.subr.mxu0 0.0
    %1473 = vmatpush1.msra.mxu0 0.0
    %1474 = vmatprep.subr.mxu0 0.0
    %1475 = vmatpush1.msra.mxu0 0.0
    %1476 = vmatprep.subr.mxu0 0.0
    %1477 = vmatpush1.msra.mxu0 0.0
    %1478 = vmatprep.subr.mxu0 0.0
    %1479 = vmatpush1.msra.mxu0 0.0
    %1480 = vmatprep.subr.mxu0 0.0
    %1481 = vmatpush1.msra.mxu0 0.0
    %1482 = vmatprep.subr.mxu0 0.0
    %1483 = vmatpush1.msra.mxu0 0.0
    %1484 = vmatprep.subr.mxu0 0.0
    %1485 = vmatpush1.msra.mxu0 0.0
    %1486 = vmatprep.subr.mxu0 0.0
    %1487 = vmatpush1.msra.mxu0 0.0
    %1488 = vmatprep.subr.mxu0 0.0
    %1489 = vmatpush1.msra.mxu0 0.0
    %1490 = vmatprep.subr.mxu0 0.0
    %1491 = vmatpush1.msra.mxu0 0.0
    %1492 = vmatprep.subr.mxu0 0.0
    %1493 = vmatpush1.msra.mxu0 0.0
    %1494 = vmatprep.subr.mxu0 0.0
    %1495 = vmatpush1.msra.mxu0 0.0
    %1496 = vmatprep.subr.mxu0 0.0
    %1497 = vmatpush1.msra.mxu0 0.0
    %1498 = vmatprep.subr.mxu0 0.0
    %1499 = vmatpush1.msra.mxu0 0.0
    %1500 = vmatprep.subr.mxu0 0.0
    %1501 = vmatpush1.msra.mxu0 0.0
    %1502 = vmatprep.subr.mxu0 0.0
    %1503 = vmatpush1.msra.mxu0 0.0
    %1504 = vmatprep.subr.mxu0 0.0
    %1505 = vmatpush1.msra.mxu0 0.0
    %1506 = vmatprep.subr.mxu0 0.0
    %1507 = vmatpush1.msra.mxu0 0.0
    %1508 = vmatprep.subr.mxu0 0.0
    %1509 = vmatpush1.msra.mxu0 0.0
    %1510 = vmatprep.subr.mxu0 0.0
    %1511 = vmatpush1.msra.mxu0 0.0
    %1512 = vmatprep.subr.mxu0 0.0
    %1513 = vmatpush1.msra.mxu0 0.0
    %1514 = vmatprep.subr.mxu0 0.0
    %1515 = vmatpush1.msra.mxu0 0.0
    %1516 = vmatprep.subr.mxu0 0.0
    %1517 = vmatpush1.msra.mxu0 0.0
    %1518 = vmatprep.subr.mxu0 0.0
    %1519 = vmatpush1.msra.mxu0 0.0
    %1520 = vmatprep.subr.mxu0 0.0
    %1521 = vmatpush1.msra.mxu0 0.0
    %1522 = vmatprep.subr.mxu0 0.0
    %1523 = vmatpush1.msra.mxu0 0.0
    %1524 = vmatprep.subr.mxu0 0.0
    %1525 = vmatpush1.msra.mxu0 0.0
    %1526 = vmatprep.subr.mxu0 0.0
    %1527 = vmatpush1.msra.mxu0 0.0
    %1528 = vmatprep.subr.mxu0 0.0
    %1529 = vmatpush1.msra.mxu0 0.0
    %1530 = vmatprep.subr.mxu0 0.0
    %1531 = vmatpush1.msra.mxu0 0.0
    %1532 = vmatprep.subr.mxu0 0.0
    %1533 = vmatpush1.msra.mxu0 0.0
    %1534 = vmatprep.mubr.f32.mxu0 0.0
    %1535 = vmatmul.mubr.f32.gmra.mrb[0].mxu0 %v1465
    %v1536 = vpop.f32.mrb[0].mxu0
    %v1537 = vadd.f32 0.0, %v1536
    %v1538 = vpop.f32.mrb[0].mxu0
    %1539 = vmatprep.mubr.f32.mxu0 0.0
    %1540 = vmatmul.mubr.f32.gmra.mrb[0].mxu0 %v1468
    %v1541 = vpop.f32.mrb[0].mxu0
    %v1542 = vadd.f32 0.0, %v1541
    %v1543 = vpop.f32.mrb[0].mxu0
    %1544 = vdwg.mxu0
    %v1545 = vadd.f32 %v1122, %v1537
    %v1546 = vadd.f32 %v1127, %v1542
    %1547 = vrot.lane.b32.xlu0 %v141, 104
    %v1548 = vpop.permute.xlu0 %1547
    %1549 = vrot.lane.b32.xlu0 %v220, 104
    %v1550 = vpop.permute.xlu0 %1549
    %v1551 = vsel %vm307, %v1548, 0
    %v1553 = vsel %vm307, %v1550, 0
    %1555 = vmatprep.subr.mxu0 0.0
    %1556 = vmatpush1.xpose.msra.mxu0 %v1553
    %1557 = vmatprep.subr.mxu0 0.0
    %1558 = vmatpush1.xpose.msra.mxu0 0.0
    %1559 = vmatprep.subr.mxu0 0.0
    %1560 = vmatpush1.xpose.msra.mxu0 0.0
    %1561 = vmatprep.subr.mxu0 0.0
    %1562 = vmatpush1.xpose.msra.mxu0 0.0
    %1563 = vmatprep.subr.mxu0 0.0
    %1564 = vmatpush1.xpose.msra.mxu0 0.0
    %1565 = vmatprep.subr.mxu0 0.0
    %1566 = vmatpush1.xpose.msra.mxu0 0.0
    %1567 = vmatprep.subr.mxu0 0.0
    %1568 = vmatpush1.xpose.msra.mxu0 0.0
    %1569 = vmatprep.subr.mxu0 0.0
    %1570 = vmatpush1.xpose.msra.mxu0 0.0
    %1571 = vmatprep.subr.mxu0 0.0
    %1572 = vmatpush1.xpose.msra.mxu0 0.0
    %1573 = vmatprep.subr.mxu0 0.0
    %1574 = vmatpush1.xpose.msra.mxu0 0.0
    %1575 = vmatprep.subr.mxu0 0.0
    %1576 = vmatpush1.xpose.msra.mxu0 0.0
    %1577 = vmatprep.subr.mxu0 0.0
    %1578 = vmatpush1.xpose.msra.mxu0 0.0
    %1579 = vmatprep.subr.mxu0 0.0
    %1580 = vmatpush1.xpose.msra.mxu0 0.0
    %1581 = vmatprep.subr.mxu0 0.0
    %1582 = vmatpush1.xpose.msra.mxu0 0.0
    %1583 = vmatprep.subr.mxu0 0.0
    %1584 = vmatpush1.xpose.msra.mxu0 0.0
    %1585 = vmatprep.subr.mxu0 0.0
    %1586 = vmatpush1.xpose.msra.mxu0 0.0
    %1587 = vmatprep.subr.mxu0 0.0
    %1588 = vmatpush1.xpose.msra.mxu0 0.0
    %1589 = vmatprep.subr.mxu0 0.0
    %1590 = vmatpush1.xpose.msra.mxu0 0.0
    %1591 = vmatprep.subr.mxu0 0.0
    %1592 = vmatpush1.xpose.msra.mxu0 0.0
    %1593 = vmatprep.subr.mxu0 0.0
    %1594 = vmatpush1.xpose.msra.mxu0 0.0
    %1595 = vmatprep.subr.mxu0 0.0
    %1596 = vmatpush1.xpose.msra.mxu0 0.0
    %1597 = vmatprep.subr.mxu0 0.0
    %1598 = vmatpush1.xpose.msra.mxu0 0.0
    %1599 = vmatprep.subr.mxu0 0.0
    %1600 = vmatpush1.xpose.msra.mxu0 0.0
    %1601 = vmatprep.subr.mxu0 0.0
    %1602 = vmatpush1.xpose.msra.mxu0 0.0
    %1603 = vmatprep.subr.mxu0 0.0
    %1604 = vmatpush1.xpose.msra.mxu0 0.0
    %1605 = vmatprep.subr.mxu0 0.0
    %1606 = vmatpush1.xpose.msra.mxu0 0.0
    %1607 = vmatprep.subr.mxu0 0.0
    %1608 = vmatpush1.xpose.msra.mxu0 0.0
    %1609 = vmatprep.subr.mxu0 0.0
    %1610 = vmatpush1.xpose.msra.mxu0 0.0
    %1611 = vmatprep.subr.mxu0 0.0
    %1612 = vmatpush1.xpose.msra.mxu0 0.0
    %1613 = vmatprep.subr.mxu0 0.0
    %1614 = vmatpush1.xpose.msra.mxu0 0.0
    %1615 = vmatprep.subr.mxu0 0.0
    %1616 = vmatpush1.xpose.msra.mxu0 0.0
    %1617 = vmatprep.subr.mxu0 0.0
    %1618 = vmatpush1.xpose.msra.mxu0 0.0
    %1619 = vmatprep.mubr.f32.mxu0 0.0
    %1620 = vmatmul.mubr.f32.gmra.mrb[0].mxu0 %v1551
    %v1621 = vpop.f32.mrb[0].mxu0
    %v1622 = vadd.f32 0.0, %v1621
    %v1623 = vpop.f32.mrb[0].mxu0
    %1624 = vdwg.mxu0
    %v1625 = vmul.f32 %v1622, 0.35355338
    %v1626 = vadd.f32 %v1625, %v40
    %v1627 = vsel %vm307, %v1626, -inf
    %1628 = vmax.xlane.f32.xlu0 %v1627
    %v1629 = vpop.xlane.xlu0 %1628
    %v1630 = vsub.f32 %v1626, %v1629
    %v1631 = vmul.f32 %v1630, 1.442695
    %v1632 = vpow.pop %v1631
    %v1633 = vsel %vm307, %v1632, 0.0
    %1634 = vadd.xlane.f32.xlu0 %v1633
    %v1635 = vpop.xlane.xlu0 %1634
    %v1636 = vrcp.pop %v1635
    %v1637 = vmul.f32 %v1632, %v1636
    %1638 = vrot.lane.b32.xlu0 %v299, 104
    %v1639 = vpop.permute.xlu0 %1638
    %v1642 = vsel %vm307, %v1637, 0
    %1644 = vmatprep.subr.mxu0 0.0
    %1645 = vmatpush1.msra.mxu0 %v1639
    %1646 = vmatprep.subr.mxu0 0.0
    %1647 = vmatpush1.msra.mxu0 0.0
    %1648 = vmatprep.subr.mxu0 0.0
    %1649 = vmatpush1.msra.mxu0 0.0
    %1650 = vmatprep.subr.mxu0 0.0
    %1651 = vmatpush1.msra.mxu0 0.0
    %1652 = vmatprep.subr.mxu0 0.0
    %1653 = vmatpush1.msra.mxu0 0.0
    %1654 = vmatprep.subr.mxu0 0.0
    %1655 = vmatpush1.msra.mxu0 0.0
    %1656 = vmatprep.subr.mxu0 0.0
    %1657 = vmatpush1.msra.mxu0 0.0
    %1658 = vmatprep.subr.mxu0 0.0
    %1659 = vmatpush1.msra.mxu0 0.0
    %1660 = vmatprep.subr.mxu0 0.0
    %1661 = vmatpush1.msra.mxu0 0.0
    %1662 = vmatprep.subr.mxu0 0.0
    %1663 = vmatpush1.msra.mxu0 0.0
    %1664 = vmatprep.subr.mxu0 0.0
    %1665 = vmatpush1.msra.mxu0 0.0
    %1666 = vmatprep.subr.mxu0 0.0
    %1667 = vmatpush1.msra.mxu0 0.0
    %1668 = vmatprep.subr.mxu0 0.0
    %1669 = vmatpush1.msra.mxu0 0.0
    %1670 = vmatprep.subr.mxu0 0.0
    %1671 = vmatpush1.msra.mxu0 0.0
    %1672 = vmatprep.subr.mxu0 0.0
    %1673 = vmatpush1.msra.mxu0 0.0
    %1674 = vmatprep.subr.mxu0 0.0
    %1675 = vmatpush1.msra.mxu0 0.0
    %1676 = vmatprep.subr.mxu0 0.0
    %1677 = vmatpush1.msra.mxu0 0.0
    %1678 = vmatprep.subr.mxu0 0.0
    %1679 = vmatpush1.msra.mxu0 0.0
    %1680 = vmatprep.subr.mxu0 0.0
    %1681 = vmatpush1.msra.mxu0 0.0
    %1682 = vmatprep.subr.mxu0 0.0
    %1683 = vmatpush1.msra.mxu0 0.0
    %1684 = vmatprep.subr.mxu0 0.0
    %1685 = vmatpush1.msra.mxu0 0.0
    %1686 = vmatprep.subr.mxu0 0.0
    %1687 = vmatpush1.msra.mxu0 0.0
    %1688 = vmatprep.subr.mxu0 0.0
    %1689 = vmatpush1.msra.mxu0 0.0
    %1690 = vmatprep.subr.mxu0 0.0
    %1691 = vmatpush1.msra.mxu0 0.0
    %1692 = vmatprep.subr.mxu0 0.0
    %1693 = vmatpush1.msra.mxu0 0.0
    %1694 = vmatprep.subr.mxu0 0.0
    %1695 = vmatpush1.msra.mxu0 0.0
    %1696 = vmatprep.subr.mxu0 0.0
    %1697 = vmatpush1.msra.mxu0 0.0
    %1698 = vmatprep.subr.mxu0 0.0
    %1699 = vmatpush1.msra.mxu0 0.0
    %1700 = vmatprep.subr.mxu0 0.0
    %1701 = vmatpush1.msra.mxu0 0.0
    %1702 = vmatprep.subr.mxu0 0.0
    %1703 = vmatpush1.msra.mxu0 0.0
    %1704 = vmatprep.subr.mxu0 0.0
    %1705 = vmatpush1.msra.mxu0 0.0
    %1706 = vmatprep.subr.mxu0 0.0
    %1707 = vmatpush1.msra.mxu0 0.0
    %1708 = vmatprep.mubr.f32.mxu0 0.0
    %1709 = vmatmul.mubr.f32.gmra.mrb[0].mxu0 %v1642
    %v1710 = vpop.f32.mrb[0].mxu0
    %v1711 = vadd.f32 0.0, %v1710
    %v1712 = vpop.f32.mrb[0].mxu0
    %1713 = vdwg.mxu0
    %1714 = vrot.lane.b32.xlu0 %v146, 104
    %v1715 = vpop.permute.xlu0 %1714
    %1716 = vrot.lane.b32.xlu0 %v225, 104
    %v1717 = vpop.permute.xlu0 %1716
    %v1718 = vsel %vm307, %v1715, 0
    %v1720 = vsel %vm307, %v1717, 0
    %1722 = vmatprep.subr.mxu0 0.0
    %1723 = vmatpush1.xpose.msra.mxu0 %v1720
    %1724 = vmatprep.subr.mxu0 0.0
    %1725 = vmatpush1.xpose.msra.mxu0 0.0
    %1726 = vmatprep.subr.mxu0 0.0
    %1727 = vmatpush1.xpose.msra.mxu0 0.0
    %1728 = vmatprep.subr.mxu0 0.0
    %1729 = vmatpush1.xpose.msra.mxu0 0.0
    %1730 = vmatprep.subr.mxu0 0.0
    %1731 = vmatpush1.xpose.msra.mxu0 0.0
    %1732 = vmatprep.subr.mxu0 0.0
    %1733 = vmatpush1.xpose.msra.mxu0 0.0
    %1734 = vmatprep.subr.mxu0 0.0
    %1735 = vmatpush1.xpose.msra.mxu0 0.0
    %1736 = vmatprep.subr.mxu0 0.0
    %1737 = vmatpush1.xpose.msra.mxu0 0.0
    %1738 = vmatprep.subr.mxu0 0.0
    %1739 = vmatpush1.xpose.msra.mxu0 0.0
    %1740 = vmatprep.subr.mxu0 0.0
    %1741 = vmatpush1.xpose.msra.mxu0 0.0
    %1742 = vmatprep.subr.mxu0 0.0
    %1743 = vmatpush1.xpose.msra.mxu0 0.0
    %1744 = vmatprep.subr.mxu0 0.0
    %1745 = vmatpush1.xpose.msra.mxu0 0.0
    %1746 = vmatprep.subr.mxu0 0.0
    %1747 = vmatpush1.xpose.msra.mxu0 0.0
    %1748 = vmatprep.subr.mxu0 0.0
    %1749 = vmatpush1.xpose.msra.mxu0 0.0
    %1750 = vmatprep.subr.mxu0 0.0
    %1751 = vmatpush1.xpose.msra.mxu0 0.0
    %1752 = vmatprep.subr.mxu0 0.0
    %1753 = vmatpush1.xpose.msra.mxu0 0.0
    %1754 = vmatprep.subr.mxu0 0.0
    %1755 = vmatpush1.xpose.msra.mxu0 0.0
    %1756 = vmatprep.subr.mxu0 0.0
    %1757 = vmatpush1.xpose.msra.mxu0 0.0
    %1758 = vmatprep.subr.mxu0 0.0
    %1759 = vmatpush1.xpose.msra.mxu0 0.0
    %1760 = vmatprep.subr.mxu0 0.0
    %1761 = vmatpush1.xpose.msra.mxu0 0.0
    %1762 = vmatprep.subr.mxu0 0.0
    %1763 = vmatpush1.xpose.msra.mxu0 0.0
    %1764 = vmatprep.subr.mxu0 0.0
    %1765 = vmatpush1.xpose.msra.mxu0 0.0
    %1766 = vmatprep.subr.mxu0 0.0
    %1767 = vmatpush1.xpose.msra.mxu0 0.0
    %1768 = vmatprep.subr.mxu0 0.0
    %1769 = vmatpush1.xpose.msra.mxu0 0.0
    %1770 = vmatprep.subr.mxu0 0.0
    %1771 = vmatpush1.xpose.msra.mxu0 0.0
    %1772 = vmatprep.subr.mxu0 0.0
    %1773 = vmatpush1.xpose.msra.mxu0 0.0
    %1774 = vmatprep.subr.mxu0 0.0
    %1775 = vmatpush1.xpose.msra.mxu0 0.0
    %1776 = vmatprep.subr.mxu0 0.0
    %1777 = vmatpush1.xpose.msra.mxu0 0.0
    %1778 = vmatprep.subr.mxu0 0.0
    %1779 = vmatpush1.xpose.msra.mxu0 0.0
    %1780 = vmatprep.subr.mxu0 0.0
    %1781 = vmatpush1.xpose.msra.mxu0 0.0
    %1782 = vmatprep.subr.mxu0 0.0
    %1783 = vmatpush1.xpose.msra.mxu0 0.0
    %1784 = vmatprep.subr.mxu0 0.0
    %1785 = vmatpush1.xpose.msra.mxu0 0.0
    %1786 = vmatprep.mubr.f32.mxu0 0.0
    %1787 = vmatmul.mubr.f32.gmra.mrb[0].mxu0 %v1718
    %v1788 = vpop.f32.mrb[0].mxu0
    %v1789 = vadd.f32 0.0, %v1788
    %v1790 = vpop.f32.mrb[0].mxu0
    %1791 = vdwg.mxu0
    %v1792 = vmul.f32 %v1789, 0.35355338
    %v1793 = vadd.f32 %v1792, %v41
    %v1794 = vsel %vm307, %v1793, -inf
    %1795 = vmax.xlane.f32.xlu0 %v1794
    %v1796 = vpop.xlane.xlu0 %1795
    %v1797 = vsub.f32 %v1793, %v1796
    %v1798 = vmul.f32 %v1797, 1.442695
    %v1799 = vpow.pop %v1798
    %v1800 = vsel %vm307, %v1799, 0.0
    %1801 = vadd.xlane.f32.xlu0 %v1800
    %v1802 = vpop.xlane.xlu0 %1801
    %v1803 = vrcp.pop %v1802
    %v1804 = vmul.f32 %v1799, %v1803
    %1805 = vrot.lane.b32.xlu0 %v304, 104
    %v1806 = vpop.permute.xlu0 %1805
    %v1809 = vsel %vm307, %v1804, 0
    %1811 = vmatprep.subr.mxu0 0.0
    %1812 = vmatpush1.msra.mxu0 %v1806
    %1813 = vmatprep.subr.mxu0 0.0
    %1814 = vmatpush1.msra.mxu0 0.0
    %1815 = vmatprep.subr.mxu0 0.0
    %1816 = vmatpush1.msra.mxu0 0.0
    %1817 = vmatprep.subr.mxu0 0.0
    %1818 = vmatpush1.msra.mxu0 0.0
    %1819 = vmatprep.subr.mxu0 0.0
    %1820 = vmatpush1.msra.mxu0 0.0
    %1821 = vmatprep.subr.mxu0 0.0
    %1822 = vmatpush1.msra.mxu0 0.0
    %1823 = vmatprep.subr.mxu0 0.0
    %1824 = vmatpush1.msra.mxu0 0.0
    %1825 = vmatprep.subr.mxu0 0.0
    %1826 = vmatpush1.msra.mxu0 0.0
    %1827 = vmatprep.subr.mxu0 0.0
    %1828 = vmatpush1.msra.mxu0 0.0
    %1829 = vmatprep.subr.mxu0 0.0
    %1830 = vmatpush1.msra.mxu0 0.0
    %1831 = vmatprep.subr.mxu0 0.0
    %1832 = vmatpush1.msra.mxu0 0.0
    %1833 = vmatprep.subr.mxu0 0.0
    %1834 = vmatpush1.msra.mxu0 0.0
    %1835 = vmatprep.subr.mxu0 0.0
    %1836 = vmatpush1.msra.mxu0 0.0
    %1837 = vmatprep.subr.mxu0 0.0
    %1838 = vmatpush1.msra.mxu0 0.0
    %1839 = vmatprep.subr.mxu0 0.0
    %1840 = vmatpush1.msra.mxu0 0.0
    %1841 = vmatprep.subr.mxu0 0.0
    %1842 = vmatpush1.msra.mxu0 0.0
    %1843 = vmatprep.subr.mxu0 0.0
    %1844 = vmatpush1.msra.mxu0 0.0
    %1845 = vmatprep.subr.mxu0 0.0
    %1846 = vmatpush1.msra.mxu0 0.0
    %1847 = vmatprep.subr.mxu0 0.0
    %1848 = vmatpush1.msra.mxu0 0.0
    %1849 = vmatprep.subr.mxu0 0.0
    %1850 = vmatpush1.msra.mxu0 0.0
    %1851 = vmatprep.subr.mxu0 0.0
    %1852 = vmatpush1.msra.mxu0 0.0
    %1853 = vmatprep.subr.mxu0 0.0
    %1854 = vmatpush1.msra.mxu0 0.0
    %1855 = vmatprep.subr.mxu0 0.0
    %1856 = vmatpush1.msra.mxu0 0.0
    %1857 = vmatprep.subr.mxu0 0.0
    %1858 = vmatpush1.msra.mxu0 0.0
    %1859 = vmatprep.subr.mxu0 0.0
    %1860 = vmatpush1.msra.mxu0 0.0
    %1861 = vmatprep.subr.mxu0 0.0
    %1862 = vmatpush1.msra.mxu0 0.0
    %1863 = vmatprep.subr.mxu0 0.0
    %1864 = vmatpush1.msra.mxu0 0.0
    %1865 = vmatprep.subr.mxu0 0.0
    %1866 = vmatpush1.msra.mxu0 0.0
    %1867 = vmatprep.subr.mxu0 0.0
    %1868 = vmatpush1.msra.mxu0 0.0
    %1869 = vmatprep.subr.mxu0 0.0
    %1870 = vmatpush1.msra.mxu0 0.0
    %1871 = vmatprep.subr.mxu0 0.0
    %1872 = vmatpush1.msra.mxu0 0.0
    %1873 = vmatprep.subr.mxu0 0.0
    %1874 = vmatpush1.msra.mxu0 0.0
    %1875 = vmatprep.mubr.f32.mxu0 0.0
    %1876 = vmatmul.mubr.f32.gmra.mrb[0].mxu0 %v1809
    %v1877 = vpop.f32.mrb[0].mxu0
    %v1878 = vadd.f32 0.0, %v1877
    %v1879 = vpop.f32.mrb[0].mxu0
    %1880 = vdwg.mxu0
    %v1882 = vsel %vm307, %v1711, 0
    %v1885 = vsel %vm307, %v1878, 0
    %1887 = vmatprep.subr.mxu0 0.0
    %1888 = vmatpush1.msra.mxu0 %v58
    %1889 = vmatprep.subr.mxu0 0.0
    %1890 = vmatpush1.msra.mxu0 0.0
    %1891 = vmatprep.subr.mxu0 0.0
    %1892 = vmatpush1.msra.mxu0 0.0
    %1893 = vmatprep.subr.mxu0 0.0
    %1894 = vmatpush1.msra.mxu0 0.0
    %1895 = vmatprep.subr.mxu0 0.0
    %1896 = vmatpush1.msra.mxu0 0.0
    %1897 = vmatprep.subr.mxu0 0.0
    %1898 = vmatpush1.msra.mxu0 0.0
    %1899 = vmatprep.subr.mxu0 0.0
    %1900 = vmatpush1.msra.mxu0 0.0
    %1901 = vmatprep.subr.mxu0 0.0
    %1902 = vmatpush1.msra.mxu0 0.0
    %1903 = vmatprep.subr.mxu0 0.0
    %1904 = vmatpush1.msra.mxu0 0.0
    %1905 = vmatprep.subr.mxu0 0.0
    %1906 = vmatpush1.msra.mxu0 0.0
    %1907 = vmatprep.subr.mxu0 0.0
    %1908 = vmatpush1.msra.mxu0 0.0
    %1909 = vmatprep.subr.mxu0 0.0
    %1910 = vmatpush1.msra.mxu0 0.0
    %1911 = vmatprep.subr.mxu0 0.0
    %1912 = vmatpush1.msra.mxu0 0.0
    %1913 = vmatprep.subr.mxu0 0.0
    %1914 = vmatpush1.msra.mxu0 0.0
    %1915 = vmatprep.subr.mxu0 0.0
    %1916 = vmatpush1.msra.mxu0 0.0
    %1917 = vmatprep.subr.mxu0 0.0
    %1918 = vmatpush1.msra.mxu0 0.0
    %1919 = vmatprep.subr.mxu0 0.0
    %1920 = vmatpush1.msra.mxu0 0.0
    %1921 = vmatprep.subr.mxu0 0.0
    %1922 = vmatpush1.msra.mxu0 0.0
    %1923 = vmatprep.subr.mxu0 0.0
    %1924 = vmatpush1.msra.mxu0 0.0
    %1925 = vmatprep.subr.mxu0 0.0
    %1926 = vmatpush1.msra.mxu0 0.0
    %1927 = vmatprep.subr.mxu0 0.0
    %1928 = vmatpush1.msra.mxu0 0.0
    %1929 = vmatprep.subr.mxu0 0.0
    %1930 = vmatpush1.msra.mxu0 0.0
    %1931 = vmatprep.subr.mxu0 0.0
    %1932 = vmatpush1.msra.mxu0 0.0
    %1933 = vmatprep.subr.mxu0 0.0
    %1934 = vmatpush1.msra.mxu0 0.0
    %1935 = vmatprep.subr.mxu0 0.0
    %1936 = vmatpush1.msra.mxu0 0.0
    %1937 = vmatprep.subr.mxu0 0.0
    %1938 = vmatpush1.msra.mxu0 0.0
    %1939 = vmatprep.subr.mxu0 0.0
    %1940 = vmatpush1.msra.mxu0 0.0
    %1941 = vmatprep.subr.mxu0 0.0
    %1942 = vmatpush1.msra.mxu0 0.0
    %1943 = vmatprep.subr.mxu0 0.0
    %1944 = vmatpush1.msra.mxu0 0.0
    %1945 = vmatprep.subr.mxu0 0.0
    %1946 = vmatpush1.msra.mxu0 0.0
    %1947 = vmatprep.subr.mxu0 0.0
    %1948 = vmatpush1.msra.mxu0 0.0
    %1949 = vmatprep.subr.mxu0 0.0
    %1950 = vmatpush1.msra.mxu0 0.0
    %1951 = vmatprep.mubr.f32.mxu0 0.0
    %1952 = vmatmul.mubr.f32.gmra.mrb[0].mxu0 %v1882
    %v1953 = vpop.f32.mrb[0].mxu0
    %v1954 = vadd.f32 0.0, %v1953
    %v1955 = vpop.f32.mrb[0].mxu0
    %1956 = vmatprep.mubr.f32.mxu0 0.0
    %1957 = vmatmul.mubr.f32.gmra.mrb[0].mxu0 %v1885
    %v1958 = vpop.f32.mrb[0].mxu0
    %v1959 = vadd.f32 0.0, %v1958
    %v1960 = vpop.f32.mrb[0].mxu0
    %1961 = vdwg.mxu0
    %v1962 = vadd.f32 %v1545, %v1954
    %v1963 = vadd.f32 %v1546, %v1959
    %v1964 = vlaneseq
    %v1965 = vshrl.u32 %v1964, 7
    %v1966 = vsub.s32 0, %v1965
    %v1967 = vrot.slane %v62, %v1966
    %v1968 = vadd.f32 %v1962, %v1967
    %v1969 = vadd.f32 %v1963, %v1967
    %v1970 = vadd.f32 %v36, %v1968
    %v1971 = vadd.f32 %v37, %v1969
    %v1972 = vld [vmem:[%s7 + $0x9] sm:$0x1]
    %v1973 = vld [vmem:[%s7 + $0xa] sm:$0x1]
    %v1974 = vsel %vm67, %v1970, 0.0
    %1975 = vadd.xlane.f32.xlu0 %v1974
    %v1976 = vpop.xlane.xlu0 %1975
    %v1977 = vsel %vm67, %v1971, 0.0
    %1978 = vadd.xlane.f32.xlu0 %v1977
    %v1979 = vpop.xlane.xlu0 %1978
    %v1980 = vrcp.pop 32.0
    %v1981 = vmul.f32 %v1976, %v1980
    %v1982 = vmul.f32 %v1979, %v1980
    %v1983 = vsub.f32 %v1970, %v1981
    %v1984 = vsub.f32 %v1971, %v1982
    %v1985 = vmul.f32 %v1983, %v1983
    %v1986 = vmul.f32 %v1984, %v1984
    %v1987 = vsel %vm67, %v1985, 0.0
    %1988 = vadd.xlane.f32.xlu0 %v1987
    %v1989 = vpop.xlane.xlu0 %1988
    %v1990 = vsel %vm67, %v1986, 0.0
    %1991 = vadd.xlane.f32.xlu0 %v1990
    %v1992 = vpop.xlane.xlu0 %1991
    %v1993 = vmul.f32 %v1989, %v1980
    %v1994 = vmul.f32 %v1992, %v1980
    %v1995 = vadd.f32 %v1993, 1e-05
    %v1996 = vadd.f32 %v1994, 1e-05
    %v1997 = vrsqrt.pop %v1995
    %v1998 = vrsqrt.pop %v1996
    %v1999 = vmul.f32 %v1983, %v1997
    %v2000 = vmul.f32 %v1984, %v1998
    %v2001 = vlaneseq
    %v2002 = vshrl.u32 %v2001, 7
    %v2003 = vsub.s32 0, %v2002
    %v2004 = vrot.slane %v1972, %v2003
    %v2005 = vmul.f32 %v1999, %v2004
    %v2006 = vmul.f32 %v2000, %v2004
    %v2007 = vlaneseq
    %v2008 = vshrl.u32 %v2007, 7
    %v2009 = vsub.s32 0, %v2008
    %v2010 = vrot.slane %v1973, %v2009
    %v2011 = vadd.f32 %v2005, %v2010
    %v2012 = vadd.f32 %v2006, %v2010
    %v2013 = vld [vmem:[%s4 + $0x80] sm:$0xff]
    %v2014 = vld [vmem:[%s4 + $0x88] sm:$0xff]
    %v2015 = vld [vmem:[%s4 + $0x90] sm:$0xff]
    %v2016 = vld [vmem:[%s4 + $0x98] sm:$0xff]
    %v2017 = vld [vmem:[%s4 + $0xa0] sm:$0xff]
    %v2018 = vld [vmem:[%s4 + $0xa8] sm:$0xff]
    %v2019 = vld [vmem:[%s4 + $0xb0] sm:$0xff]
    %v2020 = vld [vmem:[%s4 + $0xb8] sm:$0xff]
    %v2021 = vld [vmem:[%s4 + $0xc0] sm:$0xff]
    %v2022 = vld [vmem:[%s4 + $0xc8] sm:$0xff]
    %v2023 = vld [vmem:[%s4 + $0xd0] sm:$0xff]
    %v2024 = vld [vmem:[%s4 + $0xd8] sm:$0xff]
    %v2025 = vld [vmem:[%s4 + $0xe0] sm:$0xff]
    %v2026 = vld [vmem:[%s4 + $0xe8] sm:$0xff]
    %v2027 = vld [vmem:[%s4 + $0xf0] sm:$0xff]
    %v2028 = vld [vmem:[%s4 + $0xf8] sm:$0xff]
    %v2029 = vld [vmem:[%s7 + $0x4] sm:$0x1]
    %v2030 = vld [vmem:[%s7 + $0x5] sm:$0x1]
    %v2031 = vld [vmem:[%s7 + $0x6] sm:$0x1]
    %v2032 = vld [vmem:[%s7 + $0x7] sm:$0x1]
    %v2033 = vlaneseq
    %v2034 = vshrl.u32 %v2033, 7
    %v2035 = vsub.s32 0, %v2034
    %v2036 = vrot.slane %v2029, %v2035
    %v2038 = vsel %vm67, %v2011, 0
    %v2041 = vsel %vm67, %v2012, 0
    %2043 = vmatprep.subr.mxu0 0.0
    %2044 = vmatpush1.msra.mxu0 %v2013
    %2045 = vmatprep.subr.mxu0 0.0
    %2046 = vmatpush1.msra.mxu0 %v2014
    %2047 = vmatprep.subr.mxu0 0.0
    %2048 = vmatpush1.msra.mxu0 %v2015
    %2049 = vmatprep.subr.mxu0 0.0
    %2050 = vmatpush1.msra.mxu0 %v2016
    %2051 = vmatprep.subr.mxu0 0.0
    %2052 = vmatpush1.msra.mxu0 0.0
    %2053 = vmatprep.subr.mxu0 0.0
    %2054 = vmatpush1.msra.mxu0 0.0
    %2055 = vmatprep.subr.mxu0 0.0
    %2056 = vmatpush1.msra.mxu0 0.0
    %2057 = vmatprep.subr.mxu0 0.0
    %2058 = vmatpush1.msra.mxu0 0.0
    %2059 = vmatprep.subr.mxu0 0.0
    %2060 = vmatpush1.msra.mxu0 0.0
    %2061 = vmatprep.subr.mxu0 0.0
    %2062 = vmatpush1.msra.mxu0 0.0
    %2063 = vmatprep.subr.mxu0 0.0
    %2064 = vmatpush1.msra.mxu0 0.0
    %2065 = vmatprep.subr.mxu0 0.0
    %2066 = vmatpush1.msra.mxu0 0.0
    %2067 = vmatprep.subr.mxu0 0.0
    %2068 = vmatpush1.msra.mxu0 0.0
    %2069 = vmatprep.subr.mxu0 0.0
    %2070 = vmatpush1.msra.mxu0 0.0
    %2071 = vmatprep.subr.mxu0 0.0
    %2072 = vmatpush1.msra.mxu0 0.0
    %2073 = vmatprep.subr.mxu0 0.0
    %2074 = vmatpush1.msra.mxu0 0.0
    %2075 = vmatprep.subr.mxu0 0.0
    %2076 = vmatpush1.msra.mxu0 0.0
    %2077 = vmatprep.subr.mxu0 0.0
    %2078 = vmatpush1.msra.mxu0 0.0
    %2079 = vmatprep.subr.mxu0 0.0
    %2080 = vmatpush1.msra.mxu0 0.0
    %2081 = vmatprep.subr.mxu0 0.0
    %2082 = vmatpush1.msra.mxu0 0.0
    %2083 = vmatprep.subr.mxu0 0.0
    %2084 = vmatpush1.msra.mxu0 0.0
    %2085 = vmatprep.subr.mxu0 0.0
    %2086 = vmatpush1.msra.mxu0 0.0
    %2087 = vmatprep.subr.mxu0 0.0
    %2088 = vmatpush1.msra.mxu0 0.0
    %2089 = vmatprep.subr.mxu0 0.0
    %2090 = vmatpush1.msra.mxu0 0.0
    %2091 = vmatprep.subr.mxu0 0.0
    %2092 = vmatpush1.msra.mxu0 0.0
    %2093 = vmatprep.subr.mxu0 0.0
    %2094 = vmatpush1.msra.mxu0 0.0
    %2095 = vmatprep.subr.mxu0 0.0
    %2096 = vmatpush1.msra.mxu0 0.0
    %2097 = vmatprep.subr.mxu0 0.0
    %2098 = vmatpush1.msra.mxu0 0.0
    %2099 = vmatprep.subr.mxu0 0.0
    %2100 = vmatpush1.msra.mxu0 0.0
    %2101 = vmatprep.subr.mxu0 0.0
    %2102 = vmatpush1.msra.mxu0 0.0
    %2103 = vmatprep.subr.mxu0 0.0
    %2104 = vmatpush1.msra.mxu0 0.0
    %2105 = vmatprep.subr.mxu0 0.0
    %2106 = vmatpush1.msra.mxu0 0.0
    %2107 = vmatprep.mubr.f32.mxu0 0.0
    %2108 = vmatmul.mubr.f32.gmra.mrb[0].mxu0 %v2038
    %v2109 = vpop.f32.mrb[0].mxu0
    %v2110 = vadd.f32 %v2036, %v2109
    %v2111 = vpop.f32.mrb[0].mxu0
    %2112 = vmatprep.mubr.f32.mxu0 0.0
    %2113 = vmatmul.mubr.f32.gmra.mrb[0].mxu0 %v2041
    %v2114 = vpop.f32.mrb[0].mxu0
    %v2115 = vadd.f32 %v2036, %v2114
    %v2116 = vpop.f32.mrb[0].mxu0
    %2117 = vdwg.mxu0
    %v2118 = vlaneseq
    %v2119 = vshrl.u32 %v2118, 7
    %v2120 = vsub.s32 0, %v2119
    %v2121 = vrot.slane %v2030, %v2120
    %v2123 = vsel %vm67, %v38, 0
    %v2126 = vsel %vm67, %v39, 0
    %2128 = vmatprep.subr.mxu0 0.0
    %2129 = vmatpush1.msra.mxu0 %v2017
    %2130 = vmatprep.subr.mxu0 0.0
    %2131 = vmatpush1.msra.mxu0 %v2018
    %2132 = vmatprep.subr.mxu0 0.0
    %2133 = vmatpush1.msra.mxu0 %v2019
    %2134 = vmatprep.subr.mxu0 0.0
    %2135 = vmatpush1.msra.mxu0 %v2020
    %2136 = vmatprep.subr.mxu0 0.0
    %2137 = vmatpush1.msra.mxu0 0.0
    %2138 = vmatprep.subr.mxu0 0.0
    %2139 = vmatpush1.msra.mxu0 0.0
    %2140 = vmatprep.subr.mxu0 0.0
    %2141 = vmatpush1.msra.mxu0 0.0
    %2142 = vmatprep.subr.mxu0 0.0
    %2143 = vmatpush1.msra.mxu0 0.0
    %2144 = vmatprep.subr.mxu0 0.0
    %2145 = vmatpush1.msra.mxu0 0.0
    %2146 = vmatprep.subr.mxu0 0.0
    %2147 = vmatpush1.msra.mxu0 0.0
    %2148 = vmatprep.subr.mxu0 0.0
    %2149 = vmatpush1.msra.mxu0 0.0
    %2150 = vmatprep.subr.mxu0 0.0
    %2151 = vmatpush1.msra.mxu0 0.0
    %2152 = vmatprep.subr.mxu0 0.0
    %2153 = vmatpush1.msra.mxu0 0.0
    %2154 = vmatprep.subr.mxu0 0.0
    %2155 = vmatpush1.msra.mxu0 0.0
    %2156 = vmatprep.subr.mxu0 0.0
    %2157 = vmatpush1.msra.mxu0 0.0
    %2158 = vmatprep.subr.mxu0 0.0
    %2159 = vmatpush1.msra.mxu0 0.0
    %2160 = vmatprep.subr.mxu0 0.0
    %2161 = vmatpush1.msra.mxu0 0.0
    %2162 = vmatprep.subr.mxu0 0.0
    %2163 = vmatpush1.msra.mxu0 0.0
    %2164 = vmatprep.subr.mxu0 0.0
    %2165 = vmatpush1.msra.mxu0 0.0
    %2166 = vmatprep.subr.mxu0 0.0
    %2167 = vmatpush1.msra.mxu0 0.0
    %2168 = vmatprep.subr.mxu0 0.0
    %2169 = vmatpush1.msra.mxu0 0.0
    %2170 = vmatprep.subr.mxu0 0.0
    %2171 = vmatpush1.msra.mxu0 0.0
    %2172 = vmatprep.subr.mxu0 0.0
    %2173 = vmatpush1.msra.mxu0 0.0
    %2174 = vmatprep.subr.mxu0 0.0
    %2175 = vmatpush1.msra.mxu0 0.0
    %2176 = vmatprep.subr.mxu0 0.0
    %2177 = vmatpush1.msra.mxu0 0.0
    %2178 = vmatprep.subr.mxu0 0.0
    %2179 = vmatpush1.msra.mxu0 0.0
    %2180 = vmatprep.subr.mxu0 0.0
    %2181 = vmatpush1.msra.mxu0 0.0
    %2182 = vmatprep.subr.mxu0 0.0
    %2183 = vmatpush1.msra.mxu0 0.0
    %2184 = vmatprep.subr.mxu0 0.0
    %2185 = vmatpush1.msra.mxu0 0.0
    %2186 = vmatprep.subr.mxu0 0.0
    %2187 = vmatpush1.msra.mxu0 0.0
    %2188 = vmatprep.subr.mxu0 0.0
    %2189 = vmatpush1.msra.mxu0 0.0
    %2190 = vmatprep.subr.mxu0 0.0
    %2191 = vmatpush1.msra.mxu0 0.0
    %2192 = vmatprep.mubr.f32.mxu0 0.0
    %2193 = vmatmul.mubr.f32.gmra.mrb[0].mxu0 %v2123
    %v2194 = vpop.f32.mrb[0].mxu0
    %v2195 = vadd.f32 %v2121, %v2194
    %v2196 = vpop.f32.mrb[0].mxu0
    %2197 = vmatprep.mubr.f32.mxu0 0.0
    %2198 = vmatmul.mubr.f32.gmra.mrb[0].mxu0 %v2126
    %v2199 = vpop.f32.mrb[0].mxu0
    %v2200 = vadd.f32 %v2121, %v2199
    %v2201 = vpop.f32.mrb[0].mxu0
    %2202 = vdwg.mxu0
    %v2203 = vlaneseq
    %v2204 = vshrl.u32 %v2203, 7
    %v2205 = vsub.s32 0, %v2204
    %v2206 = vrot.slane %v2031, %v2205
    %2207 = vmatprep.subr.mxu0 0.0
    %2208 = vmatpush1.msra.mxu0 %v2021
    %2209 = vmatprep.subr.mxu0 0.0
    %2210 = vmatpush1.msra.mxu0 %v2022
    %2211 = vmatprep.subr.mxu0 0.0
    %2212 = vmatpush1.msra.mxu0 %v2023
    %2213 = vmatprep.subr.mxu0 0.0
    %2214 = vmatpush1.msra.mxu0 %v2024
    %2215 = vmatprep.subr.mxu0 0.0
    %2216 = vmatpush1.msra.mxu0 0.0
    %2217 = vmatprep.subr.mxu0 0.0
    %2218 = vmatpush1.msra.mxu0 0.0
    %2219 = vmatprep.subr.mxu0 0.0
    %2220 = vmatpush1.msra.mxu0 0.0
    %2221 = vmatprep.subr.mxu0 0.0
    %2222 = vmatpush1.msra.mxu0 0.0
    %2223 = vmatprep.subr.mxu0 0.0
    %2224 = vmatpush1.msra.mxu0 0.0
    %2225 = vmatprep.subr.mxu0 0.0
    %2226 = vmatpush1.msra.mxu0 0.0
    %2227 = vmatprep.subr.mxu0 0.0
    %2228 = vmatpush1.msra.mxu0 0.0
    %2229 = vmatprep.subr.mxu0 0.0
    %2230 = vmatpush1.msra.mxu0 0.0
    %2231 = vmatprep.subr.mxu0 0.0
    %2232 = vmatpush1.msra.mxu0 0.0
    %2233 = vmatprep.subr.mxu0 0.0
    %2234 = vmatpush1.msra.mxu0 0.0
    %2235 = vmatprep.subr.mxu0 0.0
    %2236 = vmatpush1.msra.mxu0 0.0
    %2237 = vmatprep.subr.mxu0 0.0
    %2238 = vmatpush1.msra.mxu0 0.0
    %2239 = vmatprep.subr.mxu0 0.0
    %2240 = vmatpush1.msra.mxu0 0.0
    %2241 = vmatprep.subr.mxu0 0.0
    %2242 = vmatpush1.msra.mxu0 0.0
    %2243 = vmatprep.subr.mxu0 0.0
    %2244 = vmatpush1.msra.mxu0 0.0
    %2245 = vmatprep.subr.mxu0 0.0
    %2246 = vmatpush1.msra.mxu0 0.0
    %2247 = vmatprep.subr.mxu0 0.0
    %2248 = vmatpush1.msra.mxu0 0.0
    %2249 = vmatprep.subr.mxu0 0.0
    %2250 = vmatpush1.msra.mxu0 0.0
    %2251 = vmatprep.subr.mxu0 0.0
    %2252 = vmatpush1.msra.mxu0 0.0
    %2253 = vmatprep.subr.mxu0 0.0
    %2254 = vmatpush1.msra.mxu0 0.0
    %2255 = vmatprep.subr.mxu0 0.0
    %2256 = vmatpush1.msra.mxu0 0.0
    %2257 = vmatprep.subr.mxu0 0.0
    %2258 = vmatpush1.msra.mxu0 0.0
    %2259 = vmatprep.subr.mxu0 0.0
    %2260 = vmatpush1.msra.mxu0 0.0
    %2261 = vmatprep.subr.mxu0 0.0
    %2262 = vmatpush1.msra.mxu0 0.0
    %2263 = vmatprep.subr.mxu0 0.0
    %2264 = vmatpush1.msra.mxu0 0.0
    %2265 = vmatprep.subr.mxu0 0.0
    %2266 = vmatpush1.msra.mxu0 0.0
    %2267 = vmatprep.subr.mxu0 0.0
    %2268 = vmatpush1.msra.mxu0 0.0
    %2269 = vmatprep.subr.mxu0 0.0
    %2270 = vmatpush1.msra.mxu0 0.0
    %2271 = vmatprep.mubr.f32.mxu0 0.0
    %2272 = vmatmul.mubr.f32.gmra.mrb[0].mxu0 %v2123
    %v2273 = vpop.f32.mrb[0].mxu0
    %v2274 = vadd.f32 %v2206, %v2273
    %v2275 = vpop.f32.mrb[0].mxu0
    %2276 = vmatprep.mubr.f32.mxu0 0.0
    %2277 = vmatmul.mubr.f32.gmra.mrb[0].mxu0 %v2126
    %v2278 = vpop.f32.mrb[0].mxu0
    %v2279 = vadd.f32 %v2206, %v2278
    %v2280 = vpop.f32.mrb[0].mxu0
    %2281 = vdwg.mxu0
    %v2283 = vsel %vm307, %v2110, 0
    %v2286 = vsel %vm307, %v2195, 0
    %2288 = vmatprep.subr.mxu0 0.0
    %2289 = vmatpush1.xpose.msra.mxu0 %v2286
    %2290 = vmatprep.subr.mxu0 0.0
    %2291 = vmatpush1.xpose.msra.mxu0 0.0
    %2292 = vmatprep.subr.mxu0 0.0
    %2293 = vmatpush1.xpose.msra.mxu0 0.0
    %2294 = vmatprep.subr.mxu0 0.0
    %2295 = vmatpush1.xpose.msra.mxu0 0.0
    %2296 = vmatprep.subr.mxu0 0.0
    %2297 = vmatpush1.xpose.msra.mxu0 0.0
    %2298 = vmatprep.subr.mxu0 0.0
    %2299 = vmatpush1.xpose.msra.mxu0 0.0
    %2300 = vmatprep.subr.mxu0 0.0
    %2301 = vmatpush1.xpose.msra.mxu0 0.0
    %2302 = vmatprep.subr.mxu0 0.0
    %2303 = vmatpush1.xpose.msra.mxu0 0.0
    %2304 = vmatprep.subr.mxu0 0.0
    %2305 = vmatpush1.xpose.msra.mxu0 0.0
    %2306 = vmatprep.subr.mxu0 0.0
    %2307 = vmatpush1.xpose.msra.mxu0 0.0
    %2308 = vmatprep.subr.mxu0 0.0
    %2309 = vmatpush1.xpose.msra.mxu0 0.0
    %2310 = vmatprep.subr.mxu0 0.0
    %2311 = vmatpush1.xpose.msra.mxu0 0.0
    %2312 = vmatprep.subr.mxu0 0.0
    %2313 = vmatpush1.xpose.msra.mxu0 0.0
    %2314 = vmatprep.subr.mxu0 0.0
    %2315 = vmatpush1.xpose.msra.mxu0 0.0
    %2316 = vmatprep.subr.mxu0 0.0
    %2317 = vmatpush1.xpose.msra.mxu0 0.0
    %2318 = vmatprep.subr.mxu0 0.0
    %2319 = vmatpush1.xpose.msra.mxu0 0.0
    %2320 = vmatprep.subr.mxu0 0.0
    %2321 = vmatpush1.xpose.msra.mxu0 0.0
    %2322 = vmatprep.subr.mxu0 0.0
    %2323 = vmatpush1.xpose.msra.mxu0 0.0
    %2324 = vmatprep.subr.mxu0 0.0
    %2325 = vmatpush1.xpose.msra.mxu0 0.0
    %2326 = vmatprep.subr.mxu0 0.0
    %2327 = vmatpush1.xpose.msra.mxu0 0.0
    %2328 = vmatprep.subr.mxu0 0.0
    %2329 = vmatpush1.xpose.msra.mxu0 0.0
    %2330 = vmatprep.subr.mxu0 0.0
    %2331 = vmatpush1.xpose.msra.mxu0 0.0
    %2332 = vmatprep.subr.mxu0 0.0
    %2333 = vmatpush1.xpose.msra.mxu0 0.0
    %2334 = vmatprep.subr.mxu0 0.0
    %2335 = vmatpush1.xpose.msra.mxu0 0.0
    %2336 = vmatprep.subr.mxu0 0.0
    %2337 = vmatpush1.xpose.msra.mxu0 0.0
    %2338 = vmatprep.subr.mxu0 0.0
    %2339 = vmatpush1.xpose.msra.mxu0 0.0
    %2340 = vmatprep.subr.mxu0 0.0
    %2341 = vmatpush1.xpose.msra.mxu0 0.0
    %2342 = vmatprep.subr.mxu0 0.0
    %2343 = vmatpush1.xpose.msra.mxu0 0.0
    %2344 = vmatprep.subr.mxu0 0.0
    %2345 = vmatpush1.xpose.msra.mxu0 0.0
    %2346 = vmatprep.subr.mxu0 0.0
    %2347 = vmatpush1.xpose.msra.mxu0 0.0
    %2348 = vmatprep.subr.mxu0 0.0
    %2349 = vmatpush1.xpose.msra.mxu0 0.0
    %2350 = vmatprep.subr.mxu0 0.0
    %2351 = vmatpush1.xpose.msra.mxu0 0.0
    %2352 = vmatprep.mubr.f32.mxu0 0.0
    %2353 = vmatmul.mubr.f32.gmra.mrb[0].mxu0 %v2283
    %v2354 = vpop.f32.mrb[0].mxu0
    %v2355 = vadd.f32 0.0, %v2354
    %v2356 = vpop.f32.mrb[0].mxu0
    %2357 = vdwg.mxu0
    %v2358 = vmul.f32 %v2355, 0.35355338
    %v2359 = vlaneseq
    %v2360 = vshrl.u32 %v2359, 7
    %v2361 = vsub.s32 0, %v2360
    %v2362 = vrot.slane %v42, %v2361
    %v2363 = vadd.f32 %v2358, %v2362
    %v2364 = vsel %vm307, %v2363, -inf
    %2365 = vmax.xlane.f32.xlu0 %v2364
    %v2366 = vpop.xlane.xlu0 %2365
    %v2367 = vsub.f32 %v2363, %v2366
    %v2368 = vmul.f32 %v2367, 1.442695
    %v2369 = vpow.pop %v2368
    %v2370 = vsel %vm307, %v2369, 0.0
    %2371 = vadd.xlane.f32.xlu0 %v2370
    %v2372 = vpop.xlane.xlu0 %2371
    %v2373 = vrcp.pop %v2372
    %v2374 = vmul.f32 %v2369, %v2373
    %2375 = vst.msk [vmem:[#allocation4] sm:$0xff] %vm307, %v2374
    %v2377 = vsel %vm307, %v2374, 0
    %2379 = vmatprep.subr.mxu0 0.0
    %2380 = vmatpush1.msra.mxu0 %v2274
    %2381 = vmatprep.subr.mxu0 0.0
    %2382 = vmatpush1.msra.mxu0 0.0
    %2383 = vmatprep.subr.mxu0 0.0
    %2384 = vmatpush1.msra.mxu0 0.0
    %2385 = vmatprep.subr.mxu0 0.0
    %2386 = vmatpush1.msra.mxu0 0.0
    %2387 = vmatprep.subr.mxu0 0.0
    %2388 = vmatpush1.msra.mxu0 0.0
    %2389 = vmatprep.subr.mxu0 0.0
    %2390 = vmatpush1.msra.mxu0 0.0
    %2391 = vmatprep.subr.mxu0 0.0
    %2392 = vmatpush1.msra.mxu0 0.0
    %2393 = vmatprep.subr.mxu0 0.0
    %2394 = vmatpush1.msra.mxu0 0.0
    %2395 = vmatprep.subr.mxu0 0.0
    %2396 = vmatpush1.msra.mxu0 0.0
    %2397 = vmatprep.subr.mxu0 0.0
    %2398 = vmatpush1.msra.mxu0 0.0
    %2399 = vmatprep.subr.mxu0 0.0
    %2400 = vmatpush1.msra.mxu0 0.0
    %2401 = vmatprep.subr.mxu0 0.0
    %2402 = vmatpush1.msra.mxu0 0.0
    %2403 = vmatprep.subr.mxu0 0.0
    %2404 = vmatpush1.msra.mxu0 0.0
    %2405 = vmatprep.subr.mxu0 0.0
    %2406 = vmatpush1.msra.mxu0 0.0
    %2407 = vmatprep.subr.mxu0 0.0
    %2408 = vmatpush1.msra.mxu0 0.0
    %2409 = vmatprep.subr.mxu0 0.0
    %2410 = vmatpush1.msra.mxu0 0.0
    %2411 = vmatprep.subr.mxu0 0.0
    %2412 = vmatpush1.msra.mxu0 0.0
    %2413 = vmatprep.subr.mxu0 0.0
    %2414 = vmatpush1.msra.mxu0 0.0
    %2415 = vmatprep.subr.mxu0 0.0
    %2416 = vmatpush1.msra.mxu0 0.0
    %2417 = vmatprep.subr.mxu0 0.0
    %2418 = vmatpush1.msra.mxu0 0.0
    %2419 = vmatprep.subr.mxu0 0.0
    %2420 = vmatpush1.msra.mxu0 0.0
    %2421 = vmatprep.subr.mxu0 0.0
    %2422 = vmatpush1.msra.mxu0 0.0
    %2423 = vmatprep.subr.mxu0 0.0
    %2424 = vmatpush1.msra.mxu0 0.0
    %2425 = vmatprep.subr.mxu0 0.0
    %2426 = vmatpush1.msra.mxu0 0.0
    %2427 = vmatprep.subr.mxu0 0.0
    %2428 = vmatpush1.msra.mxu0 0.0
    %2429 = vmatprep.subr.mxu0 0.0
    %2430 = vmatpush1.msra.mxu0 0.0
    %2431 = vmatprep.subr.mxu0 0.0
    %2432 = vmatpush1.msra.mxu0 0.0
    %2433 = vmatprep.subr.mxu0 0.0
    %2434 = vmatpush1.msra.mxu0 0.0
    %2435 = vmatprep.subr.mxu0 0.0
    %2436 = vmatpush1.msra.mxu0 0.0
    %2437 = vmatprep.subr.mxu0 0.0
    %2438 = vmatpush1.msra.mxu0 0.0
    %2439 = vmatprep.subr.mxu0 0.0
    %2440 = vmatpush1.msra.mxu0 0.0
    %2441 = vmatprep.subr.mxu0 0.0
    %2442 = vmatpush1.msra.mxu0 0.0
    %2443 = vmatprep.mubr.f32.mxu0 0.0
    %2444 = vmatmul.mubr.f32.gmra.mrb[0].mxu0 %v2377
    %v2445 = vpop.f32.mrb[0].mxu0
    %v2446 = vadd.f32 0.0, %v2445
    %v2447 = vpop.f32.mrb[0].mxu0
    %2448 = vdwg.mxu0
    %v2450 = vsel %vm307, %v2115, 0
    %v2453 = vsel %vm307, %v2200, 0
    %2455 = vmatprep.subr.mxu0 0.0
    %2456 = vmatpush1.xpose.msra.mxu0 %v2453
    %2457 = vmatprep.subr.mxu0 0.0
    %2458 = vmatpush1.xpose.msra.mxu0 0.0
    %2459 = vmatprep.subr.mxu0 0.0
    %2460 = vmatpush1.xpose.msra.mxu0 0.0
    %2461 = vmatprep.subr.mxu0 0.0
    %2462 = vmatpush1.xpose.msra.mxu0 0.0
    %2463 = vmatprep.subr.mxu0 0.0
    %2464 = vmatpush1.xpose.msra.mxu0 0.0
    %2465 = vmatprep.subr.mxu0 0.0
    %2466 = vmatpush1.xpose.msra.mxu0 0.0
    %2467 = vmatprep.subr.mxu0 0.0
    %2468 = vmatpush1.xpose.msra.mxu0 0.0
    %2469 = vmatprep.subr.mxu0 0.0
    %2470 = vmatpush1.xpose.msra.mxu0 0.0
    %2471 = vmatprep.subr.mxu0 0.0
    %2472 = vmatpush1.xpose.msra.mxu0 0.0
    %2473 = vmatprep.subr.mxu0 0.0
    %2474 = vmatpush1.xpose.msra.mxu0 0.0
    %2475 = vmatprep.subr.mxu0 0.0
    %2476 = vmatpush1.xpose.msra.mxu0 0.0
    %2477 = vmatprep.subr.mxu0 0.0
    %2478 = vmatpush1.xpose.msra.mxu0 0.0
    %2479 = vmatprep.subr.mxu0 0.0
    %2480 = vmatpush1.xpose.msra.mxu0 0.0
    %2481 = vmatprep.subr.mxu0 0.0
    %2482 = vmatpush1.xpose.msra.mxu0 0.0
    %2483 = vmatprep.subr.mxu0 0.0
    %2484 = vmatpush1.xpose.msra.mxu0 0.0
    %2485 = vmatprep.subr.mxu0 0.0
    %2486 = vmatpush1.xpose.msra.mxu0 0.0
    %2487 = vmatprep.subr.mxu0 0.0
    %2488 = vmatpush1.xpose.msra.mxu0 0.0
    %2489 = vmatprep.subr.mxu0 0.0
    %2490 = vmatpush1.xpose.msra.mxu0 0.0
    %2491 = vmatprep.subr.mxu0 0.0
    %2492 = vmatpush1.xpose.msra.mxu0 0.0
    %2493 = vmatprep.subr.mxu0 0.0
    %2494 = vmatpush1.xpose.msra.mxu0 0.0
    %2495 = vmatprep.subr.mxu0 0.0
    %2496 = vmatpush1.xpose.msra.mxu0 0.0
    %2497 = vmatprep.subr.mxu0 0.0
    %2498 = vmatpush1.xpose.msra.mxu0 0.0
    %2499 = vmatprep.subr.mxu0 0.0
    %2500 = vmatpush1.xpose.msra.mxu0 0.0
    %2501 = vmatprep.subr.mxu0 0.0
    %2502 = vmatpush1.xpose.msra.mxu0 0.0
    %2503 = vmatprep.subr.mxu0 0.0
    %2504 = vmatpush1.xpose.msra.mxu0 0.0
    %2505 = vmatprep.subr.mxu0 0.0
    %2506 = vmatpush1.xpose.msra.mxu0 0.0
    %2507 = vmatprep.subr.mxu0 0.0
    %2508 = vmatpush1.xpose.msra.mxu0 0.0
    %2509 = vmatprep.subr.mxu0 0.0
    %2510 = vmatpush1.xpose.msra.mxu0 0.0
    %2511 = vmatprep.subr.mxu0 0.0
    %2512 = vmatpush1.xpose.msra.mxu0 0.0
    %2513 = vmatprep.subr.mxu0 0.0
    %2514 = vmatpush1.xpose.msra.mxu0 0.0
    %2515 = vmatprep.subr.mxu0 0.0
    %2516 = vmatpush1.xpose.msra.mxu0 0.0
    %2517 = vmatprep.subr.mxu0 0.0
    %2518 = vmatpush1.xpose.msra.mxu0 0.0
    %2519 = vmatprep.mubr.f32.mxu0 0.0
    %2520 = vmatmul.mubr.f32.gmra.mrb[0].mxu0 %v2450
    %v2521 = vpop.f32.mrb[0].mxu0
    %v2522 = vadd.f32 0.0, %v2521
    %v2523 = vpop.f32.mrb[0].mxu0
    %2524 = vdwg.mxu0
    %v2525 = vmul.f32 %v2522, 0.35355338
    %v2526 = vlaneseq
    %v2527 = vshrl.u32 %v2526, 7
    %v2528 = vsub.s32 1, %v2527
    %v2529 = vrot.slane %v42, %v2528
    %v2530 = vadd.f32 %v2525, %v2529
    %v2531 = vsel %vm307, %v2530, -inf
    %2532 = vmax.xlane.f32.xlu0 %v2531
    %v2533 = vpop.xlane.xlu0 %2532
    %v2534 = vsub.f32 %v2530, %v2533
    %v2535 = vmul.f32 %v2534, 1.442695
    %v2536 = vpow.pop %v2535
    %v2537 = vsel %vm307, %v2536, 0.0
    %2538 = vadd.xlane.f32.xlu0 %v2537
    %v2539 = vpop.xlane.xlu0 %2538
    %v2540 = vrcp.pop %v2539
    %v2541 = vmul.f32 %v2536, %v2540
    %s2542 = scalar_lea.vmem [#allocation4], 32
    %2543 = vst.msk [vmem:[%s2542] sm:$0xff] %vm307, %v2541
    %v2545 = vsel %vm307, %v2541, 0
    %2547 = vmatprep.subr.mxu0 0.0
    %2548 = vmatpush1.msra.mxu0 %v2279
    %2549 = vmatprep.subr.mxu0 0.0
    %2550 = vmatpush1.msra.mxu0 0.0
    %2551 = vmatprep.subr.mxu0 0.0
    %2552 = vmatpush1.msra.mxu0 0.0
    %2553 = vmatprep.subr.mxu0 0.0
    %2554 = vmatpush1.msra.mxu0 0.0
    %2555 = vmatprep.subr.mxu0 0.0
    %2556 = vmatpush1.msra.mxu0 0.0
    %2557 = vmatprep.subr.mxu0 0.0
    %2558 = vmatpush1.msra.mxu0 0.0
    %2559 = vmatprep.subr.mxu0 0.0
    %2560 = vmatpush1.msra.mxu0 0.0
    %2561 = vmatprep.subr.mxu0 0.0
    %2562 = vmatpush1.msra.mxu0 0.0
    %2563 = vmatprep.subr.mxu0 0.0
    %2564 = vmatpush1.msra.mxu0 0.0
    %2565 = vmatprep.subr.mxu0 0.0
    %2566 = vmatpush1.msra.mxu0 0.0
    %2567 = vmatprep.subr.mxu0 0.0
    %2568 = vmatpush1.msra.mxu0 0.0
    %2569 = vmatprep.subr.mxu0 0.0
    %2570 = vmatpush1.msra.mxu0 0.0
    %2571 = vmatprep.subr.mxu0 0.0
    %2572 = vmatpush1.msra.mxu0 0.0
    %2573 = vmatprep.subr.mxu0 0.0
    %2574 = vmatpush1.msra.mxu0 0.0
    %2575 = vmatprep.subr.mxu0 0.0
    %2576 = vmatpush1.msra.mxu0 0.0
    %2577 = vmatprep.subr.mxu0 0.0
    %2578 = vmatpush1.msra.mxu0 0.0
    %2579 = vmatprep.subr.mxu0 0.0
    %2580 = vmatpush1.msra.mxu0 0.0
    %2581 = vmatprep.subr.mxu0 0.0
    %2582 = vmatpush1.msra.mxu0 0.0
    %2583 = vmatprep.subr.mxu0 0.0
    %2584 = vmatpush1.msra.mxu0 0.0
    %2585 = vmatprep.subr.mxu0 0.0
    %2586 = vmatpush1.msra.mxu0 0.0
    %2587 = vmatprep.subr.mxu0 0.0
    %2588 = vmatpush1.msra.mxu0 0.0
    %2589 = vmatprep.subr.mxu0 0.0
    %2590 = vmatpush1.msra.mxu0 0.0
    %2591 = vmatprep.subr.mxu0 0.0
    %2592 = vmatpush1.msra.mxu0 0.0
    %2593 = vmatprep.subr.mxu0 0.0
    %2594 = vmatpush1.msra.mxu0 0.0
    %2595 = vmatprep.subr.mxu0 0.0
    %2596 = vmatpush1.msra.mxu0 0.0
    %2597 = vmatprep.subr.mxu0 0.0
    %2598 = vmatpush1.msra.mxu0 0.0
    %2599 = vmatprep.subr.mxu0 0.0
    %2600 = vmatpush1.msra.mxu0 0.0
    %2601 = vmatprep.subr.mxu0 0.0
    %2602 = vmatpush1.msra.mxu0 0.0
    %2603 = vmatprep.subr.mxu0 0.0
    %2604 = vmatpush1.msra.mxu0 0.0
    %2605 = vmatprep.subr.mxu0 0.0
    %2606 = vmatpush1.msra.mxu0 0.0
    %2607 = vmatprep.subr.mxu0 0.0
    %2608 = vmatpush1.msra.mxu0 0.0
    %2609 = vmatprep.subr.mxu0 0.0
    %2610 = vmatpush1.msra.mxu0 0.0
    %2611 = vmatprep.mubr.f32.mxu0 0.0
    %2612 = vmatmul.mubr.f32.gmra.mrb[0].mxu0 %v2545
    %v2613 = vpop.f32.mrb[0].mxu0
    %v2614 = vadd.f32 0.0, %v2613
    %v2615 = vpop.f32.mrb[0].mxu0
    %2616 = vdwg.mxu0
    %2617 = vrot.lane.b32.xlu0 %v2110, 120
    %v2618 = vpop.permute.xlu0 %2617
    %2619 = vrot.lane.b32.xlu0 %v2195, 120
    %v2620 = vpop.permute.xlu0 %2619
    %v2621 = vsel %vm307, %v2618, 0
    %v2623 = vsel %vm307, %v2620, 0
    %2625 = vmatprep.subr.mxu0 0.0
    %2626 = vmatpush1.xpose.msra.mxu0 %v2623
    %2627 = vmatprep.subr.mxu0 0.0
    %2628 = vmatpush1.xpose.msra.mxu0 0.0
    %2629 = vmatprep.subr.mxu0 0.0
    %2630 = vmatpush1.xpose.msra.mxu0 0.0
    %2631 = vmatprep.subr.mxu0 0.0
    %2632 = vmatpush1.xpose.msra.mxu0 0.0
    %2633 = vmatprep.subr.mxu0 0.0
    %2634 = vmatpush1.xpose.msra.mxu0 0.0
    %2635 = vmatprep.subr.mxu0 0.0
    %2636 = vmatpush1.xpose.msra.mxu0 0.0
    %2637 = vmatprep.subr.mxu0 0.0
    %2638 = vmatpush1.xpose.msra.mxu0 0.0
    %2639 = vmatprep.subr.mxu0 0.0
    %2640 = vmatpush1.xpose.msra.mxu0 0.0
    %2641 = vmatprep.subr.mxu0 0.0
    %2642 = vmatpush1.xpose.msra.mxu0 0.0
    %2643 = vmatprep.subr.mxu0 0.0
    %2644 = vmatpush1.xpose.msra.mxu0 0.0
    %2645 = vmatprep.subr.mxu0 0.0
    %2646 = vmatpush1.xpose.msra.mxu0 0.0
    %2647 = vmatprep.subr.mxu0 0.0
    %2648 = vmatpush1.xpose.msra.mxu0 0.0
    %2649 = vmatprep.subr.mxu0 0.0
    %2650 = vmatpush1.xpose.msra.mxu0 0.0
    %2651 = vmatprep.subr.mxu0 0.0
    %2652 = vmatpush1.xpose.msra.mxu0 0.0
    %2653 = vmatprep.subr.mxu0 0.0
    %2654 = vmatpush1.xpose.msra.mxu0 0.0
    %2655 = vmatprep.subr.mxu0 0.0
    %2656 = vmatpush1.xpose.msra.mxu0 0.0
    %2657 = vmatprep.subr.mxu0 0.0
    %2658 = vmatpush1.xpose.msra.mxu0 0.0
    %2659 = vmatprep.subr.mxu0 0.0
    %2660 = vmatpush1.xpose.msra.mxu0 0.0
    %2661 = vmatprep.subr.mxu0 0.0
    %2662 = vmatpush1.xpose.msra.mxu0 0.0
    %2663 = vmatprep.subr.mxu0 0.0
    %2664 = vmatpush1.xpose.msra.mxu0 0.0
    %2665 = vmatprep.subr.mxu0 0.0
    %2666 = vmatpush1.xpose.msra.mxu0 0.0
    %2667 = vmatprep.subr.mxu0 0.0
    %2668 = vmatpush1.xpose.msra.mxu0 0.0
    %2669 = vmatprep.subr.mxu0 0.0
    %2670 = vmatpush1.xpose.msra.mxu0 0.0
    %2671 = vmatprep.subr.mxu0 0.0
    %2672 = vmatpush1.xpose.msra.mxu0 0.0
    %2673 = vmatprep.subr.mxu0 0.0
    %2674 = vmatpush1.xpose.msra.mxu0 0.0
    %2675 = vmatprep.subr.mxu0 0.0
    %2676 = vmatpush1.xpose.msra.mxu0 0.0
    %2677 = vmatprep.subr.mxu0 0.0
    %2678 = vmatpush1.xpose.msra.mxu0 0.0
    %2679 = vmatprep.subr.mxu0 0.0
    %2680 = vmatpush1.xpose.msra.mxu0 0.0
    %2681 = vmatprep.subr.mxu0 0.0
    %2682 = vmatpush1.xpose.msra.mxu0 0.0
    %2683 = vmatprep.subr.mxu0 0.0
    %2684 = vmatpush1.xpose.msra.mxu0 0.0
    %2685 = vmatprep.subr.mxu0 0.0
    %2686 = vmatpush1.xpose.msra.mxu0 0.0
    %2687 = vmatprep.subr.mxu0 0.0
    %2688 = vmatpush1.xpose.msra.mxu0 0.0
    %2689 = vmatprep.mubr.f32.mxu0 0.0
    %2690 = vmatmul.mubr.f32.gmra.mrb[0].mxu0 %v2621
    %v2691 = vpop.f32.mrb[0].mxu0
    %v2692 = vadd.f32 0.0, %v2691
    %v2693 = vpop.f32.mrb[0].mxu0
    %2694 = vdwg.mxu0
    %v2695 = vmul.f32 %v2692, 0.35355338
    %v2696 = vadd.f32 %v2695, %v2362
    %v2697 = vsel %vm307, %v2696, -inf
    %2698 = vmax.xlane.f32.xlu0 %v2697
    %v2699 = vpop.xlane.xlu0 %2698
    %v2700 = vsub.f32 %v2696, %v2699
    %v2701 = vmul.f32 %v2700, 1.442695
    %v2702 = vpow.pop %v2701
    %v2703 = vsel %vm307, %v2702, 0.0
    %2704 = vadd.xlane.f32.xlu0 %v2703
    %v2705 = vpop.xlane.xlu0 %2704
    %v2706 = vrcp.pop %v2705
    %v2707 = vmul.f32 %v2702, %v2706
    %s2708 = scalar_lea.vmem [#allocation4], 8
    %2709 = vst.msk [vmem:[%s2708] sm:$0xff] %vm307, %v2707
    %2711 = vrot.lane.b32.xlu0 %v2274, 120
    %v2712 = vpop.permute.xlu0 %2711
    %v2715 = vsel %vm307, %v2707, 0
    %2717 = vmatprep.subr.mxu0 0.0
    %2718 = vmatpush1.msra.mxu0 %v2712
    %2719 = vmatprep.subr.mxu0 0.0
    %2720 = vmatpush1.msra.mxu0 0.0
    %2721 = vmatprep.subr.mxu0 0.0
    %2722 = vmatpush1.msra.mxu0 0.0
    %2723 = vmatprep.subr.mxu0 0.0
    %2724 = vmatpush1.msra.mxu0 0.0
    %2725 = vmatprep.subr.mxu0 0.0
    %2726 = vmatpush1.msra.mxu0 0.0
    %2727 = vmatprep.subr.mxu0 0.0
    %2728 = vmatpush1.msra.mxu0 0.0
    %2729 = vmatprep.subr.mxu0 0.0
    %2730 = vmatpush1.msra.mxu0 0.0
    %2731 = vmatprep.subr.mxu0 0.0
    %2732 = vmatpush1.msra.mxu0 0.0
    %2733 = vmatprep.subr.mxu0 0.0
    %2734 = vmatpush1.msra.mxu0 0.0
    %2735 = vmatprep.subr.mxu0 0.0
    %2736 = vmatpush1.msra.mxu0 0.0
    %2737 = vmatprep.subr.mxu0 0.0
    %2738 = vmatpush1.msra.mxu0 0.0
    %2739 = vmatprep.subr.mxu0 0.0
    %2740 = vmatpush1.msra.mxu0 0.0
    %2741 = vmatprep.subr.mxu0 0.0
    %2742 = vmatpush1.msra.mxu0 0.0
    %2743 = vmatprep.subr.mxu0 0.0
    %2744 = vmatpush1.msra.mxu0 0.0
    %2745 = vmatprep.subr.mxu0 0.0
    %2746 = vmatpush1.msra.mxu0 0.0
    %2747 = vmatprep.subr.mxu0 0.0
    %2748 = vmatpush1.msra.mxu0 0.0
    %2749 = vmatprep.subr.mxu0 0.0
    %2750 = vmatpush1.msra.mxu0 0.0
    %2751 = vmatprep.subr.mxu0 0.0
    %2752 = vmatpush1.msra.mxu0 0.0
    %2753 = vmatprep.subr.mxu0 0.0
    %2754 = vmatpush1.msra.mxu0 0.0
    %2755 = vmatprep.subr.mxu0 0.0
    %2756 = vmatpush1.msra.mxu0 0.0
    %2757 = vmatprep.subr.mxu0 0.0
    %2758 = vmatpush1.msra.mxu0 0.0
    %2759 = vmatprep.subr.mxu0 0.0
    %2760 = vmatpush1.msra.mxu0 0.0
    %2761 = vmatprep.subr.mxu0 0.0
    %2762 = vmatpush1.msra.mxu0 0.0
    %2763 = vmatprep.subr.mxu0 0.0
    %2764 = vmatpush1.msra.mxu0 0.0
    %2765 = vmatprep.subr.mxu0 0.0
    %2766 = vmatpush1.msra.mxu0 0.0
    %2767 = vmatprep.subr.mxu0 0.0
    %2768 = vmatpush1.msra.mxu0 0.0
    %2769 = vmatprep.subr.mxu0 0.0
    %2770 = vmatpush1.msra.mxu0 0.0
    %2771 = vmatprep.subr.mxu0 0.0
    %2772 = vmatpush1.msra.mxu0 0.0
    %2773 = vmatprep.subr.mxu0 0.0
    %2774 = vmatpush1.msra.mxu0 0.0
    %2775 = vmatprep.subr.mxu0 0.0
    %2776 = vmatpush1.msra.mxu0 0.0
    %2777 = vmatprep.subr.mxu0 0.0
    %2778 = vmatpush1.msra.mxu0 0.0
    %2779 = vmatprep.subr.mxu0 0.0
    %2780 = vmatpush1.msra.mxu0 0.0
    %2781 = vmatprep.mubr.f32.mxu0 0.0
    %2782 = vmatmul.mubr.f32.gmra.mrb[0].mxu0 %v2715
    %v2783 = vpop.f32.mrb[0].mxu0
    %v2784 = vadd.f32 0.0, %v2783
    %v2785 = vpop.f32.mrb[0].mxu0
    %2786 = vdwg.mxu0
    %2787 = vrot.lane.b32.xlu0 %v2115, 120
    %v2788 = vpop.permute.xlu0 %2787
    %2789 = vrot.lane.b32.xlu0 %v2200, 120
    %v2790 = vpop.permute.xlu0 %2789
    %v2791 = vsel %vm307, %v2788, 0
    %v2793 = vsel %vm307, %v2790, 0
    %2795 = vmatprep.subr.mxu0 0.0
    %2796 = vmatpush1.xpose.msra.mxu0 %v2793
    %2797 = vmatprep.subr.mxu0 0.0
    %2798 = vmatpush1.xpose.msra.mxu0 0.0
    %2799 = vmatprep.subr.mxu0 0.0
    %2800 = vmatpush1.xpose.msra.mxu0 0.0
    %2801 = vmatprep.subr.mxu0 0.0
    %2802 = vmatpush1.xpose.msra.mxu0 0.0
    %2803 = vmatprep.subr.mxu0 0.0
    %2804 = vmatpush1.xpose.msra.mxu0 0.0
    %2805 = vmatprep.subr.mxu0 0.0
    %2806 = vmatpush1.xpose.msra.mxu0 0.0
    %2807 = vmatprep.subr.mxu0 0.0
    %2808 = vmatpush1.xpose.msra.mxu0 0.0
    %2809 = vmatprep.subr.mxu0 0.0
    %2810 = vmatpush1.xpose.msra.mxu0 0.0
    %2811 = vmatprep.subr.mxu0 0.0
    %2812 = vmatpush1.xpose.msra.mxu0 0.0
    %2813 = vmatprep.subr.mxu0 0.0
    %2814 = vmatpush1.xpose.msra.mxu0 0.0
    %2815 = vmatprep.subr.mxu0 0.0
    %2816 = vmatpush1.xpose.msra.mxu0 0.0
    %2817 = vmatprep.subr.mxu0 0.0
    %2818 = vmatpush1.xpose.msra.mxu0 0.0
    %2819 = vmatprep.subr.mxu0 0.0
    %2820 = vmatpush1.xpose.msra.mxu0 0.0
    %2821 = vmatprep.subr.mxu0 0.0
    %2822 = vmatpush1.xpose.msra.mxu0 0.0
    %2823 = vmatprep.subr.mxu0 0.0
    %2824 = vmatpush1.xpose.msra.mxu0 0.0
    %2825 = vmatprep.subr.mxu0 0.0
    %2826 = vmatpush1.xpose.msra.mxu0 0.0
    %2827 = vmatprep.subr.mxu0 0.0
    %2828 = vmatpush1.xpose.msra.mxu0 0.0
    %2829 = vmatprep.subr.mxu0 0.0
    %2830 = vmatpush1.xpose.msra.mxu0 0.0
    %2831 = vmatprep.subr.mxu0 0.0
    %2832 = vmatpush1.xpose.msra.mxu0 0.0
    %2833 = vmatprep.subr.mxu0 0.0
    %2834 = vmatpush1.xpose.msra.mxu0 0.0
    %2835 = vmatprep.subr.mxu0 0.0
    %2836 = vmatpush1.xpose.msra.mxu0 0.0
    %2837 = vmatprep.subr.mxu0 0.0
    %2838 = vmatpush1.xpose.msra.mxu0 0.0
    %2839 = vmatprep.subr.mxu0 0.0
    %2840 = vmatpush1.xpose.msra.mxu0 0.0
    %2841 = vmatprep.subr.mxu0 0.0
    %2842 = vmatpush1.xpose.msra.mxu0 0.0
    %2843 = vmatprep.subr.mxu0 0.0
    %2844 = vmatpush1.xpose.msra.mxu0 0.0
    %2845 = vmatprep.subr.mxu0 0.0
    %2846 = vmatpush1.xpose.msra.mxu0 0.0
    %2847 = vmatprep.subr.mxu0 0.0
    %2848 = vmatpush1.xpose.msra.mxu0 0.0
    %2849 = vmatprep.subr.mxu0 0.0
    %2850 = vmatpush1.xpose.msra.mxu0 0.0
    %2851 = vmatprep.subr.mxu0 0.0
    %2852 = vmatpush1.xpose.msra.mxu0 0.0
    %2853 = vmatprep.subr.mxu0 0.0
    %2854 = vmatpush1.xpose.msra.mxu0 0.0
    %2855 = vmatprep.subr.mxu0 0.0
    %2856 = vmatpush1.xpose.msra.mxu0 0.0
    %2857 = vmatprep.subr.mxu0 0.0
    %2858 = vmatpush1.xpose.msra.mxu0 0.0
    %2859 = vmatprep.mubr.f32.mxu0 0.0
    %2860 = vmatmul.mubr.f32.gmra.mrb[0].mxu0 %v2791
    %v2861 = vpop.f32.mrb[0].mxu0
    %v2862 = vadd.f32 0.0, %v2861
    %v2863 = vpop.f32.mrb[0].mxu0
    %2864 = vdwg.mxu0
    %v2865 = vmul.f32 %v2862, 0.35355338
    %v2866 = vadd.f32 %v2865, %v2529
    %v2867 = vsel %vm307, %v2866, -inf
    %2868 = vmax.xlane.f32.xlu0 %v2867
    %v2869 = vpop.xlane.xlu0 %2868
    %v2870 = vsub.f32 %v2866, %v2869
    %v2871 = vmul.f32 %v2870, 1.442695
    %v2872 = vpow.pop %v2871
    %v2873 = vsel %vm307, %v2872, 0.0
    %2874 = vadd.xlane.f32.xlu0 %v2873
    %v2875 = vpop.xlane.xlu0 %2874
    %v2876 = vrcp.pop %v2875
    %v2877 = vmul.f32 %v2872, %v2876
    %s2878 = scalar_lea.vmem [#allocation4], 40
    %2879 = vst.msk [vmem:[%s2878] sm:$0xff] %vm307, %v2877
    %2881 = vrot.lane.b32.xlu0 %v2279, 120
    %v2882 = vpop.permute.xlu0 %2881
    %v2885 = vsel %vm307, %v2877, 0
    %2887 = vmatprep.subr.mxu0 0.0
    %2888 = vmatpush1.msra.mxu0 %v2882
    %2889 = vmatprep.subr.mxu0 0.0
    %2890 = vmatpush1.msra.mxu0 0.0
    %2891 = vmatprep.subr.mxu0 0.0
    %2892 = vmatpush1.msra.mxu0 0.0
    %2893 = vmatprep.subr.mxu0 0.0
    %2894 = vmatpush1.msra.mxu0 0.0
    %2895 = vmatprep.subr.mxu0 0.0
    %2896 = vmatpush1.msra.mxu0 0.0
    %2897 = vmatprep.subr.mxu0 0.0
    %2898 = vmatpush1.msra.mxu0 0.0
    %2899 = vmatprep.subr.mxu0 0.0
    %2900 = vmatpush1.msra.mxu0 0.0
    %2901 = vmatprep.subr.mxu0 0.0
    %2902 = vmatpush1.msra.mxu0 0.0
    %2903 = vmatprep.subr.mxu0 0.0
    %2904 = vmatpush1.msra.mxu0 0.0
    %2905 = vmatprep.subr.mxu0 0.0
    %2906 = vmatpush1.msra.mxu0 0.0
    %2907 = vmatprep.subr.mxu0 0.0
    %2908 = vmatpush1.msra.mxu0 0.0
    %2909 = vmatprep.subr.mxu0 0.0
    %2910 = vmatpush1.msra.mxu0 0.0
    %2911 = vmatprep.subr.mxu0 0.0
    %2912 = vmatpush1.msra.mxu0 0.0
    %2913 = vmatprep.subr.mxu0 0.0
    %2914 = vmatpush1.msra.mxu0 0.0
    %2915 = vmatprep.subr.mxu0 0.0
    %2916 = vmatpush1.msra.mxu0 0.0
    %2917 = vmatprep.subr.mxu0 0.0
    %2918 = vmatpush1.msra.mxu0 0.0
    %2919 = vmatprep.subr.mxu0 0.0
    %2920 = vmatpush1.msra.mxu0 0.0
    %2921 = vmatprep.subr.mxu0 0.0
    %2922 = vmatpush1.msra.mxu0 0.0
    %2923 = vmatprep.subr.mxu0 0.0
    %2924 = vmatpush1.msra.mxu0 0.0
    %2925 = vmatprep.subr.mxu0 0.0
    %2926 = vmatpush1.msra.mxu0 0.0
    %2927 = vmatprep.subr.mxu0 0.0
    %2928 = vmatpush1.msra.mxu0 0.0
    %2929 = vmatprep.subr.mxu0 0.0
    %2930 = vmatpush1.msra.mxu0 0.0
    %2931 = vmatprep.subr.mxu0 0.0
    %2932 = vmatpush1.msra.mxu0 0.0
    %2933 = vmatprep.subr.mxu0 0.0
    %2934 = vmatpush1.msra.mxu0 0.0
    %2935 = vmatprep.subr.mxu0 0.0
    %2936 = vmatpush1.msra.mxu0 0.0
    %2937 = vmatprep.subr.mxu0 0.0
    %2938 = vmatpush1.msra.mxu0 0.0
    %2939 = vmatprep.subr.mxu0 0.0
    %2940 = vmatpush1.msra.mxu0 0.0
    %2941 = vmatprep.subr.mxu0 0.0
    %2942 = vmatpush1.msra.mxu0 0.0
    %2943 = vmatprep.subr.mxu0 0.0
    %2944 = vmatpush1.msra.mxu0 0.0
    %2945 = vmatprep.subr.mxu0 0.0
    %2946 = vmatpush1.msra.mxu0 0.0
    %2947 = vmatprep.subr.mxu0 0.0
    %2948 = vmatpush1.msra.mxu0 0.0
    %2949 = vmatprep.subr.mxu0 0.0
    %2950 = vmatpush1.msra.mxu0 0.0
    %2951 = vmatprep.mubr.f32.mxu0 0.0
    %2952 = vmatmul.mubr.f32.gmra.mrb[0].mxu0 %v2885
    %v2953 = vpop.f32.mrb[0].mxu0
    %v2954 = vadd.f32 0.0, %v2953
    %v2955 = vpop.f32.mrb[0].mxu0
    %2956 = vdwg.mxu0
    %v2958 = vsel %vm307, %v2784, 0
    %v2961 = vsel %vm307, %v2954, 0
    %2963 = vmatprep.subr.mxu0 0.0
    %2964 = vmatpush1.msra.mxu0 %v2026
    %2965 = vmatprep.subr.mxu0 0.0
    %2966 = vmatpush1.msra.mxu0 0.0
    %2967 = vmatprep.subr.mxu0 0.0
    %2968 = vmatpush1.msra.mxu0 0.0
    %2969 = vmatprep.subr.mxu0 0.0
    %2970 = vmatpush1.msra.mxu0 0.0
    %2971 = vmatprep.subr.mxu0 0.0
    %2972 = vmatpush1.msra.mxu0 0.0
    %2973 = vmatprep.subr.mxu0 0.0
    %2974 = vmatpush1.msra.mxu0 0.0
    %2975 = vmatprep.subr.mxu0 0.0
    %2976 = vmatpush1.msra.mxu0 0.0
    %2977 = vmatprep.subr.mxu0 0.0
    %2978 = vmatpush1.msra.mxu0 0.0
    %2979 = vmatprep.subr.mxu0 0.0
    %2980 = vmatpush1.msra.mxu0 0.0
    %2981 = vmatprep.subr.mxu0 0.0
    %2982 = vmatpush1.msra.mxu0 0.0
    %2983 = vmatprep.subr.mxu0 0.0
    %2984 = vmatpush1.msra.mxu0 0.0
    %2985 = vmatprep.subr.mxu0 0.0
    %2986 = vmatpush1.msra.mxu0 0.0
    %2987 = vmatprep.subr.mxu0 0.0
    %2988 = vmatpush1.msra.mxu0 0.0
    %2989 = vmatprep.subr.mxu0 0.0
    %2990 = vmatpush1.msra.mxu0 0.0
    %2991 = vmatprep.subr.mxu0 0.0
    %2992 = vmatpush1.msra.mxu0 0.0
    %2993 = vmatprep.subr.mxu0 0.0
    %2994 = vmatpush1.msra.mxu0 0.0
    %2995 = vmatprep.subr.mxu0 0.0
    %2996 = vmatpush1.msra.mxu0 0.0
    %2997 = vmatprep.subr.mxu0 0.0
    %2998 = vmatpush1.msra.mxu0 0.0
    %2999 = vmatprep.subr.mxu0 0.0
    %3000 = vmatpush1.msra.mxu0 0.0
    %3001 = vmatprep.subr.mxu0 0.0
    %3002 = vmatpush1.msra.mxu0 0.0
    %3003 = vmatprep.subr.mxu0 0.0
    %3004 = vmatpush1.msra.mxu0 0.0
    %3005 = vmatprep.subr.mxu0 0.0
    %3006 = vmatpush1.msra.mxu0 0.0
    %3007 = vmatprep.subr.mxu0 0.0
    %3008 = vmatpush1.msra.mxu0 0.0
    %3009 = vmatprep.subr.mxu0 0.0
    %3010 = vmatpush1.msra.mxu0 0.0
    %3011 = vmatprep.subr.mxu0 0.0
    %3012 = vmatpush1.msra.mxu0 0.0
    %3013 = vmatprep.subr.mxu0 0.0
    %3014 = vmatpush1.msra.mxu0 0.0
    %3015 = vmatprep.subr.mxu0 0.0
    %3016 = vmatpush1.msra.mxu0 0.0
    %3017 = vmatprep.subr.mxu0 0.0
    %3018 = vmatpush1.msra.mxu0 0.0
    %3019 = vmatprep.subr.mxu0 0.0
    %3020 = vmatpush1.msra.mxu0 0.0
    %3021 = vmatprep.subr.mxu0 0.0
    %3022 = vmatpush1.msra.mxu0 0.0
    %3023 = vmatprep.subr.mxu0 0.0
    %3024 = vmatpush1.msra.mxu0 0.0
    %3025 = vmatprep.subr.mxu0 0.0
    %3026 = vmatpush1.msra.mxu0 0.0
    %3027 = vmatprep.mubr.f32.mxu0 0.0
    %3028 = vmatmul.mubr.f32.gmra.mrb[0].mxu0 %v2958
    %v3029 = vpop.f32.mrb[0].mxu0
    %v3030 = vadd.f32 0.0, %v3029
    %v3031 = vpop.f32.mrb[0].mxu0
    %3032 = vmatprep.mubr.f32.mxu0 0.0
    %3033 = vmatmul.mubr.f32.gmra.mrb[0].mxu0 %v2961
    %v3034 = vpop.f32.mrb[0].mxu0
    %v3035 = vadd.f32 0.0, %v3034
    %v3036 = vpop.f32.mrb[0].mxu0
    %3037 = vdwg.mxu0
    %v3039 = vsel %vm307, %v2446, 0
    %v3042 = vsel %vm307, %v2614, 0
    %3044 = vmatprep.subr.mxu0 0.0
    %3045 = vmatpush1.msra.mxu0 %v2025
    %3046 = vmatprep.subr.mxu0 0.0
    %3047 = vmatpush1.msra.mxu0 0.0
    %3048 = vmatprep.subr.mxu0 0.0
    %3049 = vmatpush1.msra.mxu0 0.0
    %3050 = vmatprep.subr.mxu0 0.0
    %3051 = vmatpush1.msra.mxu0 0.0
    %3052 = vmatprep.subr.mxu0 0.0
    %3053 = vmatpush1.msra.mxu0 0.0
    %3054 = vmatprep.subr.mxu0 0.0
    %3055 = vmatpush1.msra.mxu0 0.0
    %3056 = vmatprep.subr.mxu0 0.0
    %3057 = vmatpush1.msra.mxu0 0.0
    %3058 = vmatprep.subr.mxu0 0.0
    %3059 = vmatpush1.msra.mxu0 0.0
    %3060 = vmatprep.subr.mxu0 0.0
    %3061 = vmatpush1.msra.mxu0 0.0
    %3062 = vmatprep.subr.mxu0 0.0
    %3063 = vmatpush1.msra.mxu0 0.0
    %3064 = vmatprep.subr.mxu0 0.0
    %3065 = vmatpush1.msra.mxu0 0.0
    %3066 = vmatprep.subr.mxu0 0.0
    %3067 = vmatpush1.msra.mxu0 0.0
    %3068 = vmatprep.subr.mxu0 0.0
    %3069 = vmatpush1.msra.mxu0 0.0
    %3070 = vmatprep.subr.mxu0 0.0
    %3071 = vmatpush1.msra.mxu0 0.0
    %3072 = vmatprep.subr.mxu0 0.0
    %3073 = vmatpush1.msra.mxu0 0.0
    %3074 = vmatprep.subr.mxu0 0.0
    %3075 = vmatpush1.msra.mxu0 0.0
    %3076 = vmatprep.subr.mxu0 0.0
    %3077 = vmatpush1.msra.mxu0 0.0
    %3078 = vmatprep.subr.mxu0 0.0
    %3079 = vmatpush1.msra.mxu0 0.0
    %3080 = vmatprep.subr.mxu0 0.0
    %3081 = vmatpush1.msra.mxu0 0.0
    %3082 = vmatprep.subr.mxu0 0.0
    %3083 = vmatpush1.msra.mxu0 0.0
    %3084 = vmatprep.subr.mxu0 0.0
    %3085 = vmatpush1.msra.mxu0 0.0
    %3086 = vmatprep.subr.mxu0 0.0
    %3087 = vmatpush1.msra.mxu0 0.0
    %3088 = vmatprep.subr.mxu0 0.0
    %3089 = vmatpush1.msra.mxu0 0.0
    %3090 = vmatprep.subr.mxu0 0.0
    %3091 = vmatpush1.msra.mxu0 0.0
    %3092 = vmatprep.subr.mxu0 0.0
    %3093 = vmatpush1.msra.mxu0 0.0
    %3094 = vmatprep.subr.mxu0 0.0
    %3095 = vmatpush1.msra.mxu0 0.0
    %3096 = vmatprep.subr.mxu0 0.0
    %3097 = vmatpush1.msra.mxu0 0.0
    %3098 = vmatprep.subr.mxu0 0.0
    %3099 = vmatpush1.msra.mxu0 0.0
    %3100 = vmatprep.subr.mxu0 0.0
    %3101 = vmatpush1.msra.mxu0 0.0
    %3102 = vmatprep.subr.mxu0 0.0
    %3103 = vmatpush1.msra.mxu0 0.0
    %3104 = vmatprep.subr.mxu0 0.0
    %3105 = vmatpush1.msra.mxu0 0.0
    %3106 = vmatprep.subr.mxu0 0.0
    %3107 = vmatpush1.msra.mxu0 0.0
    %3108 = vmatprep.mubr.f32.mxu0 0.0
    %3109 = vmatmul.mubr.f32.gmra.mrb[0].mxu0 %v3039
    %v3110 = vpop.f32.mrb[0].mxu0
    %v3111 = vadd.f32 %v3030, %v3110
    %v3112 = vpop.f32.mrb[0].mxu0
    %3113 = vmatprep.mubr.f32.mxu0 0.0
    %3114 = vmatmul.mubr.f32.gmra.mrb[0].mxu0 %v3042
    %v3115 = vpop.f32.mrb[0].mxu0
    %v3116 = vadd.f32 %v3035, %v3115
    %v3117 = vpop.f32.mrb[0].mxu0
    %3118 = vdwg.mxu0
    %3119 = vrot.lane.b32.xlu0 %v2110, 112
    %v3120 = vpop.permute.xlu0 %3119
    %3121 = vrot.lane.b32.xlu0 %v2195, 112
    %v3122 = vpop.permute.xlu0 %3121
    %v3123 = vsel %vm307, %v3120, 0
    %v3125 = vsel %vm307, %v3122, 0
    %3127 = vmatprep.subr.mxu0 0.0
    %3128 = vmatpush1.xpose.msra.mxu0 %v3125
    %3129 = vmatprep.subr.mxu0 0.0
    %3130 = vmatpush1.xpose.msra.mxu0 0.0
    %3131 = vmatprep.subr.mxu0 0.0
    %3132 = vmatpush1.xpose.msra.mxu0 0.0
    %3133 = vmatprep.subr.mxu0 0.0
    %3134 = vmatpush1.xpose.msra.mxu0 0.0
    %3135 = vmatprep.subr.mxu0 0.0
    %3136 = vmatpush1.xpose.msra.mxu0 0.0
    %3137 = vmatprep.subr.mxu0 0.0
    %3138 = vmatpush1.xpose.msra.mxu0 0.0
    %3139 = vmatprep.subr.mxu0 0.0
    %3140 = vmatpush1.xpose.msra.mxu0 0.0
    %3141 = vmatprep.subr.mxu0 0.0
    %3142 = vmatpush1.xpose.msra.mxu0 0.0
    %3143 = vmatprep.subr.mxu0 0.0
    %3144 = vmatpush1.xpose.msra.mxu0 0.0
    %3145 = vmatprep.subr.mxu0 0.0
    %3146 = vmatpush1.xpose.msra.mxu0 0.0
    %3147 = vmatprep.subr.mxu0 0.0
    %3148 = vmatpush1.xpose.msra.mxu0 0.0
    %3149 = vmatprep.subr.mxu0 0.0
    %3150 = vmatpush1.xpose.msra.mxu0 0.0
    %3151 = vmatprep.subr.mxu0 0.0
    %3152 = vmatpush1.xpose.msra.mxu0 0.0
    %3153 = vmatprep.subr.mxu0 0.0
    %3154 = vmatpush1.xpose.msra.mxu0 0.0
    %3155 = vmatprep.subr.mxu0 0.0
    %3156 = vmatpush1.xpose.msra.mxu0 0.0
    %3157 = vmatprep.subr.mxu0 0.0
    %3158 = vmatpush1.xpose.msra.mxu0 0.0
    %3159 = vmatprep.subr.mxu0 0.0
    %3160 = vmatpush1.xpose.msra.mxu0 0.0
    %3161 = vmatprep.subr.mxu0 0.0
    %3162 = vmatpush1.xpose.msra.mxu0 0.0
    %3163 = vmatprep.subr.mxu0 0.0
    %3164 = vmatpush1.xpose.msra.mxu0 0.0
    %3165 = vmatprep.subr.mxu0 0.0
    %3166 = vmatpush1.xpose.msra.mxu0 0.0
    %3167 = vmatprep.subr.mxu0 0.0
    %3168 = vmatpush1.xpose.msra.mxu0 0.0
    %3169 = vmatprep.subr.mxu0 0.0
    %3170 = vmatpush1.xpose.msra.mxu0 0.0
    %3171 = vmatprep.subr.mxu0 0.0
    %3172 = vmatpush1.xpose.msra.mxu0 0.0
    %3173 = vmatprep.subr.mxu0 0.0
    %3174 = vmatpush1.xpose.msra.mxu0 0.0
    %3175 = vmatprep.subr.mxu0 0.0
    %3176 = vmatpush1.xpose.msra.mxu0 0.0
    %3177 = vmatprep.subr.mxu0 0.0
    %3178 = vmatpush1.xpose.msra.mxu0 0.0
    %3179 = vmatprep.subr.mxu0 0.0
    %3180 = vmatpush1.xpose.msra.mxu0 0.0
    %3181 = vmatprep.subr.mxu0 0.0
    %3182 = vmatpush1.xpose.msra.mxu0 0.0
    %3183 = vmatprep.subr.mxu0 0.0
    %3184 = vmatpush1.xpose.msra.mxu0 0.0
    %3185 = vmatprep.subr.mxu0 0.0
    %3186 = vmatpush1.xpose.msra.mxu0 0.0
    %3187 = vmatprep.subr.mxu0 0.0
    %3188 = vmatpush1.xpose.msra.mxu0 0.0
    %3189 = vmatprep.subr.mxu0 0.0
    %3190 = vmatpush1.xpose.msra.mxu0 0.0
    %3191 = vmatprep.mubr.f32.mxu0 0.0
    %3192 = vmatmul.mubr.f32.gmra.mrb[0].mxu0 %v3123
    %v3193 = vpop.f32.mrb[0].mxu0
    %v3194 = vadd.f32 0.0, %v3193
    %v3195 = vpop.f32.mrb[0].mxu0
    %3196 = vdwg.mxu0
    %v3197 = vmul.f32 %v3194, 0.35355338
    %v3198 = vadd.f32 %v3197, %v2362
    %v3199 = vsel %vm307, %v3198, -inf
    %3200 = vmax.xlane.f32.xlu0 %v3199
    %v3201 = vpop.xlane.xlu0 %3200
    %v3202 = vsub.f32 %v3198, %v3201
    %v3203 = vmul.f32 %v3202, 1.442695
    %v3204 = vpow.pop %v3203
    %v3205 = vsel %vm307, %v3204, 0.0
    %3206 = vadd.xlane.f32.xlu0 %v3205
    %v3207 = vpop.xlane.xlu0 %3206
    %v3208 = vrcp.pop %v3207
    %v3209 = vmul.f32 %v3204, %v3208
    %s3210 = scalar_lea.vmem [#allocation4], 16
    %3211 = vst.msk [vmem:[%s3210] sm:$0xff] %vm307, %v3209
    %3212 = vrot.lane.b32.xlu0 %v2274, 112
    %v3213 = vpop.permute.xlu0 %3212
    %v3216 = vsel %vm307, %v3209, 0
    %3218 = vmatprep.subr.mxu0 0.0
    %3219 = vmatpush1.msra.mxu0 %v3213
    %3220 = vmatprep.subr.mxu0 0.0
    %3221 = vmatpush1.msra.mxu0 0.0
    %3222 = vmatprep.subr.mxu0 0.0
    %3223 = vmatpush1.msra.mxu0 0.0
    %3224 = vmatprep.subr.mxu0 0.0
    %3225 = vmatpush1.msra.mxu0 0.0
    %3226 = vmatprep.subr.mxu0 0.0
    %3227 = vmatpush1.msra.mxu0 0.0
    %3228 = vmatprep.subr.mxu0 0.0
    %3229 = vmatpush1.msra.mxu0 0.0
    %3230 = vmatprep.subr.mxu0 0.0
    %3231 = vmatpush1.msra.mxu0 0.0
    %3232 = vmatprep.subr.mxu0 0.0
    %3233 = vmatpush1.msra.mxu0 0.0
    %3234 = vmatprep.subr.mxu0 0.0
    %3235 = vmatpush1.msra.mxu0 0.0
    %3236 = vmatprep.subr.mxu0 0.0
    %3237 = vmatpush1.msra.mxu0 0.0
    %3238 = vmatprep.subr.mxu0 0.0
    %3239 = vmatpush1.msra.mxu0 0.0
    %3240 = vmatprep.subr.mxu0 0.0
    %3241 = vmatpush1.msra.mxu0 0.0
    %3242 = vmatprep.subr.mxu0 0.0
    %3243 = vmatpush1.msra.mxu0 0.0
    %3244 = vmatprep.subr.mxu0 0.0
    %3245 = vmatpush1.msra.mxu0 0.0
    %3246 = vmatprep.subr.mxu0 0.0
    %3247 = vmatpush1.msra.mxu0 0.0
    %3248 = vmatprep.subr.mxu0 0.0
    %3249 = vmatpush1.msra.mxu0 0.0
    %3250 = vmatprep.subr.mxu0 0.0
    %3251 = vmatpush1.msra.mxu0 0.0
    %3252 = vmatprep.subr.mxu0 0.0
    %3253 = vmatpush1.msra.mxu0 0.0
    %3254 = vmatprep.subr.mxu0 0.0
    %3255 = vmatpush1.msra.mxu0 0.0
    %3256 = vmatprep.subr.mxu0 0.0
    %3257 = vmatpush1.msra.mxu0 0.0
    %3258 = vmatprep.subr.mxu0 0.0
    %3259 = vmatpush1.msra.mxu0 0.0
    %3260 = vmatprep.subr.mxu0 0.0
    %3261 = vmatpush1.msra.mxu0 0.0
    %3262 = vmatprep.subr.mxu0 0.0
    %3263 = vmatpush1.msra.mxu0 0.0
    %3264 = vmatprep.subr.mxu0 0.0
    %3265 = vmatpush1.msra.mxu0 0.0
    %3266 = vmatprep.subr.mxu0 0.0
    %3267 = vmatpush1.msra.mxu0 0.0
    %3268 = vmatprep.subr.mxu0 0.0
    %3269 = vmatpush1.msra.mxu0 0.0
    %3270 = vmatprep.subr.mxu0 0.0
    %3271 = vmatpush1.msra.mxu0 0.0
    %3272 = vmatprep.subr.mxu0 0.0
    %3273 = vmatpush1.msra.mxu0 0.0
    %3274 = vmatprep.subr.mxu0 0.0
    %3275 = vmatpush1.msra.mxu0 0.0
    %3276 = vmatprep.subr.mxu0 0.0
    %3277 = vmatpush1.msra.mxu0 0.0
    %3278 = vmatprep.subr.mxu0 0.0
    %3279 = vmatpush1.msra.mxu0 0.0
    %3280 = vmatprep.subr.mxu0 0.0
    %3281 = vmatpush1.msra.mxu0 0.0
    %3282 = vmatprep.mubr.f32.mxu0 0.0
    %3283 = vmatmul.mubr.f32.gmra.mrb[0].mxu0 %v3216
    %v3284 = vpop.f32.mrb[0].mxu0
    %v3285 = vadd.f32 0.0, %v3284
    %v3286 = vpop.f32.mrb[0].mxu0
    %3287 = vdwg.mxu0
    %3288 = vrot.lane.b32.xlu0 %v2115, 112
    %v3289 = vpop.permute.xlu0 %3288
    %3290 = vrot.lane.b32.xlu0 %v2200, 112
    %v3291 = vpop.permute.xlu0 %3290
    %v3292 = vsel %vm307, %v3289, 0
    %v3294 = vsel %vm307, %v3291, 0
    %3296 = vmatprep.subr.mxu0 0.0
    %3297 = vmatpush1.xpose.msra.mxu0 %v3294
    %3298 = vmatprep.subr.mxu0 0.0
    %3299 = vmatpush1.xpose.msra.mxu0 0.0
    %3300 = vmatprep.subr.mxu0 0.0
    %3301 = vmatpush1.xpose.msra.mxu0 0.0
    %3302 = vmatprep.subr.mxu0 0.0
    %3303 = vmatpush1.xpose.msra.mxu0 0.0
    %3304 = vmatprep.subr.mxu0 0.0
    %3305 = vmatpush1.xpose.msra.mxu0 0.0
    %3306 = vmatprep.subr.mxu0 0.0
    %3307 = vmatpush1.xpose.msra.mxu0 0.0
    %3308 = vmatprep.subr.mxu0 0.0
    %3309 = vmatpush1.xpose.msra.mxu0 0.0
    %3310 = vmatprep.subr.mxu0 0.0
    %3311 = vmatpush1.xpose.msra.mxu0 0.0
    %3312 = vmatprep.subr.mxu0 0.0
    %3313 = vmatpush1.xpose.msra.mxu0 0.0
    %3314 = vmatprep.subr.mxu0 0.0
    %3315 = vmatpush1.xpose.msra.mxu0 0.0
    %3316 = vmatprep.subr.mxu0 0.0
    %3317 = vmatpush1.xpose.msra.mxu0 0.0
    %3318 = vmatprep.subr.mxu0 0.0
    %3319 = vmatpush1.xpose.msra.mxu0 0.0
    %3320 = vmatprep.subr.mxu0 0.0
    %3321 = vmatpush1.xpose.msra.mxu0 0.0
    %3322 = vmatprep.subr.mxu0 0.0
    %3323 = vmatpush1.xpose.msra.mxu0 0.0
    %3324 = vmatprep.subr.mxu0 0.0
    %3325 = vmatpush1.xpose.msra.mxu0 0.0
    %3326 = vmatprep.subr.mxu0 0.0
    %3327 = vmatpush1.xpose.msra.mxu0 0.0
    %3328 = vmatprep.subr.mxu0 0.0
    %3329 = vmatpush1.xpose.msra.mxu0 0.0
    %3330 = vmatprep.subr.mxu0 0.0
    %3331 = vmatpush1.xpose.msra.mxu0 0.0
    %3332 = vmatprep.subr.mxu0 0.0
    %3333 = vmatpush1.xpose.msra.mxu0 0.0
    %3334 = vmatprep.subr.mxu0 0.0
    %3335 = vmatpush1.xpose.msra.mxu0 0.0
    %3336 = vmatprep.subr.mxu0 0.0
    %3337 = vmatpush1.xpose.msra.mxu0 0.0
    %3338 = vmatprep.subr.mxu0 0.0
    %3339 = vmatpush1.xpose.msra.mxu0 0.0
    %3340 = vmatprep.subr.mxu0 0.0
    %3341 = vmatpush1.xpose.msra.mxu0 0.0
    %3342 = vmatprep.subr.mxu0 0.0
    %3343 = vmatpush1.xpose.msra.mxu0 0.0
    %3344 = vmatprep.subr.mxu0 0.0
    %3345 = vmatpush1.xpose.msra.mxu0 0.0
    %3346 = vmatprep.subr.mxu0 0.0
    %3347 = vmatpush1.xpose.msra.mxu0 0.0
    %3348 = vmatprep.subr.mxu0 0.0
    %3349 = vmatpush1.xpose.msra.mxu0 0.0
    %3350 = vmatprep.subr.mxu0 0.0
    %3351 = vmatpush1.xpose.msra.mxu0 0.0
    %3352 = vmatprep.subr.mxu0 0.0
    %3353 = vmatpush1.xpose.msra.mxu0 0.0
    %3354 = vmatprep.subr.mxu0 0.0
    %3355 = vmatpush1.xpose.msra.mxu0 0.0
    %3356 = vmatprep.subr.mxu0 0.0
    %3357 = vmatpush1.xpose.msra.mxu0 0.0
    %3358 = vmatprep.subr.mxu0 0.0
    %3359 = vmatpush1.xpose.msra.mxu0 0.0
    %3360 = vmatprep.mubr.f32.mxu0 0.0
    %3361 = vmatmul.mubr.f32.gmra.mrb[0].mxu0 %v3292
    %v3362 = vpop.f32.mrb[0].mxu0
    %v3363 = vadd.f32 0.0, %v3362
    %v3364 = vpop.f32.mrb[0].mxu0
    %3365 = vdwg.mxu0
    %v3366 = vmul.f32 %v3363, 0.35355338
    %v3367 = vadd.f32 %v3366, %v2529
    %v3368 = vsel %vm307, %v3367, -inf
    %3369 = vmax.xlane.f32.xlu0 %v3368
    %v3370 = vpop.xlane.xlu0 %3369
    %v3371 = vsub.f32 %v3367, %v3370
    %v3372 = vmul.f32 %v3371, 1.442695
    %v3373 = vpow.pop %v3372
    %v3374 = vsel %vm307, %v3373, 0.0
    %3375 = vadd.xlane.f32.xlu0 %v3374
    %v3376 = vpop.xlane.xlu0 %3375
    %v3377 = vrcp.pop %v3376
    %v3378 = vmul.f32 %v3373, %v3377
    %s3379 = scalar_lea.vmem [#allocation4], 48
    %3380 = vst.msk [vmem:[%s3379] sm:$0xff] %vm307, %v3378
    %3381 = vrot.lane.b32.xlu0 %v2279, 112
    %v3382 = vpop.permute.xlu0 %3381
    %v3385 = vsel %vm307, %v3378, 0
    %3387 = vmatprep.subr.mxu0 0.0
    %3388 = vmatpush1.msra.mxu0 %v3382
    %3389 = vmatprep.subr.mxu0 0.0
    %3390 = vmatpush1.msra.mxu0 0.0
    %3391 = vmatprep.subr.mxu0 0.0
    %3392 = vmatpush1.msra.mxu0 0.0
    %3393 = vmatprep.subr.mxu0 0.0
    %3394 = vmatpush1.msra.mxu0 0.0
    %3395 = vmatprep.subr.mxu0 0.0
    %3396 = vmatpush1.msra.mxu0 0.0
    %3397 = vmatprep.subr.mxu0 0.0
    %3398 = vmatpush1.msra.mxu0 0.0
    %3399 = vmatprep.subr.mxu0 0.0
    %3400 = vmatpush1.msra.mxu0 0.0
    %3401 = vmatprep.subr.mxu0 0.0
    %3402 = vmatpush1.msra.mxu0 0.0
    %3403 = vmatprep.subr.mxu0 0.0
    %3404 = vmatpush1.msra.mxu0 0.0
    %3405 = vmatprep.subr.mxu0 0.0
    %3406 = vmatpush1.msra.mxu0 0.0
    %3407 = vmatprep.subr.mxu0 0.0
    %3408 = vmatpush1.msra.mxu0 0.0
    %3409 = vmatprep.subr.mxu0 0.0
    %3410 = vmatpush1.msra.mxu0 0.0
    %3411 = vmatprep.subr.mxu0 0.0
    %3412 = vmatpush1.msra.mxu0 0.0
    %3413 = vmatprep.subr.mxu0 0.0
    %3414 = vmatpush1.msra.mxu0 0.0
    %3415 = vmatprep.subr.mxu0 0.0
    %3416 = vmatpush1.msra.mxu0 0.0
    %3417 = vmatprep.subr.mxu0 0.0
    %3418 = vmatpush1.msra.mxu0 0.0
    %3419 = vmatprep.subr.mxu0 0.0
    %3420 = vmatpush1.msra.mxu0 0.0
    %3421 = vmatprep.subr.mxu0 0.0
    %3422 = vmatpush1.msra.mxu0 0.0
    %3423 = vmatprep.subr.mxu0 0.0
    %3424 = vmatpush1.msra.mxu0 0.0
    %3425 = vmatprep.subr.mxu0 0.0
    %3426 = vmatpush1.msra.mxu0 0.0
    %3427 = vmatprep.subr.mxu0 0.0
    %3428 = vmatpush1.msra.mxu0 0.0
    %3429 = vmatprep.subr.mxu0 0.0
    %3430 = vmatpush1.msra.mxu0 0.0
    %3431 = vmatprep.subr.mxu0 0.0
    %3432 = vmatpush1.msra.mxu0 0.0
    %3433 = vmatprep.subr.mxu0 0.0
    %3434 = vmatpush1.msra.mxu0 0.0
    %3435 = vmatprep.subr.mxu0 0.0
    %3436 = vmatpush1.msra.mxu0 0.0
    %3437 = vmatprep.subr.mxu0 0.0
    %3438 = vmatpush1.msra.mxu0 0.0
    %3439 = vmatprep.subr.mxu0 0.0
    %3440 = vmatpush1.msra.mxu0 0.0
    %3441 = vmatprep.subr.mxu0 0.0
    %3442 = vmatpush1.msra.mxu0 0.0
    %3443 = vmatprep.subr.mxu0 0.0
    %3444 = vmatpush1.msra.mxu0 0.0
    %3445 = vmatprep.subr.mxu0 0.0
    %3446 = vmatpush1.msra.mxu0 0.0
    %3447 = vmatprep.subr.mxu0 0.0
    %3448 = vmatpush1.msra.mxu0 0.0
    %3449 = vmatprep.subr.mxu0 0.0
    %3450 = vmatpush1.msra.mxu0 0.0
    %3451 = vmatprep.mubr.f32.mxu0 0.0
    %3452 = vmatmul.mubr.f32.gmra.mrb[0].mxu0 %v3385
    %v3453 = vpop.f32.mrb[0].mxu0
    %v3454 = vadd.f32 0.0, %v3453
    %v3455 = vpop.f32.mrb[0].mxu0
    %3456 = vdwg.mxu0
    %v3458 = vsel %vm307, %v3285, 0
    %v3461 = vsel %vm307, %v3454, 0
    %3463 = vmatprep.subr.mxu0 0.0
    %3464 = vmatpush1.msra.mxu0 %v2027
    %3465 = vmatprep.subr.mxu0 0.0
    %3466 = vmatpush1.msra.mxu0 0.0
    %3467 = vmatprep.subr.mxu0 0.0
    %3468 = vmatpush1.msra.mxu0 0.0
    %3469 = vmatprep.subr.mxu0 0.0
    %3470 = vmatpush1.msra.mxu0 0.0
    %3471 = vmatprep.subr.mxu0 0.0
    %3472 = vmatpush1.msra.mxu0 0.0
    %3473 = vmatprep.subr.mxu0 0.0
    %3474 = vmatpush1.msra.mxu0 0.0
    %3475 = vmatprep.subr.mxu0 0.0
    %3476 = vmatpush1.msra.mxu0 0.0
    %3477 = vmatprep.subr.mxu0 0.0
    %3478 = vmatpush1.msra.mxu0 0.0
    %3479 = vmatprep.subr.mxu0 0.0
    %3480 = vmatpush1.msra.mxu0 0.0
    %3481 = vmatprep.subr.mxu0 0.0
    %3482 = vmatpush1.msra.mxu0 0.0
    %3483 = vmatprep.subr.mxu0 0.0
    %3484 = vmatpush1.msra.mxu0 0.0
    %3485 = vmatprep.subr.mxu0 0.0
    %3486 = vmatpush1.msra.mxu0 0.0
    %3487 = vmatprep.subr.mxu0 0.0
    %3488 = vmatpush1.msra.mxu0 0.0
    %3489 = vmatprep.subr.mxu0 0.0
    %3490 = vmatpush1.msra.mxu0 0.0
    %3491 = vmatprep.subr.mxu0 0.0
    %3492 = vmatpush1.msra.mxu0 0.0
    %3493 = vmatprep.subr.mxu0 0.0
    %3494 = vmatpush1.msra.mxu0 0.0
    %3495 = vmatprep.subr.mxu0 0.0
    %3496 = vmatpush1.msra.mxu0 0.0
    %3497 = vmatprep.subr.mxu0 0.0
    %3498 = vmatpush1.msra.mxu0 0.0
    %3499 = vmatprep.subr.mxu0 0.0
    %3500 = vmatpush1.msra.mxu0 0.0
    %3501 = vmatprep.subr.mxu0 0.0
    %3502 = vmatpush1.msra.mxu0 0.0
    %3503 = vmatprep.subr.mxu0 0.0
    %3504 = vmatpush1.msra.mxu0 0.0
    %3505 = vmatprep.subr.mxu0 0.0
    %3506 = vmatpush1.msra.mxu0 0.0
    %3507 = vmatprep.subr.mxu0 0.0
    %3508 = vmatpush1.msra.mxu0 0.0
    %3509 = vmatprep.subr.mxu0 0.0
    %3510 = vmatpush1.msra.mxu0 0.0
    %3511 = vmatprep.subr.mxu0 0.0
    %3512 = vmatpush1.msra.mxu0 0.0
    %3513 = vmatprep.subr.mxu0 0.0
    %3514 = vmatpush1.msra.mxu0 0.0
    %3515 = vmatprep.subr.mxu0 0.0
    %3516 = vmatpush1.msra.mxu0 0.0
    %3517 = vmatprep.subr.mxu0 0.0
    %3518 = vmatpush1.msra.mxu0 0.0
    %3519 = vmatprep.subr.mxu0 0.0
    %3520 = vmatpush1.msra.mxu0 0.0
    %3521 = vmatprep.subr.mxu0 0.0
    %3522 = vmatpush1.msra.mxu0 0.0
    %3523 = vmatprep.subr.mxu0 0.0
    %3524 = vmatpush1.msra.mxu0 0.0
    %3525 = vmatprep.subr.mxu0 0.0
    %3526 = vmatpush1.msra.mxu0 0.0
    %3527 = vmatprep.mubr.f32.mxu0 0.0
    %3528 = vmatmul.mubr.f32.gmra.mrb[0].mxu0 %v3458
    %v3529 = vpop.f32.mrb[0].mxu0
    %v3530 = vadd.f32 0.0, %v3529
    %v3531 = vpop.f32.mrb[0].mxu0
    %3532 = vmatprep.mubr.f32.mxu0 0.0
    %3533 = vmatmul.mubr.f32.gmra.mrb[0].mxu0 %v3461
    %v3534 = vpop.f32.mrb[0].mxu0
    %v3535 = vadd.f32 0.0, %v3534
    %v3536 = vpop.f32.mrb[0].mxu0
    %3537 = vdwg.mxu0
    %v3538 = vadd.f32 %v3111, %v3530
    %v3539 = vadd.f32 %v3116, %v3535
    %3540 = vrot.lane.b32.xlu0 %v2110, 104
    %v3541 = vpop.permute.xlu0 %3540
    %3542 = vrot.lane.b32.xlu0 %v2195, 104
    %v3543 = vpop.permute.xlu0 %3542
    %v3544 = vsel %vm307, %v3541, 0
    %v3546 = vsel %vm307, %v3543, 0
    %3548 = vmatprep.subr.mxu0 0.0
    %3549 = vmatpush1.xpose.msra.mxu0 %v3546
    %3550 = vmatprep.subr.mxu0 0.0
    %3551 = vmatpush1.xpose.msra.mxu0 0.0
    %3552 = vmatprep.subr.mxu0 0.0
    %3553 = vmatpush1.xpose.msra.mxu0 0.0
    %3554 = vmatprep.subr.mxu0 0.0
    %3555 = vmatpush1.xpose.msra.mxu0 0.0
    %3556 = vmatprep.subr.mxu0 0.0
    %3557 = vmatpush1.xpose.msra.mxu0 0.0
    %3558 = vmatprep.subr.mxu0 0.0
    %3559 = vmatpush1.xpose.msra.mxu0 0.0
    %3560 = vmatprep.subr.mxu0 0.0
    %3561 = vmatpush1.xpose.msra.mxu0 0.0
    %3562 = vmatprep.subr.mxu0 0.0
    %3563 = vmatpush1.xpose.msra.mxu0 0.0
    %3564 = vmatprep.subr.mxu0 0.0
    %3565 = vmatpush1.xpose.msra.mxu0 0.0
    %3566 = vmatprep.subr.mxu0 0.0
    %3567 = vmatpush1.xpose.msra.mxu0 0.0
    %3568 = vmatprep.subr.mxu0 0.0
    %3569 = vmatpush1.xpose.msra.mxu0 0.0
    %3570 = vmatprep.subr.mxu0 0.0
    %3571 = vmatpush1.xpose.msra.mxu0 0.0
    %3572 = vmatprep.subr.mxu0 0.0
    %3573 = vmatpush1.xpose.msra.mxu0 0.0
    %3574 = vmatprep.subr.mxu0 0.0
    %3575 = vmatpush1.xpose.msra.mxu0 0.0
    %3576 = vmatprep.subr.mxu0 0.0
    %3577 = vmatpush1.xpose.msra.mxu0 0.0
    %3578 = vmatprep.subr.mxu0 0.0
    %3579 = vmatpush1.xpose.msra.mxu0 0.0
    %3580 = vmatprep.subr.mxu0 0.0
    %3581 = vmatpush1.xpose.msra.mxu0 0.0
    %3582 = vmatprep.subr.mxu0 0.0
    %3583 = vmatpush1.xpose.msra.mxu0 0.0
    %3584 = vmatprep.subr.mxu0 0.0
    %3585 = vmatpush1.xpose.msra.mxu0 0.0
    %3586 = vmatprep.subr.mxu0 0.0
    %3587 = vmatpush1.xpose.msra.mxu0 0.0
    %3588 = vmatprep.subr.mxu0 0.0
    %3589 = vmatpush1.xpose.msra.mxu0 0.0
    %3590 = vmatprep.subr.mxu0 0.0
    %3591 = vmatpush1.xpose.msra.mxu0 0.0
    %3592 = vmatprep.subr.mxu0 0.0
    %3593 = vmatpush1.xpose.msra.mxu0 0.0
    %3594 = vmatprep.subr.mxu0 0.0
    %3595 = vmatpush1.xpose.msra.mxu0 0.0
    %3596 = vmatprep.subr.mxu0 0.0
    %3597 = vmatpush1.xpose.msra.mxu0 0.0
    %3598 = vmatprep.subr.mxu0 0.0
    %3599 = vmatpush1.xpose.msra.mxu0 0.0
    %3600 = vmatprep.subr.mxu0 0.0
    %3601 = vmatpush1.xpose.msra.mxu0 0.0
    %3602 = vmatprep.subr.mxu0 0.0
    %3603 = vmatpush1.xpose.msra.mxu0 0.0
    %3604 = vmatprep.subr.mxu0 0.0
    %3605 = vmatpush1.xpose.msra.mxu0 0.0
    %3606 = vmatprep.subr.mxu0 0.0
    %3607 = vmatpush1.xpose.msra.mxu0 0.0
    %3608 = vmatprep.subr.mxu0 0.0
    %3609 = vmatpush1.xpose.msra.mxu0 0.0
    %3610 = vmatprep.subr.mxu0 0.0
    %3611 = vmatpush1.xpose.msra.mxu0 0.0
    %3612 = vmatprep.mubr.f32.mxu0 0.0
    %3613 = vmatmul.mubr.f32.gmra.mrb[0].mxu0 %v3544
    %v3614 = vpop.f32.mrb[0].mxu0
    %v3615 = vadd.f32 0.0, %v3614
    %v3616 = vpop.f32.mrb[0].mxu0
    %3617 = vdwg.mxu0
    %v3618 = vmul.f32 %v3615, 0.35355338
    %v3619 = vadd.f32 %v3618, %v2362
    %v3620 = vsel %vm307, %v3619, -inf
    %3621 = vmax.xlane.f32.xlu0 %v3620
    %v3622 = vpop.xlane.xlu0 %3621
    %v3623 = vsub.f32 %v3619, %v3622
    %v3624 = vmul.f32 %v3623, 1.442695
    %v3625 = vpow.pop %v3624
    %v3626 = vsel %vm307, %v3625, 0.0
    %3627 = vadd.xlane.f32.xlu0 %v3626
    %v3628 = vpop.xlane.xlu0 %3627
    %v3629 = vrcp.pop %v3628
    %v3630 = vmul.f32 %v3625, %v3629
    %s3631 = scalar_lea.vmem [#allocation4], 24
    %3632 = vst.msk [vmem:[%s3631] sm:$0xff] %vm307, %v3630
    %3633 = vrot.lane.b32.xlu0 %v2274, 104
    %v3634 = vpop.permute.xlu0 %3633
    %v3637 = vsel %vm307, %v3630, 0
    %3639 = vmatprep.subr.mxu0 0.0
    %3640 = vmatpush1.msra.mxu0 %v3634
    %3641 = vmatprep.subr.mxu0 0.0
    %3642 = vmatpush1.msra.mxu0 0.0
    %3643 = vmatprep.subr.mxu0 0.0
    %3644 = vmatpush1.msra.mxu0 0.0
    %3645 = vmatprep.subr.mxu0 0.0
    %3646 = vmatpush1.msra.mxu0 0.0
    %3647 = vmatprep.subr.mxu0 0.0
    %3648 = vmatpush1.msra.mxu0 0.0
    %3649 = vmatprep.subr.mxu0 0.0
    %3650 = vmatpush1.msra.mxu0 0.0
    %3651 = vmatprep.subr.mxu0 0.0
    %3652 = vmatpush1.msra.mxu0 0.0
    %3653 = vmatprep.subr.mxu0 0.0
    %3654 = vmatpush1.msra.mxu0 0.0
    %3655 = vmatprep.subr.mxu0 0.0
    %3656 = vmatpush1.msra.mxu0 0.0
    %3657 = vmatprep.subr.mxu0 0.0
    %3658 = vmatpush1.msra.mxu0 0.0
    %3659 = vmatprep.subr.mxu0 0.0
    %3660 = vmatpush1.msra.mxu0 0.0
    %3661 = vmatprep.subr.mxu0 0.0
    %3662 = vmatpush1.msra.mxu0 0.0
    %3663 = vmatprep.subr.mxu0 0.0
    %3664 = vmatpush1.msra.mxu0 0.0
    %3665 = vmatprep.subr.mxu0 0.0
    %3666 = vmatpush1.msra.mxu0 0.0
    %3667 = vmatprep.subr.mxu0 0.0
    %3668 = vmatpush1.msra.mxu0 0.0
    %3669 = vmatprep.subr.mxu0 0.0
    %3670 = vmatpush1.msra.mxu0 0.0
    %3671 = vmatprep.subr.mxu0 0.0
    %3672 = vmatpush1.msra.mxu0 0.0
    %3673 = vmatprep.subr.mxu0 0.0
    %3674 = vmatpush1.msra.mxu0 0.0
    %3675 = vmatprep.subr.mxu0 0.0
    %3676 = vmatpush1.msra.mxu0 0.0
    %3677 = vmatprep.subr.mxu0 0.0
    %3678 = vmatpush1.msra.mxu0 0.0
    %3679 = vmatprep.subr.mxu0 0.0
    %3680 = vmatpush1.msra.mxu0 0.0
    %3681 = vmatprep.subr.mxu0 0.0
    %3682 = vmatpush1.msra.mxu0 0.0
    %3683 = vmatprep.subr.mxu0 0.0
    %3684 = vmatpush1.msra.mxu0 0.0
    %3685 = vmatprep.subr.mxu0 0.0
    %3686 = vmatpush1.msra.mxu0 0.0
    %3687 = vmatprep.subr.mxu0 0.0
    %3688 = vmatpush1.msra.mxu0 0.0
    %3689 = vmatprep.subr.mxu0 0.0
    %3690 = vmatpush1.msra.mxu0 0.0
    %3691 = vmatprep.subr.mxu0 0.0
    %3692 = vmatpush1.msra.mxu0 0.0
    %3693 = vmatprep.subr.mxu0 0.0
    %3694 = vmatpush1.msra.mxu0 0.0
    %3695 = vmatprep.subr.mxu0 0.0
    %3696 = vmatpush1.msra.mxu0 0.0
    %3697 = vmatprep.subr.mxu0 0.0
    %3698 = vmatpush1.msra.mxu0 0.0
    %3699 = vmatprep.subr.mxu0 0.0
    %3700 = vmatpush1.msra.mxu0 0.0
    %3701 = vmatprep.subr.mxu0 0.0
    %3702 = vmatpush1.msra.mxu0 0.0
    %3703 = vmatprep.mubr.f32.mxu0 0.0
    %3704 = vmatmul.mubr.f32.gmra.mrb[0].mxu0 %v3637
    %v3705 = vpop.f32.mrb[0].mxu0
    %v3706 = vadd.f32 0.0, %v3705
    %v3707 = vpop.f32.mrb[0].mxu0
    %3708 = vdwg.mxu0
    %3709 = vrot.lane.b32.xlu0 %v2115, 104
    %v3710 = vpop.permute.xlu0 %3709
    %3711 = vrot.lane.b32.xlu0 %v2200, 104
    %v3712 = vpop.permute.xlu0 %3711
    %v3713 = vsel %vm307, %v3710, 0
    %v3715 = vsel %vm307, %v3712, 0
    %3717 = vmatprep.subr.mxu0 0.0
    %3718 = vmatpush1.xpose.msra.mxu0 %v3715
    %3719 = vmatprep.subr.mxu0 0.0
    %3720 = vmatpush1.xpose.msra.mxu0 0.0
    %3721 = vmatprep.subr.mxu0 0.0
    %3722 = vmatpush1.xpose.msra.mxu0 0.0
    %3723 = vmatprep.subr.mxu0 0.0
    %3724 = vmatpush1.xpose.msra.mxu0 0.0
    %3725 = vmatprep.subr.mxu0 0.0
    %3726 = vmatpush1.xpose.msra.mxu0 0.0
    %3727 = vmatprep.subr.mxu0 0.0
    %3728 = vmatpush1.xpose.msra.mxu0 0.0
    %3729 = vmatprep.subr.mxu0 0.0
    %3730 = vmatpush1.xpose.msra.mxu0 0.0
    %3731 = vmatprep.subr.mxu0 0.0
    %3732 = vmatpush1.xpose.msra.mxu0 0.0
    %3733 = vmatprep.subr.mxu0 0.0
    %3734 = vmatpush1.xpose.msra.mxu0 0.0
    %3735 = vmatprep.subr.mxu0 0.0
    %3736 = vmatpush1.xpose.msra.mxu0 0.0
    %3737 = vmatprep.subr.mxu0 0.0
    %3738 = vmatpush1.xpose.msra.mxu0 0.0
    %3739 = vmatprep.subr.mxu0 0.0
    %3740 = vmatpush1.xpose.msra.mxu0 0.0
    %3741 = vmatprep.subr.mxu0 0.0
    %3742 = vmatpush1.xpose.msra.mxu0 0.0
    %3743 = vmatprep.subr.mxu0 0.0
    %3744 = vmatpush1.xpose.msra.mxu0 0.0
    %3745 = vmatprep.subr.mxu0 0.0
    %3746 = vmatpush1.xpose.msra.mxu0 0.0
    %3747 = vmatprep.subr.mxu0 0.0
    %3748 = vmatpush1.xpose.msra.mxu0 0.0
    %3749 = vmatprep.subr.mxu0 0.0
    %3750 = vmatpush1.xpose.msra.mxu0 0.0
    %3751 = vmatprep.subr.mxu0 0.0
    %3752 = vmatpush1.xpose.msra.mxu0 0.0
    %3753 = vmatprep.subr.mxu0 0.0
    %3754 = vmatpush1.xpose.msra.mxu0 0.0
    %3755 = vmatprep.subr.mxu0 0.0
    %3756 = vmatpush1.xpose.msra.mxu0 0.0
    %3757 = vmatprep.subr.mxu0 0.0
    %3758 = vmatpush1.xpose.msra.mxu0 0.0
    %3759 = vmatprep.subr.mxu0 0.0
    %3760 = vmatpush1.xpose.msra.mxu0 0.0
    %3761 = vmatprep.subr.mxu0 0.0
    %3762 = vmatpush1.xpose.msra.mxu0 0.0
    %3763 = vmatprep.subr.mxu0 0.0
    %3764 = vmatpush1.xpose.msra.mxu0 0.0
    %3765 = vmatprep.subr.mxu0 0.0
    %3766 = vmatpush1.xpose.msra.mxu0 0.0
    %3767 = vmatprep.subr.mxu0 0.0
    %3768 = vmatpush1.xpose.msra.mxu0 0.0
    %3769 = vmatprep.subr.mxu0 0.0
    %3770 = vmatpush1.xpose.msra.mxu0 0.0
    %3771 = vmatprep.subr.mxu0 0.0
    %3772 = vmatpush1.xpose.msra.mxu0 0.0
    %3773 = vmatprep.subr.mxu0 0.0
    %3774 = vmatpush1.xpose.msra.mxu0 0.0
    %3775 = vmatprep.subr.mxu0 0.0
    %3776 = vmatpush1.xpose.msra.mxu0 0.0
    %3777 = vmatprep.subr.mxu0 0.0
    %3778 = vmatpush1.xpose.msra.mxu0 0.0
    %3779 = vmatprep.subr.mxu0 0.0
    %3780 = vmatpush1.xpose.msra.mxu0 0.0
    %3781 = vmatprep.mubr.f32.mxu0 0.0
    %3782 = vmatmul.mubr.f32.gmra.mrb[0].mxu0 %v3713
    %v3783 = vpop.f32.mrb[0].mxu0
    %v3784 = vadd.f32 0.0, %v3783
    %v3785 = vpop.f32.mrb[0].mxu0
    %3786 = vdwg.mxu0
    %v3787 = vmul.f32 %v3784, 0.35355338
    %v3788 = vadd.f32 %v3787, %v2529
    %v3789 = vsel %vm307, %v3788, -inf
    %3790 = vmax.xlane.f32.xlu0 %v3789
    %v3791 = vpop.xlane.xlu0 %3790
    %v3792 = vsub.f32 %v3788, %v3791
    %v3793 = vmul.f32 %v3792, 1.442695
    %v3794 = vpow.pop %v3793
    %v3795 = vsel %vm307, %v3794, 0.0
    %3796 = vadd.xlane.f32.xlu0 %v3795
    %v3797 = vpop.xlane.xlu0 %3796
    %v3798 = vrcp.pop %v3797
    %v3799 = vmul.f32 %v3794, %v3798
    %s3800 = scalar_lea.vmem [#allocation4], 56
    %3801 = vst.msk [vmem:[%s3800] sm:$0xff] %vm307, %v3799
    %3802 = vrot.lane.b32.xlu0 %v2279, 104
    %v3803 = vpop.permute.xlu0 %3802
    %v3806 = vsel %vm307, %v3799, 0
    %3808 = vmatprep.subr.mxu0 0.0
    %3809 = vmatpush1.msra.mxu0 %v3803
    %3810 = vmatprep.subr.mxu0 0.0
    %3811 = vmatpush1.msra.mxu0 0.0
    %3812 = vmatprep.subr.mxu0 0.0
    %3813 = vmatpush1.msra.mxu0 0.0
    %3814 = vmatprep.subr.mxu0 0.0
    %3815 = vmatpush1.msra.mxu0 0.0
    %3816 = vmatprep.subr.mxu0 0.0
    %3817 = vmatpush1.msra.mxu0 0.0
    %3818 = vmatprep.subr.mxu0 0.0
    %3819 = vmatpush1.msra.mxu0 0.0
    %3820 = vmatprep.subr.mxu0 0.0
    %3821 = vmatpush1.msra.mxu0 0.0
    %3822 = vmatprep.subr.mxu0 0.0
    %3823 = vmatpush1.msra.mxu0 0.0
    %3824 = vmatprep.subr.mxu0 0.0
    %3825 = vmatpush1.msra.mxu0 0.0
    %3826 = vmatprep.subr.mxu0 0.0
    %3827 = vmatpush1.msra.mxu0 0.0
    %3828 = vmatprep.subr.mxu0 0.0
    %3829 = vmatpush1.msra.mxu0 0.0
    %3830 = vmatprep.subr.mxu0 0.0
    %3831 = vmatpush1.msra.mxu0 0.0
    %3832 = vmatprep.subr.mxu0 0.0
    %3833 = vmatpush1.msra.mxu0 0.0
    %3834 = vmatprep.subr.mxu0 0.0
    %3835 = vmatpush1.msra.mxu0 0.0
    %3836 = vmatprep.subr.mxu0 0.0
    %3837 = vmatpush1.msra.mxu0 0.0
    %3838 = vmatprep.subr.mxu0 0.0
    %3839 = vmatpush1.msra.mxu0 0.0
    %3840 = vmatprep.subr.mxu0 0.0
    %3841 = vmatpush1.msra.mxu0 0.0
    %3842 = vmatprep.subr.mxu0 0.0
    %3843 = vmatpush1.msra.mxu0 0.0
    %3844 = vmatprep.subr.mxu0 0.0
    %3845 = vmatpush1.msra.mxu0 0.0
    %3846 = vmatprep.subr.mxu0 0.0
    %3847 = vmatpush1.msra.mxu0 0.0
    %3848 = vmatprep.subr.mxu0 0.0
    %3849 = vmatpush1.msra.mxu0 0.0
    %3850 = vmatprep.subr.mxu0 0.0
    %3851 = vmatpush1.msra.mxu0 0.0
    %3852 = vmatprep.subr.mxu0 0.0
    %3853 = vmatpush1.msra.mxu0 0.0
    %3854 = vmatprep.subr.mxu0 0.0
    %3855 = vmatpush1.msra.mxu0 0.0
    %3856 = vmatprep.subr.mxu0 0.0
    %3857 = vmatpush1.msra.mxu0 0.0
    %3858 = vmatprep.subr.mxu0 0.0
    %3859 = vmatpush1.msra.mxu0 0.0
    %3860 = vmatprep.subr.mxu0 0.0
    %3861 = vmatpush1.msra.mxu0 0.0
    %3862 = vmatprep.subr.mxu0 0.0
    %3863 = vmatpush1.msra.mxu0 0.0
    %3864 = vmatprep.subr.mxu0 0.0
    %3865 = vmatpush1.msra.mxu0 0.0
    %3866 = vmatprep.subr.mxu0 0.0
    %3867 = vmatpush1.msra.mxu0 0.0
    %3868 = vmatprep.subr.mxu0 0.0
    %3869 = vmatpush1.msra.mxu0 0.0
    %3870 = vmatprep.subr.mxu0 0.0
    %3871 = vmatpush1.msra.mxu0 0.0
    %3872 = vmatprep.mubr.f32.mxu0 0.0
    %3873 = vmatmul.mubr.f32.gmra.mrb[0].mxu0 %v3806
    %v3874 = vpop.f32.mrb[0].mxu0
    %v3875 = vadd.f32 0.0, %v3874
    %v3876 = vpop.f32.mrb[0].mxu0
    %3877 = vdwg.mxu0
    %v3879 = vsel %vm307, %v3706, 0
    %v3882 = vsel %vm307, %v3875, 0
    %3884 = vmatprep.subr.mxu0 0.0
    %3885 = vmatpush1.msra.mxu0 %v2028
    %3886 = vmatprep.subr.mxu0 0.0
    %3887 = vmatpush1.msra.mxu0 0.0
    %3888 = vmatprep.subr.mxu0 0.0
    %3889 = vmatpush1.msra.mxu0 0.0
    %3890 = vmatprep.subr.mxu0 0.0
    %3891 = vmatpush1.msra.mxu0 0.0
    %3892 = vmatprep.subr.mxu0 0.0
    %3893 = vmatpush1.msra.mxu0 0.0
    %3894 = vmatprep.subr.mxu0 0.0
    %3895 = vmatpush1.msra.mxu0 0.0
    %3896 = vmatprep.subr.mxu0 0.0
    %3897 = vmatpush1.msra.mxu0 0.0
    %3898 = vmatprep.subr.mxu0 0.0
    %3899 = vmatpush1.msra.mxu0 0.0
    %3900 = vmatprep.subr.mxu0 0.0
    %3901 = vmatpush1.msra.mxu0 0.0
    %3902 = vmatprep.subr.mxu0 0.0
    %3903 = vmatpush1.msra.mxu0 0.0
    %3904 = vmatprep.subr.mxu0 0.0
    %3905 = vmatpush1.msra.mxu0 0.0
    %3906 = vmatprep.subr.mxu0 0.0
    %3907 = vmatpush1.msra.mxu0 0.0
    %3908 = vmatprep.subr.mxu0 0.0
    %3909 = vmatpush1.msra.mxu0 0.0
    %3910 = vmatprep.subr.mxu0 0.0
    %3911 = vmatpush1.msra.mxu0 0.0
    %3912 = vmatprep.subr.mxu0 0.0
    %3913 = vmatpush1.msra.mxu0 0.0
    %3914 = vmatprep.subr.mxu0 0.0
    %3915 = vmatpush1.msra.mxu0 0.0
    %3916 = vmatprep.subr.mxu0 0.0
    %3917 = vmatpush1.msra.mxu0 0.0
    %3918 = vmatprep.subr.mxu0 0.0
    %3919 = vmatpush1.msra.mxu0 0.0
    %3920 = vmatprep.subr.mxu0 0.0
    %3921 = vmatpush1.msra.mxu0 0.0
    %3922 = vmatprep.subr.mxu0 0.0
    %3923 = vmatpush1.msra.mxu0 0.0
    %3924 = vmatprep.subr.mxu0 0.0
    %3925 = vmatpush1.msra.mxu0 0.0
    %3926 = vmatprep.subr.mxu0 0.0
    %3927 = vmatpush1.msra.mxu0 0.0
    %3928 = vmatprep.subr.mxu0 0.0
    %3929 = vmatpush1.msra.mxu0 0.0
    %3930 = vmatprep.subr.mxu0 0.0
    %3931 = vmatpush1.msra.mxu0 0.0
    %3932 = vmatprep.subr.mxu0 0.0
    %3933 = vmatpush1.msra.mxu0 0.0
    %3934 = vmatprep.subr.mxu0 0.0
    %3935 = vmatpush1.msra.mxu0 0.0
    %3936 = vmatprep.subr.mxu0 0.0
    %3937 = vmatpush1.msra.mxu0 0.0
    %3938 = vmatprep.subr.mxu0 0.0
    %3939 = vmatpush1.msra.mxu0 0.0
    %3940 = vmatprep.subr.mxu0 0.0
    %3941 = vmatpush1.msra.mxu0 0.0
    %3942 = vmatprep.subr.mxu0 0.0
    %3943 = vmatpush1.msra.mxu0 0.0
    %3944 = vmatprep.subr.mxu0 0.0
    %3945 = vmatpush1.msra.mxu0 0.0
    %3946 = vmatprep.subr.mxu0 0.0
    %3947 = vmatpush1.msra.mxu0 0.0
    %3948 = vmatprep.mubr.f32.mxu0 0.0
    %3949 = vmatmul.mubr.f32.gmra.mrb[0].mxu0 %v3879
    %v3950 = vpop.f32.mrb[0].mxu0
    %v3951 = vadd.f32 0.0, %v3950
    %v3952 = vpop.f32.mrb[0].mxu0
    %3953 = vmatprep.mubr.f32.mxu0 0.0
    %3954 = vmatmul.mubr.f32.gmra.mrb[0].mxu0 %v3882
    %v3955 = vpop.f32.mrb[0].mxu0
    %v3956 = vadd.f32 0.0, %v3955
    %v3957 = vpop.f32.mrb[0].mxu0
    %3958 = vdwg.mxu0
    %v3959 = vadd.f32 %v3538, %v3951
    %v3960 = vadd.f32 %v3539, %v3956
    %v3961 = vlaneseq
    %v3962 = vshrl.u32 %v3961, 7
    %v3963 = vsub.s32 0, %v3962
    %v3964 = vrot.slane %v2032, %v3963
    %v3965 = vadd.f32 %v3959, %v3964
    %v3966 = vadd.f32 %v3960, %v3964
    %v3967 = vadd.f32 %v2011, %v3965
    %v3968 = vadd.f32 %v2012, %v3966
    %v3969 = vld [vmem:[%s7 + $0xb] sm:$0x1]
    %v3970 = vld [vmem:[%s7 + $0xc] sm:$0x1]
    %v3971 = vsel %vm67, %v3967, 0.0
    %3972 = vadd.xlane.f32.xlu0 %v3971
    %v3973 = vpop.xlane.xlu0 %3972
    %v3974 = vsel %vm67, %v3968, 0.0
    %3975 = vadd.xlane.f32.xlu0 %v3974
    %v3976 = vpop.xlane.xlu0 %3975
    %v3977 = vmul.f32 %v3973, %v1980
    %v3978 = vmul.f32 %v3976, %v1980
    %v3979 = vsub.f32 %v3967, %v3977
    %v3980 = vsub.f32 %v3968, %v3978
    %v3981 = vmul.f32 %v3979, %v3979
    %v3982 = vmul.f32 %v3980, %v3980
    %v3983 = vsel %vm67, %v3981, 0.0
    %3984 = vadd.xlane.f32.xlu0 %v3983
    %v3985 = vpop.xlane.xlu0 %3984
    %v3986 = vsel %vm67, %v3982, 0.0
    %3987 = vadd.xlane.f32.xlu0 %v3986
    %v3988 = vpop.xlane.xlu0 %3987
    %v3989 = vmul.f32 %v3985, %v1980
    %v3990 = vmul.f32 %v3988, %v1980
    %v3991 = vadd.f32 %v3989, 1e-05
    %v3992 = vadd.f32 %v3990, 1e-05
    %v3993 = vrsqrt.pop %v3991
    %v3994 = vrsqrt.pop %v3992
    %v3995 = vmul.f32 %v3979, %v3993
    %v3996 = vmul.f32 %v3980, %v3994
    %v3997 = vlaneseq
    %v3998 = vshrl.u32 %v3997, 7
    %v3999 = vsub.s32 0, %v3998
    %v4000 = vrot.slane %v3969, %v3999
    %v4001 = vmul.f32 %v3995, %v4000
    %v4002 = vmul.f32 %v3996, %v4000
    %v4003 = vlaneseq
    %v4004 = vshrl.u32 %v4003, 7
    %v4005 = vsub.s32 0, %v4004
    %v4006 = vrot.slane %v3970, %v4005
    %v4007 = vadd.f32 %v4001, %v4006
    %v4008 = vadd.f32 %v4002, %v4006
    %v4009 = vld [vmem:[%s5] sm:$0xff]
    %v4010 = vld [vmem:[%s5 + $0x8] sm:$0xff]
    %v4011 = vld [vmem:[%s5 + $0x10] sm:$0xff]
    %v4012 = vld [vmem:[%s5 + $0x18] sm:$0xff]
    %v4013 = vld [vmem:[%s6] sm:$0xff]
    %v4014 = vld [vmem:[%s6 + $0x8] sm:$0xff]
    %v4015 = vld [vmem:[%s6 + $0x10] sm:$0xff]
    %v4016 = vld [vmem:[%s6 + $0x18] sm:$0xff]
    %v4017 = vld [vmem:[%s6 + $0x20] sm:$0xff]
    %v4018 = vld [vmem:[%s6 + $0x28] sm:$0xff]
    %v4019 = vld [vmem:[%s6 + $0x30] sm:$0xff]
    %v4020 = vld [vmem:[%s6 + $0x38] sm:$0xff]
    %v4021 = vld [vmem:[%s8] sm:$0x1]
    %v4022 = vld [vmem:[%s7 + $0x8] sm:$0x1]
    %v4024 = vlaneseq
    %v4025 = vshrl.u32 %v4024, 7
    %v4026 = vsub.s32 0, %v4025
    %v4027 = vrot.slane %v4021, %v4026
    %v4030 = vsel %vm67, %v4007, 0
    %v4033 = vsel %vm67, %v4008, 0
    %4035 = vmatprep.subr.mxu0 0.0
    %4036 = vmatpush1.msra.mxu0 %v4009
    %4037 = vmatprep.subr.mxu0 0.0
    %4038 = vmatpush1.msra.mxu0 %v4010
    %4039 = vmatprep.subr.mxu0 0.0
    %4040 = vmatpush1.msra.mxu0 %v4011
    %4041 = vmatprep.subr.mxu0 0.0
    %4042 = vmatpush1.msra.mxu0 %v4012
    %4043 = vmatprep.subr.mxu0 0.0
    %4044 = vmatpush1.msra.mxu0 0.0
    %4045 = vmatprep.subr.mxu0 0.0
    %4046 = vmatpush1.msra.mxu0 0.0
    %4047 = vmatprep.subr.mxu0 0.0
    %4048 = vmatpush1.msra.mxu0 0.0
    %4049 = vmatprep.subr.mxu0 0.0
    %4050 = vmatpush1.msra.mxu0 0.0
    %4051 = vmatprep.subr.mxu0 0.0
    %4052 = vmatpush1.msra.mxu0 0.0
    %4053 = vmatprep.subr.mxu0 0.0
    %4054 = vmatpush1.msra.mxu0 0.0
    %4055 = vmatprep.subr.mxu0 0.0
    %4056 = vmatpush1.msra.mxu0 0.0
    %4057 = vmatprep.subr.mxu0 0.0
    %4058 = vmatpush1.msra.mxu0 0.0
    %4059 = vmatprep.subr.mxu0 0.0
    %4060 = vmatpush1.msra.mxu0 0.0
    %4061 = vmatprep.subr.mxu0 0.0
    %4062 = vmatpush1.msra.mxu0 0.0
    %4063 = vmatprep.subr.mxu0 0.0
    %4064 = vmatpush1.msra.mxu0 0.0
    %4065 = vmatprep.subr.mxu0 0.0
    %4066 = vmatpush1.msra.mxu0 0.0
    %4067 = vmatprep.subr.mxu0 0.0
    %4068 = vmatpush1.msra.mxu0 0.0
    %4069 = vmatprep.subr.mxu0 0.0
    %4070 = vmatpush1.msra.mxu0 0.0
    %4071 = vmatprep.subr.mxu0 0.0
    %4072 = vmatpush1.msra.mxu0 0.0
    %4073 = vmatprep.subr.mxu0 0.0
    %4074 = vmatpush1.msra.mxu0 0.0
    %4075 = vmatprep.subr.mxu0 0.0
    %4076 = vmatpush1.msra.mxu0 0.0
    %4077 = vmatprep.subr.mxu0 0.0
    %4078 = vmatpush1.msra.mxu0 0.0
    %4079 = vmatprep.subr.mxu0 0.0
    %4080 = vmatpush1.msra.mxu0 0.0
    %4081 = vmatprep.subr.mxu0 0.0
    %4082 = vmatpush1.msra.mxu0 0.0
    %4083 = vmatprep.subr.mxu0 0.0
    %4084 = vmatpush1.msra.mxu0 0.0
    %4085 = vmatprep.subr.mxu0 0.0
    %4086 = vmatpush1.msra.mxu0 0.0
    %4087 = vmatprep.subr.mxu0 0.0
    %4088 = vmatpush1.msra.mxu0 0.0
    %4089 = vmatprep.subr.mxu0 0.0
    %4090 = vmatpush1.msra.mxu0 0.0
    %4091 = vmatprep.subr.mxu0 0.0
    %4092 = vmatpush1.msra.mxu0 0.0
    %4093 = vmatprep.subr.mxu0 0.0
    %4094 = vmatpush1.msra.mxu0 0.0
    %4095 = vmatprep.subr.mxu0 0.0
    %4096 = vmatpush1.msra.mxu0 0.0
    %4097 = vmatprep.subr.mxu0 0.0
    %4098 = vmatpush1.msra.mxu0 0.0
    %4099 = vmatprep.mubr.f32.mxu0 0.0
    %4100 = vmatmul.mubr.f32.gmra.mrb[0].mxu0 %v4030
    %v4101 = vpop.f32.mrb[0].mxu0
    %v4102 = vadd.f32 %v4027, %v4101
    %v4103 = vpop.f32.mrb[0].mxu0
    %4104 = vmatprep.mubr.f32.mxu0 0.0
    %4105 = vmatmul.mubr.f32.gmra.mrb[0].mxu0 %v4033
    %v4106 = vpop.f32.mrb[0].mxu0
    %v4107 = vadd.f32 %v4027, %v4106
    %v4108 = vpop.f32.mrb[0].mxu0
    %4109 = vdwg.mxu0
    %v4110 = vmax.f32 %v4102, 0.0
    %v4111 = vmax.f32 %v4107, 0.0
    %v4112 = vlaneseq
    %v4113 = vshrl.u32 %v4112, 7
    %v4114 = vsub.s32 0, %v4113
    %v4115 = vrot.slane %v4022, %v4114
    %vm4116 = vcmask 523264
    %v4118 = vsel %vm4116, %v4110, 0
    %v4121 = vsel %vm4116, %v4111, 0
    %4123 = vmatprep.subr.mxu0 0.0
    %4124 = vmatpush1.msra.mxu0 %v4013
    %4125 = vmatprep.subr.mxu0 0.0
    %4126 = vmatpush1.msra.mxu0 %v4014
    %4127 = vmatprep.subr.mxu0 0.0
    %4128 = vmatpush1.msra.mxu0 %v4015
    %4129 = vmatprep.subr.mxu0 0.0
    %4130 = vmatpush1.msra.mxu0 %v4016
    %4131 = vmatprep.subr.mxu0 0.0
    %4132 = vmatpush1.msra.mxu0 %v4017
    %4133 = vmatprep.subr.mxu0 0.0
    %4134 = vmatpush1.msra.mxu0 %v4018
    %4135 = vmatprep.subr.mxu0 0.0
    %4136 = vmatpush1.msra.mxu0 %v4019
    %4137 = vmatprep.subr.mxu0 0.0
    %4138 = vmatpush1.msra.mxu0 %v4020
    %4139 = vmatprep.subr.mxu0 0.0
    %4140 = vmatpush1.msra.mxu0 0.0
    %4141 = vmatprep.subr.mxu0 0.0
    %4142 = vmatpush1.msra.mxu0 0.0
    %4143 = vmatprep.subr.mxu0 0.0
    %4144 = vmatpush1.msra.mxu0 0.0
    %4145 = vmatprep.subr.mxu0 0.0
    %4146 = vmatpush1.msra.mxu0 0.0
    %4147 = vmatprep.subr.mxu0 0.0
    %4148 = vmatpush1.msra.mxu0 0.0
    %4149 = vmatprep.subr.mxu0 0.0
    %4150 = vmatpush1.msra.mxu0 0.0
    %4151 = vmatprep.subr.mxu0 0.0
    %4152 = vmatpush1.msra.mxu0 0.0
    %4153 = vmatprep.subr.mxu0 0.0
    %4154 = vmatpush1.msra.mxu0 0.0
    %4155 = vmatprep.subr.mxu0 0.0
    %4156 = vmatpush1.msra.mxu0 0.0
    %4157 = vmatprep.subr.mxu0 0.0
    %4158 = vmatpush1.msra.mxu0 0.0
    %4159 = vmatprep.subr.mxu0 0.0
    %4160 = vmatpush1.msra.mxu0 0.0
    %4161 = vmatprep.subr.mxu0 0.0
    %4162 = vmatpush1.msra.mxu0 0.0
    %4163 = vmatprep.subr.mxu0 0.0
    %4164 = vmatpush1.msra.mxu0 0.0
    %4165 = vmatprep.subr.mxu0 0.0
    %4166 = vmatpush1.msra.mxu0 0.0
    %4167 = vmatprep.subr.mxu0 0.0
    %4168 = vmatpush1.msra.mxu0 0.0
    %4169 = vmatprep.subr.mxu0 0.0
    %4170 = vmatpush1.msra.mxu0 0.0
    %4171 = vmatprep.subr.mxu0 0.0
    %4172 = vmatpush1.msra.mxu0 0.0
    %4173 = vmatprep.subr.mxu0 0.0
    %4174 = vmatpush1.msra.mxu0 0.0
    %4175 = vmatprep.subr.mxu0 0.0
    %4176 = vmatpush1.msra.mxu0 0.0
    %4177 = vmatprep.subr.mxu0 0.0
    %4178 = vmatpush1.msra.mxu0 0.0
    %4179 = vmatprep.subr.mxu0 0.0
    %4180 = vmatpush1.msra.mxu0 0.0
    %4181 = vmatprep.subr.mxu0 0.0
    %4182 = vmatpush1.msra.mxu0 0.0
    %4183 = vmatprep.subr.mxu0 0.0
    %4184 = vmatpush1.msra.mxu0 0.0
    %4185 = vmatprep.subr.mxu0 0.0
    %4186 = vmatpush1.msra.mxu0 0.0
    %4187 = vmatprep.mubr.f32.mxu0 0.0
    %4188 = vmatmul.mubr.f32.gmra.mrb[0].mxu0 %v4118
    %v4189 = vpop.f32.mrb[0].mxu0
    %v4190 = vadd.f32 %v4115, %v4189
    %v4191 = vpop.f32.mrb[0].mxu0
    %4192 = vmatprep.mubr.f32.mxu0 0.0
    %4193 = vmatmul.mubr.f32.gmra.mrb[0].mxu0 %v4121
    %v4194 = vpop.f32.mrb[0].mxu0
    %v4195 = vadd.f32 %v4115, %v4194
    %v4196 = vpop.f32.mrb[0].mxu0
    %4197 = vdwg.mxu0
    %v4198 = vadd.f32 %v4007, %v4190
    %v4199 = vadd.f32 %v4008, %v4195
    %v4200 = vld [vmem:[%s7 + $0xd] sm:$0x1]
    %v4201 = vld [vmem:[%s7 + $0xe] sm:$0x1]
    %v4202 = vsel %vm67, %v4198, 0.0
    %4203 = vadd.xlane.f32.xlu0 %v4202
    %v4204 = vpop.xlane.xlu0 %4203
    %v4205 = vsel %vm67, %v4199, 0.0
    %4206 = vadd.xlane.f32.xlu0 %v4205
    %v4207 = vpop.xlane.xlu0 %4206
    %v4208 = vmul.f32 %v4204, %v1980
    %v4209 = vmul.f32 %v4207, %v1980
    %v4210 = vsub.f32 %v4198, %v4208
    %v4211 = vsub.f32 %v4199, %v4209
    %v4212 = vmul.f32 %v4210, %v4210
    %v4213 = vmul.f32 %v4211, %v4211
    %v4214 = vsel %vm67, %v4212, 0.0
    %4215 = vadd.xlane.f32.xlu0 %v4214
    %v4216 = vpop.xlane.xlu0 %4215
    %v4217 = vsel %vm67, %v4213, 0.0
    %4218 = vadd.xlane.f32.xlu0 %v4217
    %v4219 = vpop.xlane.xlu0 %4218
    %v4220 = vmul.f32 %v4216, %v1980
    %v4221 = vmul.f32 %v4219, %v1980
    %v4222 = vadd.f32 %v4220, 1e-05
    %v4223 = vadd.f32 %v4221, 1e-05
    %v4224 = vrsqrt.pop %v4222
    %v4225 = vrsqrt.pop %v4223
    %v4226 = vmul.f32 %v4210, %v4224
    %v4227 = vmul.f32 %v4211, %v4225
    %v4228 = vlaneseq
    %v4229 = vshrl.u32 %v4228, 7
    %v4230 = vsub.s32 0, %v4229
    %v4231 = vrot.slane %v4200, %v4230
    %v4232 = vmul.f32 %v4226, %v4231
    %v4233 = vmul.f32 %v4227, %v4231
    %v4234 = vlaneseq
    %v4235 = vshrl.u32 %v4234, 7
    %v4236 = vsub.s32 0, %v4235
    %v4237 = vrot.slane %v4201, %v4236
    %v4238 = vadd.f32 %v4232, %v4237
    %v4239 = vadd.f32 %v4233, %v4237
    %4240 = vst.msk [vmem:[#allocation2] sm:$0xff] %vm67, %v4238
    %4241 = vst.msk [vmem:[#allocation2 + $0x8] sm:$0xff] %vm67, %v4239
    // Predicated region
    $region38: #{tpu_custom_call.1} parent=1 // pred_check
      _
    $region39: #{tpu_custom_call.1} parent=1 // pred_check_branch
      %4243 = sbr.rel (0) target = $region41
    $region40: #{tpu_custom_call.1} parent=1 // pred_region
      %s4245 = ssub.s32 256, 256
      %4246 = vsyncadd [#allocation3], %s4245
      %s4247 = sshll.u32 [#allocation2], 4
      %s4248 = int_to_ptr.vmem [resolvable:$true] %s4247
      %4253 = dma.vmem_to_hbm [thread:$0]  %s4248, 256, %s9, [#allocation3], 128, 128, 8
    $region41: #{tpu_custom_call.1} parent=1 // pred_fallthru
      _
    // Predicated region
    $region42: #{tpu_custom_call.1} parent=1 // pred_check
      _
    $region43: #{tpu_custom_call.1} parent=1 // pred_check_branch
      %4255 = sbr.rel (0) target = $region45
    $region44: #{tpu_custom_call.1} parent=1 // pred_region
      %s4257 = ssub.s32 1024, 1024
      %4258 = vsyncadd [#allocation5], %s4257
      %s4259 = sshll.u32 [#allocation4], 4
      %s4260 = int_to_ptr.vmem [resolvable:$true] %s4259
      %4265 = dma.vmem_to_hbm [thread:$0]  %s4260, 1024, %s10, [#allocation5], 128, 128, 8
    $region45: #{tpu_custom_call.1} parent=1 // pred_fallthru
      _
    // Predicated region
    $region46: #{tpu_custom_call.1} parent=1 // pred_check
      _
    $region47: #{tpu_custom_call.1} parent=1 // pred_check_branch
      %4267 = sbr.rel (0) target = $region49
    $region48: #{tpu_custom_call.1} parent=1 // pred_region
      %4268 = dma.done [#allocation3], 256
    $region49: #{tpu_custom_call.1} parent=1 // pred_fallthru
      _
    // Predicated region
    $region50: #{tpu_custom_call.1} parent=1 // pred_check
      _
    $region51: #{tpu_custom_call.1} parent=1 // pred_check_branch
      %4270 = sbr.rel (0) target = $region53
    $region52: #{tpu_custom_call.1} parent=1 // pred_region
      %4271 = dma.done [#allocation5], 1024
    $region53: #{tpu_custom_call.1} parent=1 // pred_fallthru
      _
    %4272 = vsyncpa [#allocation3], 1
    %4273 = vsyncpa [#allocation5], 1

</llo_original>
